<compile_context>
chip_gen: v7x
topology: tpu7x:2x2x1
jax: 0.10.0
libtpu: 0.0.40
codegen_flags: <defaults>
</compile_context>

<pallas_src>
import math

import jax
import jax.numpy as jnp
from jax import lax
from jax.experimental import pallas as pl
from jax.experimental.pallas import tpu as pltpu

NUM_FEATS = 128                    # num_feats
NUM_WORDS = 4                      # num_words
WORD_DIMS = 512                    # word_dims
TEMPERATURE = 1.2
SCALE = 2.0 * math.pi
LN_EPS = 1e-5                      # nn.LayerNorm default eps
IN_DIM = 4 * NUM_FEATS             # 512
OUT_DIM = NUM_WORDS * WORD_DIMS    # 2048


def _sine_pos_kernel(x_ref, s_ref, phase_ref, w1_ref, b1_ref, g_ref,
                     beta_ref, w2_ref, b2_ref, out_ref):
    # ---- coordinate -> lane broadcast as a K=8 f32 MXU matmul ---------------
    # arg[r, c*128+f] = x[r, c] * (scale * temperature**(floor(f/2) - 32)) + phase[f]
    # Precision.HIGHEST keeps ~f32 accuracy (required: arg is up to ~1.8e3 rad).
    arg = lax.dot_general(
        x_ref[...], s_ref[...],
        dimension_numbers=(((1,), (0,)), ((), ())),
        precision=lax.Precision.HIGHEST,
        preferred_element_type=jnp.float32) + phase_ref[...]        # (TM, 512)
    # cos(t) == sin(t + pi/2): odd lanes carry a +pi/2 phase -> one sin pass.
    pos = jnp.sin(arg)

    # ---- Linear(512 -> 512): bf16 MXU, f32 accumulate -----------------------
    h = jnp.dot(pos.astype(jnp.bfloat16), w1_ref[...],
                preferred_element_type=jnp.float32) + b1_ref[...]

    # ---- LayerNorm(512), one-pass moments, f32 ------------------------------
    mean = jnp.mean(h, axis=-1, keepdims=True)
    mean_sq = jnp.mean(h * h, axis=-1, keepdims=True)
    var = jnp.maximum(mean_sq - mean * mean, 0.0)
    hn = (h - mean) * lax.rsqrt(var + LN_EPS)
    hn = hn * g_ref[...] + beta_ref[...]

    # ---- Linear(512 -> 2048): bf16 MXU, f32 accumulate ----------------------
    out = jnp.dot(hn.astype(jnp.bfloat16), w2_ref[...],
                  preferred_element_type=jnp.float32) + b2_ref[...]
    out_ref[...] = out.astype(out_ref.dtype)


def _round_up(a, b):
    return (a + b - 1) // b * b


def sine_positional_encoding(x, params, *, tm=512, out_dtype=jnp.bfloat16):
    """x: (N, 4) float -> (N, NUM_WORDS, WORD_DIMS) in `out_dtype`.

    out_dtype defaults to bfloat16 (halves the HBM writeback, the dominant cost
    on v6e for large N); pass jnp.float32 for bit-faithful f32 output.
    """
    n = x.shape[0]

    # Row tile: multiple of 8 sublanes.  For small N, force >= 2 grid steps so
    # the "parallel" row axis actually splits across v7x's two TensorCores.
    rows8 = _round_up(max(n, 1), 8)
    if rows8 <= tm:
        tm = max(8, _round_up((n + 1) // 2, 8))
    n_pad = _round_up(n, tm)

    # Pad rows to n_pad and coordinates 4 -> 8 (zero rows of S make the extra
    # columns inert); padded tail rows are sliced off at the end.
    x8 = jnp.pad(x.astype(jnp.float32), ((0, n_pad - n), (0, 4)))

    # Tiny constants computed host-side (fetched once, VMEM-resident).
    d = jnp.arange(NUM_FEATS, dtype=jnp.float32)
    dimt = SCALE * TEMPERATURE ** (jnp.floor(d / 2.0) - NUM_FEATS // 4)  # (128,)
    s_top = jnp.kron(jnp.eye(4, dtype=jnp.float32), dimt[None, :])       # (4, 512)
    s_mat = jnp.concatenate(
        [s_top, jnp.zeros((4, IN_DIM), jnp.float32)], axis=0)            # (8, 512)
    phase = ((math.pi / 2.0)
             * (jnp.arange(IN_DIM, dtype=jnp.float32) % 2.0))[None, :]   # (1, 512)

    w1, b1 = params["w1"], params["b1"]
    g, beta = params["g"], params["beta"]
    w2, b2 = params["w2"], params["b2"]

    def _const(i):          # parameters stay VMEM-resident across row tiles
        return (0, 0)

    in_specs = [
        pl.BlockSpec((tm, 8), lambda i: (i, 0)),     # x rows (padded to 8 coords)
        pl.BlockSpec(s_mat.shape, _const),
        pl.BlockSpec(phase.shape, _const),
        pl.BlockSpec(w1.shape, _const),
        pl.BlockSpec(b1.shape, _const),
        pl.BlockSpec(g.shape, _const),
        pl.BlockSpec(beta.shape, _const),
        pl.BlockSpec(w2.shape, _const),
        pl.BlockSpec(b2.shape, _const),
    ]

    out_itemsize = jnp.dtype(out_dtype).itemsize
    cost = pl.CostEstimate(
        flops=2 * n_pad * (8 * IN_DIM + IN_DIM * WORD_DIMS + WORD_DIMS * OUT_DIM),
        transcendentals=n_pad * IN_DIM,
        bytes_accessed=(w1.size * w1.dtype.itemsize
                        + w2.size * w2.dtype.itemsize
                        + n_pad * 8 * 4
                        + n_pad * OUT_DIM * out_itemsize
                        + (4 * WORD_DIMS + OUT_DIM + 8 * IN_DIM + IN_DIM) * 4),
    )

    out = pl.pallas_call(
        _sine_pos_kernel,
        out_shape=jax.ShapeDtypeStruct((n_pad, OUT_DIM), out_dtype),
        grid=(n_pad // tm,),
        in_specs=in_specs,
        out_specs=pl.BlockSpec((tm, OUT_DIM), lambda i: (i, 0)),
        compiler_params=pltpu.CompilerParams(
            dimension_semantics=("parallel",),     # shard rows across TCs
            vmem_limit_bytes=32 << 20,             # safe on v7x (64 MiB physical)
        ),
        cost_estimate=cost,
    )(x8, s_mat, phase, w1, b1, g, beta, w2, b2)

    return out[:n].reshape(n, NUM_WORDS, WORD_DIMS)


def _reference(x, params):
    """Pure-JAX f32 reference mirroring the PyTorch forward exactly."""
    w1 = params["w1"].astype(jnp.float32)
    w2 = params["w2"].astype(jnp.float32)
    b1 = params["b1"].astype(jnp.float32)
    g = params["g"].astype(jnp.float32)
    beta = params["beta"].astype(jnp.float32)
    b2 = params["b2"].astype(jnp.float32)

    dim_t = jnp.arange(NUM_FEATS, dtype=jnp.float32)
    dim_t = TEMPERATURE ** (jnp.floor(dim_t / 2.0) - NUM_FEATS // 4)
    embed = x.astype(jnp.float32) * SCALE
    pos = embed[:, :, None] * dim_t[None, None, :]                 # (N, 4, F)
    even = (jnp.arange(NUM_FEATS) % 2) == 0
    pos = jnp.where(even[None, None, :], jnp.sin(pos), jnp.cos(pos))
    pos = pos.reshape(-1, 4 * NUM_FEATS)
    h = pos @ w1 + b1
    mean = h.mean(-1, keepdims=True)
    var = ((h - mean) ** 2).mean(-1, keepdims=True)
    hn = (h - mean) / jnp.sqrt(var + LN_EPS) * g + beta
    out = hn @ w2 + b2
    return out.reshape(-1, NUM_WORDS, WORD_DIMS)


def _init_params(key):
    """nn.Linear / nn.LayerNorm-shaped params; weights stored (in, out), bf16."""
    k1, k2, k3, k4 = jax.random.split(key, 4)
    lim1 = 1.0 / math.sqrt(IN_DIM)
    lim2 = 1.0 / math.sqrt(WORD_DIMS)
    return {
        "w1": jax.random.uniform(k1, (IN_DIM, WORD_DIMS), jnp.float32,
                                 -lim1, lim1).astype(jnp.bfloat16),
        "b1": jax.random.uniform(k2, (1, WORD_DIMS), jnp.float32, -lim1, lim1),
        "g": jnp.ones((1, WORD_DIMS), jnp.float32),
        "beta": jnp.zeros((1, WORD_DIMS), jnp.float32),
        "w2": jax.random.uniform(k3, (WORD_DIMS, OUT_DIM), jnp.float32,
                                 -lim2, lim2).astype(jnp.bfloat16),
        "b2": jax.random.uniform(k4, (1, OUT_DIM), jnp.float32, -lim2, lim2),
    }


if __name__ == "__main__":
    key = jax.random.PRNGKey(0)
    kx, kp = jax.random.split(key)

    N = 16  # number of boxes
    x = jax.random.uniform(kx, (N, 4), jnp.float32)   # normalized box coords
    params = _init_params(kp)

    fn = jax.jit(sine_positional_encoding)
    out = jax.block_until_ready(fn(x, params))

    ref = _reference(x, params)
    assert out.shape == (N, NUM_WORDS, WORD_DIMS), out.shape
    # bf16 weights / bf16 MXU inputs / bf16 output -> looser tolerance vs f32 ref
    assert jnp.allclose(out.astype(jnp.float32), ref,
                        rtol=2e-2, atol=2e-2), "mismatch vs reference"

    print("KERNEL_OK")
</pallas_src>

<mosaic_0001>
module attributes {stable_mosaic.version = 11 : i64} {
  func.func @_sine_pos_kernel(%arg0: i32, %arg1: memref<8x8xf32, #tpu.memory_space<vmem>>, %arg2: memref<8x512xf32, #tpu.memory_space<vmem>>, %arg3: memref<1x512xf32, #tpu.memory_space<vmem>>, %arg4: memref<512x512xbf16, #tpu.memory_space<vmem>>, %arg5: memref<1x512xf32, #tpu.memory_space<vmem>>, %arg6: memref<1x512xf32, #tpu.memory_space<vmem>>, %arg7: memref<1x512xf32, #tpu.memory_space<vmem>>, %arg8: memref<512x2048xbf16, #tpu.memory_space<vmem>>, %arg9: memref<1x2048xf32, #tpu.memory_space<vmem>>, %arg10: memref<8x2048xbf16, #tpu.memory_space<vmem>>) attributes {dimension_semantics = [#tpu.dimension_semantics<parallel>], iteration_bounds = array<i64: 2>, scalar_prefetch = 0 : i64, scratch_operands = 0 : i64, tpu.core_type = #tpu.core_type<tc>, window_params = [{transform_indices = @transform_0, window_bounds = array<i64: 8, 8>}, {pipeline_mode = #tpu.pipeline_mode<synchronous>, transform_indices = @transform_1, window_bounds = array<i64: 8, 512>}, {pipeline_mode = #tpu.pipeline_mode<synchronous>, transform_indices = @transform_2, window_bounds = array<i64: 1, 512>}, {pipeline_mode = #tpu.pipeline_mode<synchronous>, transform_indices = @transform_3, window_bounds = array<i64: 512, 512>}, {pipeline_mode = #tpu.pipeline_mode<synchronous>, transform_indices = @transform_4, window_bounds = array<i64: 1, 512>}, {pipeline_mode = #tpu.pipeline_mode<synchronous>, transform_indices = @transform_5, window_bounds = array<i64: 1, 512>}, {pipeline_mode = #tpu.pipeline_mode<synchronous>, transform_indices = @transform_6, window_bounds = array<i64: 1, 512>}, {pipeline_mode = #tpu.pipeline_mode<synchronous>, transform_indices = @transform_7, window_bounds = array<i64: 512, 2048>}, {pipeline_mode = #tpu.pipeline_mode<synchronous>, transform_indices = @transform_8, window_bounds = array<i64: 1, 2048>}, {transform_indices = @transform_9, window_bounds = array<i64: 8, 2048>}]} {
    %c0 = arith.constant 0 : index
    %c0_0 = arith.constant 0 : index
    %0 = vector.load %arg1[%c0, %c0_0] : memref<8x8xf32, #tpu.memory_space<vmem>>, vector<8x8xf32>
    %c0_1 = arith.constant 0 : index
    %c0_2 = arith.constant 0 : index
    %1 = vector.load %arg2[%c0_1, %c0_2] : memref<8x512xf32, #tpu.memory_space<vmem>>, vector<8x512xf32>
    %cst = arith.constant dense<0.000000e+00> : vector<8x512xf32>
    %2 = tpu.matmul %0, %1, %cst {dimension_numbers = #tpu.dot_dimension_numbers<[1], [0], [0], [1], [0, 0, 1, 1], [], []>, precision = #tpu.contract_precision<fp32>} : vector<8x8xf32>, vector<8x512xf32>, vector<8x512xf32> -> vector<8x512xf32>
    %c0_3 = arith.constant 0 : index
    %c0_4 = arith.constant 0 : index
    %3 = vector.load %arg3[%c0_3, %c0_4] : memref<1x512xf32, #tpu.memory_space<vmem>>, vector<1x512xf32>
    %4 = vector.broadcast %3 : vector<1x512xf32> to vector<8x512xf32>
    %5 = arith.addf %2, %4 : vector<8x512xf32>
    %6 = math.sin %5 : vector<8x512xf32>
    %7 = arith.truncf %6 : vector<8x512xf32> to vector<8x512xbf16>
    %c0_5 = arith.constant 0 : index
    %c0_6 = arith.constant 0 : index
    %8 = vector.load %arg4[%c0_5, %c0_6] : memref<512x512xbf16, #tpu.memory_space<vmem>>, vector<512x512xbf16>
    %cst_7 = arith.constant dense<0.000000e+00> : vector<8x512xf32>
    %9 = tpu.matmul %7, %8, %cst_7 {dimension_numbers = #tpu.dot_dimension_numbers<[1], [0], [0], [1], [0, 0, 1, 1], [], []>} : vector<8x512xbf16>, vector<512x512xbf16>, vector<8x512xf32> -> vector<8x512xf32>
    %c0_8 = arith.constant 0 : index
    %c0_9 = arith.constant 0 : index
    %10 = vector.load %arg5[%c0_8, %c0_9] : memref<1x512xf32, #tpu.memory_space<vmem>>, vector<1x512xf32>
    %11 = vector.broadcast %10 : vector<1x512xf32> to vector<8x512xf32>
    %12 = arith.addf %9, %11 : vector<8x512xf32>
    %cst_10 = arith.constant dense<0.000000e+00> : vector<8xf32>
    %13 = vector.multi_reduction <add>, %12, %cst_10 [1] : vector<8x512xf32> to vector<8xf32>
    %14 = vector.shape_cast %13 : vector<8xf32> to vector<8x1xf32>
    %cst_11 = arith.constant 5.120000e+02 : f32
    %15 = vector.broadcast %cst_11 : f32 to vector<8x1xf32>
    %16 = arith.divf %14, %15 : vector<8x1xf32>
    %17 = arith.mulf %12, %12 : vector<8x512xf32>
    %cst_12 = arith.constant dense<0.000000e+00> : vector<8xf32>
    %18 = vector.multi_reduction <add>, %17, %cst_12 [1] : vector<8x512xf32> to vector<8xf32>
    %19 = vector.shape_cast %18 : vector<8xf32> to vector<8x1xf32>
    %cst_13 = arith.constant 5.120000e+02 : f32
    %20 = vector.broadcast %cst_13 : f32 to vector<8x1xf32>
    %21 = arith.divf %19, %20 : vector<8x1xf32>
    %22 = arith.mulf %16, %16 : vector<8x1xf32>
    %23 = arith.subf %21, %22 : vector<8x1xf32>
    %cst_14 = arith.constant 0.000000e+00 : f32
    %24 = vector.broadcast %cst_14 : f32 to vector<8x1xf32>
    %25 = arith.maximumf %23, %24 : vector<8x1xf32>
    %26 = vector.broadcast %16 : vector<8x1xf32> to vector<8x512xf32>
    %27 = arith.subf %12, %26 : vector<8x512xf32>
    %cst_15 = arith.constant 9.99999974E-6 : f32
    %28 = vector.broadcast %cst_15 : f32 to vector<8x1xf32>
    %29 = arith.addf %25, %28 : vector<8x1xf32>
    %30 = math.rsqrt %29 : vector<8x1xf32>
    %31 = vector.broadcast %30 : vector<8x1xf32> to vector<8x512xf32>
    %32 = arith.mulf %27, %31 : vector<8x512xf32>
    %c0_16 = arith.constant 0 : index
    %c0_17 = arith.constant 0 : index
    %33 = vector.load %arg6[%c0_16, %c0_17] : memref<1x512xf32, #tpu.memory_space<vmem>>, vector<1x512xf32>
    %34 = vector.broadcast %33 : vector<1x512xf32> to vector<8x512xf32>
    %35 = arith.mulf %32, %34 : vector<8x512xf32>
    %c0_18 = arith.constant 0 : index
    %c0_19 = arith.constant 0 : index
    %36 = vector.load %arg7[%c0_18, %c0_19] : memref<1x512xf32, #tpu.memory_space<vmem>>, vector<1x512xf32>
    %37 = vector.broadcast %36 : vector<1x512xf32> to vector<8x512xf32>
    %38 = arith.addf %35, %37 : vector<8x512xf32>
    %39 = arith.truncf %38 : vector<8x512xf32> to vector<8x512xbf16>
    %c0_20 = arith.constant 0 : index
    %c0_21 = arith.constant 0 : index
    %40 = vector.load %arg8[%c0_20, %c0_21] : memref<512x2048xbf16, #tpu.memory_space<vmem>>, vector<512x2048xbf16>
    %cst_22 = arith.constant dense<0.000000e+00> : vector<8x2048xf32>
    %41 = tpu.matmul %39, %40, %cst_22 {dimension_numbers = #tpu.dot_dimension_numbers<[1], [0], [0], [1], [0, 0, 1, 1], [], []>} : vector<8x512xbf16>, vector<512x2048xbf16>, vector<8x2048xf32> -> vector<8x2048xf32>
    %c0_23 = arith.constant 0 : index
    %c0_24 = arith.constant 0 : index
    %42 = vector.load %arg9[%c0_23, %c0_24] : memref<1x2048xf32, #tpu.memory_space<vmem>>, vector<1x2048xf32>
    %43 = vector.broadcast %42 : vector<1x2048xf32> to vector<8x2048xf32>
    %44 = arith.addf %41, %43 : vector<8x2048xf32>
    %45 = arith.truncf %44 : vector<8x2048xf32> to vector<8x2048xbf16>
    %c0_25 = arith.constant 0 : index
    %c0_26 = arith.constant 0 : index
    %46 = vector.load %arg10[%c0_25, %c0_26] : memref<8x2048xbf16, #tpu.memory_space<vmem>>, vector<8x2048xbf16>
    tpu.vector_store %arg10[%c0_25, %c0_26], %45 {strides = array<i32>} : memref<8x2048xbf16, #tpu.memory_space<vmem>>, vector<8x2048xbf16>,
    return
  }
  func.func @transform_0(%arg0: i32) -> (i32, i32) {
    %c0_i32 = arith.constant 0 : i32
    %c0_i32_0 = arith.constant 0 : i32
    return %arg0, %c0_i32 : i32, i32
  }
  func.func @transform_1(%arg0: i32) -> (i32, i32) {
    %c0_i32 = arith.constant 0 : i32
    %c0_i32_0 = arith.constant 0 : i32
    %c0_i32_1 = arith.constant 0 : i32
    return %c0_i32, %c0_i32_0 : i32, i32
  }
  func.func @transform_2(%arg0: i32) -> (i32, i32) {
    %c0_i32 = arith.constant 0 : i32
    %c0_i32_0 = arith.constant 0 : i32
    %c0_i32_1 = arith.constant 0 : i32
    return %c0_i32, %c0_i32_0 : i32, i32
  }
  func.func @transform_3(%arg0: i32) -> (i32, i32) {
    %c0_i32 = arith.constant 0 : i32
    %c0_i32_0 = arith.constant 0 : i32
    %c0_i32_1 = arith.constant 0 : i32
    return %c0_i32, %c0_i32_0 : i32, i32
  }
  func.func @transform_4(%arg0: i32) -> (i32, i32) {
    %c0_i32 = arith.constant 0 : i32
    %c0_i32_0 = arith.constant 0 : i32
    %c0_i32_1 = arith.constant 0 : i32
    return %c0_i32, %c0_i32_0 : i32, i32
  }
  func.func @transform_5(%arg0: i32) -> (i32, i32) {
    %c0_i32 = arith.constant 0 : i32
    %c0_i32_0 = arith.constant 0 : i32
    %c0_i32_1 = arith.constant 0 : i32
    return %c0_i32, %c0_i32_0 : i32, i32
  }
  func.func @transform_6(%arg0: i32) -> (i32, i32) {
    %c0_i32 = arith.constant 0 : i32
    %c0_i32_0 = arith.constant 0 : i32
    %c0_i32_1 = arith.constant 0 : i32
    return %c0_i32, %c0_i32_0 : i32, i32
  }
  func.func @transform_7(%arg0: i32) -> (i32, i32) {
    %c0_i32 = arith.constant 0 : i32
    %c0_i32_0 = arith.constant 0 : i32
    %c0_i32_1 = arith.constant 0 : i32
    return %c0_i32, %c0_i32_0 : i32, i32
  }
  func.func @transform_8(%arg0: i32) -> (i32, i32) {
    %c0_i32 = arith.constant 0 : i32
    %c0_i32_0 = arith.constant 0 : i32
    %c0_i32_1 = arith.constant 0 : i32
    return %c0_i32, %c0_i32_0 : i32, i32
  }
  func.func @transform_9(%arg0: i32) -> (i32, i32) {
    %c0_i32 = arith.constant 0 : i32
    %c0_i32_0 = arith.constant 0 : i32
    return %arg0, %c0_i32 : i32, i32
  }
}

</mosaic_0001>

<llo_original>
// kernel: sine_positional_encoding.1
$region0: #{sine_positional_encoding.1}
  #allocation0 [shape = 'u32[]', space=smem, size = 0x4, offset = 0x4, fixed_abs, tag = 'smem constant byte address 0x4 - core index']
  #allocation1 [shape = 'u32[144,128]{1,0:T(1,128)}', space=vmem, size = 0x12000, scoped, tag = 'internal scratch']
  %s0 = inlined_call_operand.vmem [shape: f32[16,8], index: 0, kind: input, shape index: {}]
  %s1 = inlined_call_operand.vmem [shape: f32[8,512], index: 1, kind: input, shape index: {}]
  %s2 = inlined_call_operand.vmem [shape: f32[1,512], index: 2, kind: input, shape index: {}]
  %s3 = inlined_call_operand.hbm [shape: bf16[512,512], index: 3, kind: input, shape index: {}]
  %s4 = inlined_call_operand.hbm [shape: f32[1,512], index: 4, kind: input, shape index: {}]
  %s5 = inlined_call_operand.hbm [shape: f32[1,512], index: 5, kind: input, shape index: {}]
  %s6 = inlined_call_operand.hbm [shape: f32[1,512], index: 6, kind: input, shape index: {}]
  %s7 = inlined_call_operand.hbm [shape: bf16[512,2048], index: 7, kind: input, shape index: {}]
  %s8 = inlined_call_operand.hbm [shape: f32[1,2048], index: 8, kind: input, shape index: {}]
  %s9 = inlined_call_operand.vmem [shape: bf16[16,2048], index: 9, kind: output, shape index: {}]
  %s10 = sld [smem:[#allocation0]]
  $region93: #{sine_positional_encoding.1} parent=0
    _
  %s12 = ssub.s32 1, %s10
  %s13 = scalar_select 0, %s12, %s10
  $region1: #{sine_positional_encoding.1} parent=0
    #allocation2 [shape = 'u8[524288]{0}', space=vmem, size = 0x80000, scoped, tag = 'input window, operand 3, single buffered']
    #allocation3 [shape = 's32[2]{0}', space=sflag, size = 0x8, scoped, tag = 'scoped memory for sine_positional_encoding.1']
    #allocation4 [shape = 'u8[2048]{0}', space=vmem, size = 0x800, scoped, tag = 'input window, operand 4, single buffered']
    #allocation5 [shape = 's32[1]{0}', space=sflag, size = 0x4, scoped, tag = 'scoped memory for sine_positional_encoding.1']
    #allocation6 [shape = 'u8[2048]{0}', space=vmem, size = 0x800, scoped, tag = 'input window, operand 5, single buffered']
    #allocation7 [shape = 'u8[2048]{0}', space=vmem, size = 0x800, scoped, tag = 'input window, operand 6, single buffered']
    #allocation8 [shape = 's32[1]{0}', space=sflag, size = 0x4, scoped, tag = 'scoped memory for sine_positional_encoding.1']
    #allocation9 [shape = 'u8[2097152]{0}', space=vmem, size = 0x200000, scoped, tag = 'input window, operand 7, single buffered']
    #allocation10 [shape = 'u8[8192]{0}', space=vmem, size = 0x2000, scoped, tag = 'input window, operand 8, single buffered']
    #allocation11 [shape = 's32[1]{0}', space=sflag, size = 0x4, scoped, tag = 'scoped memory for sine_positional_encoding.1']
    %14 = vsyncpa [#allocation3], 0
    %15 = vsyncpa [#allocation5], 0
    %16 = vsyncpa [#allocation8], 0
    %17 = vsyncpa [#allocation11], 0
    loop: start=0, step=1, limit=4
    $region2: #{sine_positional_encoding.1} parent=1 // loop_pre_header
      _
    $region3: #{sine_positional_encoding.1} parent=1 // loop_header
      %s19 = sphi 0, %s23
      %p20 = scmp.ge.s32.totalorder %s19, 4
      %s29 = sphi 0, %s31
      %s32 = sphi 0, %s29
      %s33 = sphi 0, %s32
      %s49 = sphi 0, %s33
      %s53 = sphi 0, %s53
      %s55 = sphi 0, %s53
      %s56 = sphi 0, %s55
      %s70 = sphi 0, %s56
      %s74 = sphi 0, %s74
      %s76 = sphi 0, %s74
      %s77 = sphi 0, %s76
      %s91 = sphi 0, %s77
      %s95 = sphi 0, %s95
      %s97 = sphi 0, %s95
      %s98 = sphi 0, %s97
      %s112 = sphi 0, %s98
      %s116 = sphi 0, %s116
      %s118 = sphi 0, %s116
      %s119 = sphi 0, %s118
      %s133 = sphi 0, %s119
      %s137 = sphi 0, %s137
      %s139 = sphi 0, %s137
      %s140 = sphi 0, %s139
      %s154 = sphi 0, %s140
      %s158 = sphi 0, %s158
      %s160 = sphi 0, %s158
      %s161 = sphi 0, %s160
      %s175 = sphi 0, %s161
      %s179 = sphi 0, %s179
      %s181 = sphi 0, %s179
      %s182 = sphi 0, %s181
      %s196 = sphi 0, %s182
      %s200 = sphi 0, %s200
      %s202 = sphi 0, %s200
      %s203 = sphi 0, %s202
      %s217 = sphi 0, %s203
      %s223 = sphi 0, %s225
      %s226 = sphi 0, %s223
      %s227 = sphi 0, %s226
      %s243 = sphi 0, %s227
    $region4: #{sine_positional_encoding.1} parent=1 // loop_header_branch
      %22 = sbr.rel (%p20) target = $region8
    $region5: #{sine_positional_encoding.1} parent=1 // loop_body
      %s24 = ssub.s32 %s19, 1
      %s25 = ssub.s32 %s19, 2
      %s26 = sadd.s32 %s19, 1
      %s27 = ssub.s32 %s19, %s26
      %p28 = scmp.eq.s32.totalorder %s27, 0
      %s30 = sadd.s32 %s29, 1
      %s31 = scalar_select %p28, %s29, %s30
      %p34 = pneg %p28
      %p35 = scmp.eq.s32.totalorder %s19, 1
      %p36 = por %p34, %p35
      %p37 = scmp.ne.s32.totalorder %s29, %s32
      %p38 = scmp.eq.s32.totalorder %s19, 0
      %p39 = por %p37, %p38
      %p40 = scmp.ne.s32.totalorder %s29, %s32
      %p41 = scmp.eq.s32.totalorder %s24, 1
      %p42 = por %p40, %p41
      %p43 = scmp.ne.s32.totalorder %s32, %s33
      %p44 = scmp.eq.s32.totalorder %s24, 0
      %p45 = por %p43, %p44
      %p46 = scmp.ne.s32.totalorder %s32, %s33
      %p47 = scmp.eq.s32.totalorder %s25, 1
      %p48 = por %p46, %p47
      %p50 = scmp.ne.s32.totalorder %s33, %s49
      %p51 = scmp.eq.s32.totalorder %s25, 0
      %p52 = por %p50, %p51
      %s54 = sadd.s32 %s53, 1
      %p57 = scmp.eq.s32.totalorder %s19, 1
      %p58 = scmp.ne.s32.totalorder %s53, %s55
      %p59 = scmp.eq.s32.totalorder %s19, 0
      %p60 = por %p58, %p59
      %p61 = scmp.ne.s32.totalorder %s53, %s55
      %p62 = scmp.eq.s32.totalorder %s24, 1
      %p63 = por %p61, %p62
      %p64 = scmp.ne.s32.totalorder %s55, %s56
      %p65 = scmp.eq.s32.totalorder %s24, 0
      %p66 = por %p64, %p65
      %p67 = scmp.ne.s32.totalorder %s55, %s56
      %p68 = scmp.eq.s32.totalorder %s25, 1
      %p69 = por %p67, %p68
      %p71 = scmp.ne.s32.totalorder %s56, %s70
      %p72 = scmp.eq.s32.totalorder %s25, 0
      %p73 = por %p71, %p72
      %s75 = sadd.s32 %s74, 1
      %p78 = scmp.eq.s32.totalorder %s19, 1
      %p79 = scmp.ne.s32.totalorder %s74, %s76
      %p80 = scmp.eq.s32.totalorder %s19, 0
      %p81 = por %p79, %p80
      %p82 = scmp.ne.s32.totalorder %s74, %s76
      %p83 = scmp.eq.s32.totalorder %s24, 1
      %p84 = por %p82, %p83
      %p85 = scmp.ne.s32.totalorder %s76, %s77
      %p86 = scmp.eq.s32.totalorder %s24, 0
      %p87 = por %p85, %p86
      %p88 = scmp.ne.s32.totalorder %s76, %s77
      %p89 = scmp.eq.s32.totalorder %s25, 1
      %p90 = por %p88, %p89
      %p92 = scmp.ne.s32.totalorder %s77, %s91
      %p93 = scmp.eq.s32.totalorder %s25, 0
      %p94 = por %p92, %p93
      %s96 = sadd.s32 %s95, 1
      %p99 = scmp.eq.s32.totalorder %s19, 1
      %p100 = scmp.ne.s32.totalorder %s95, %s97
      %p101 = scmp.eq.s32.totalorder %s19, 0
      %p102 = por %p100, %p101
      %p103 = scmp.ne.s32.totalorder %s95, %s97
      %p104 = scmp.eq.s32.totalorder %s24, 1
      %p105 = por %p103, %p104
      %p106 = scmp.ne.s32.totalorder %s97, %s98
      %p107 = scmp.eq.s32.totalorder %s24, 0
      %p108 = por %p106, %p107
      %p109 = scmp.ne.s32.totalorder %s97, %s98
      %p110 = scmp.eq.s32.totalorder %s25, 1
      %p111 = por %p109, %p110
      %p113 = scmp.ne.s32.totalorder %s98, %s112
      %p114 = scmp.eq.s32.totalorder %s25, 0
      %p115 = por %p113, %p114
      %s117 = sadd.s32 %s116, 1
      %p120 = scmp.eq.s32.totalorder %s19, 1
      %p121 = scmp.ne.s32.totalorder %s116, %s118
      %p122 = scmp.eq.s32.totalorder %s19, 0
      %p123 = por %p121, %p122
      %p124 = scmp.ne.s32.totalorder %s116, %s118
      %p125 = scmp.eq.s32.totalorder %s24, 1
      %p126 = por %p124, %p125
      %p127 = scmp.ne.s32.totalorder %s118, %s119
      %p128 = scmp.eq.s32.totalorder %s24, 0
      %p129 = por %p127, %p128
      %p130 = scmp.ne.s32.totalorder %s118, %s119
      %p131 = scmp.eq.s32.totalorder %s25, 1
      %p132 = por %p130, %p131
      %p134 = scmp.ne.s32.totalorder %s119, %s133
      %p135 = scmp.eq.s32.totalorder %s25, 0
      %p136 = por %p134, %p135
      %s138 = sadd.s32 %s137, 1
      %p141 = scmp.eq.s32.totalorder %s19, 1
      %p142 = scmp.ne.s32.totalorder %s137, %s139
      %p143 = scmp.eq.s32.totalorder %s19, 0
      %p144 = por %p142, %p143
      %p145 = scmp.ne.s32.totalorder %s137, %s139
      %p146 = scmp.eq.s32.totalorder %s24, 1
      %p147 = por %p145, %p146
      %p148 = scmp.ne.s32.totalorder %s139, %s140
      %p149 = scmp.eq.s32.totalorder %s24, 0
      %p150 = por %p148, %p149
      %p151 = scmp.ne.s32.totalorder %s139, %s140
      %p152 = scmp.eq.s32.totalorder %s25, 1
      %p153 = por %p151, %p152
      %p155 = scmp.ne.s32.totalorder %s140, %s154
      %p156 = scmp.eq.s32.totalorder %s25, 0
      %p157 = por %p155, %p156
      %s159 = sadd.s32 %s158, 1
      %p162 = scmp.eq.s32.totalorder %s19, 1
      %p163 = scmp.ne.s32.totalorder %s158, %s160
      %p164 = scmp.eq.s32.totalorder %s19, 0
      %p165 = por %p163, %p164
      %p166 = scmp.ne.s32.totalorder %s158, %s160
      %p167 = scmp.eq.s32.totalorder %s24, 1
      %p168 = por %p166, %p167
      %p169 = scmp.ne.s32.totalorder %s160, %s161
      %p170 = scmp.eq.s32.totalorder %s24, 0
      %p171 = por %p169, %p170
      %p172 = scmp.ne.s32.totalorder %s160, %s161
      %p173 = scmp.eq.s32.totalorder %s25, 1
      %p174 = por %p172, %p173
      %p176 = scmp.ne.s32.totalorder %s161, %s175
      %p177 = scmp.eq.s32.totalorder %s25, 0
      %p178 = por %p176, %p177
      %s180 = sadd.s32 %s179, 1
      %p183 = scmp.eq.s32.totalorder %s19, 1
      %p184 = scmp.ne.s32.totalorder %s179, %s181
      %p185 = scmp.eq.s32.totalorder %s19, 0
      %p186 = por %p184, %p185
      %p187 = scmp.ne.s32.totalorder %s179, %s181
      %p188 = scmp.eq.s32.totalorder %s24, 1
      %p189 = por %p187, %p188
      %p190 = scmp.ne.s32.totalorder %s181, %s182
      %p191 = scmp.eq.s32.totalorder %s24, 0
      %p192 = por %p190, %p191
      %p193 = scmp.ne.s32.totalorder %s181, %s182
      %p194 = scmp.eq.s32.totalorder %s25, 1
      %p195 = por %p193, %p194
      %p197 = scmp.ne.s32.totalorder %s182, %s196
      %p198 = scmp.eq.s32.totalorder %s25, 0
      %p199 = por %p197, %p198
      %s201 = sadd.s32 %s200, 1
      %p204 = scmp.eq.s32.totalorder %s19, 1
      %p205 = scmp.ne.s32.totalorder %s200, %s202
      %p206 = scmp.eq.s32.totalorder %s19, 0
      %p207 = por %p205, %p206
      %p208 = scmp.ne.s32.totalorder %s200, %s202
      %p209 = scmp.eq.s32.totalorder %s24, 1
      %p210 = por %p208, %p209
      %p211 = scmp.ne.s32.totalorder %s202, %s203
      %p212 = scmp.eq.s32.totalorder %s24, 0
      %p213 = por %p211, %p212
      %p214 = scmp.ne.s32.totalorder %s202, %s203
      %p215 = scmp.eq.s32.totalorder %s25, 1
      %p216 = por %p214, %p215
      %p218 = scmp.ne.s32.totalorder %s203, %s217
      %p219 = scmp.eq.s32.totalorder %s25, 0
      %p220 = por %p218, %p219
      %s221 = ssub.s32 %s19, %s26
      %p222 = scmp.eq.s32.totalorder %s221, 0
      %s224 = sadd.s32 %s223, 1
      %s225 = scalar_select %p222, %s223, %s224
      %p228 = pneg %p222
      %p229 = scmp.eq.s32.totalorder %s19, 1
      %p230 = por %p228, %p229
      %p231 = scmp.ne.s32.totalorder %s223, %s226
      %p232 = scmp.eq.s32.totalorder %s19, 0
      %p233 = por %p231, %p232
      %p234 = scmp.ne.s32.totalorder %s223, %s226
      %p235 = scmp.eq.s32.totalorder %s24, 1
      %p236 = por %p234, %p235
      %p237 = scmp.ne.s32.totalorder %s226, %s227
      %p238 = scmp.eq.s32.totalorder %s24, 0
      %p239 = por %p237, %p238
      %p240 = scmp.ne.s32.totalorder %s226, %s227
      %p241 = scmp.eq.s32.totalorder %s25, 1
      %p242 = por %p240, %p241
      %p244 = scmp.ne.s32.totalorder %s227, %s243
      %p245 = scmp.eq.s32.totalorder %s25, 0
      %p246 = por %p244, %p245
      %p247 = scmp.le.s32.totalorder 1, %s19
      %p248 = scmp.lt.s32.totalorder %s19, 3
      %p249 = pnand %p247, %p248
      %p250 = pneg %p249
      // Predicated region
      $region9: #{sine_positional_encoding.1} parent=5 // pred_check
        _
      $region10: #{sine_positional_encoding.1} parent=5 // pred_check_branch
        %252 = sbr.rel (%p249) target = $region12
      $region11: #{sine_positional_encoding.1} parent=5 // pred_region
        %s253 = ssub.s32 %s19, 1
        // Predicated region
        $region13: #{sine_positional_encoding.1} parent=11 // pred_check
          %p254 = pneg %p66
        $region14: #{sine_positional_encoding.1} parent=11 // pred_check_branch
          %256 = sbr.rel (%p254) target = $region16
        $region15: #{sine_positional_encoding.1} parent=11 // pred_region
          _
        $region16: #{sine_positional_encoding.1} parent=11 // pred_fallthru
          _
        // Predicated region
        $region17: #{sine_positional_encoding.1} parent=11 // pred_check
          %p257 = pneg %p87
        $region18: #{sine_positional_encoding.1} parent=11 // pred_check_branch
          %259 = sbr.rel (%p257) target = $region20
        $region19: #{sine_positional_encoding.1} parent=11 // pred_region
          _
        $region20: #{sine_positional_encoding.1} parent=11 // pred_fallthru
          _
        // Predicated region
        $region21: #{sine_positional_encoding.1} parent=11 // pred_check
          %p260 = pneg %p108
        $region22: #{sine_positional_encoding.1} parent=11 // pred_check_branch
          %262 = sbr.rel (%p260) target = $region24
        $region23: #{sine_positional_encoding.1} parent=11 // pred_region
          %s264 = ssub.s32 16384, 16384
          %265 = vsyncadd [#allocation3], %s264
          %s266 = sshll.u32 [#allocation2], 4
          %s267 = int_to_ptr.vmem [resolvable:$true] %s266
          %272 = dma.hbm_to_vmem [thread:$0]  %s3, 16384, %s267, [#allocation3], 256, 256, 16
        $region24: #{sine_positional_encoding.1} parent=11 // pred_fallthru
          _
        // Predicated region
        $region25: #{sine_positional_encoding.1} parent=11 // pred_check
          %p273 = pneg %p129
        $region26: #{sine_positional_encoding.1} parent=11 // pred_check_branch
          %275 = sbr.rel (%p273) target = $region28
        $region27: #{sine_positional_encoding.1} parent=11 // pred_region
          %s277 = ssub.s32 64, 64
          %278 = vsyncadd [#allocation5], %s277
          %s280 = sshll.u32 [#allocation4], 4
          %s281 = int_to_ptr.vmem [resolvable:$true] %s280
          %283 = dma.hbm_to_vmem [thread:$0]  %s4, 64, %s281, [#allocation5]
        $region28: #{sine_positional_encoding.1} parent=11 // pred_fallthru
          _
        // Predicated region
        $region29: #{sine_positional_encoding.1} parent=11 // pred_check
          %p284 = pneg %p150
        $region30: #{sine_positional_encoding.1} parent=11 // pred_check_branch
          %286 = sbr.rel (%p284) target = $region32
        $region31: #{sine_positional_encoding.1} parent=11 // pred_region
          %s288 = ssub.s32 64, 64
          %289 = vsyncadd [#allocation5], %s288
          %s291 = sshll.u32 [#allocation6], 4
          %s292 = int_to_ptr.vmem [resolvable:$true] %s291
          %294 = dma.hbm_to_vmem [thread:$0]  %s5, 64, %s292, [#allocation5]
        $region32: #{sine_positional_encoding.1} parent=11 // pred_fallthru
          _
        // Predicated region
        $region33: #{sine_positional_encoding.1} parent=11 // pred_check
          %p295 = pneg %p171
        $region34: #{sine_positional_encoding.1} parent=11 // pred_check_branch
          %297 = sbr.rel (%p295) target = $region36
        $region35: #{sine_positional_encoding.1} parent=11 // pred_region
          %s299 = ssub.s32 64, 64
          %300 = vsyncadd [#allocation8], %s299
          %s302 = sshll.u32 [#allocation7], 4
          %s303 = int_to_ptr.vmem [resolvable:$true] %s302
          %305 = dma.hbm_to_vmem [thread:$0]  %s6, 64, %s303, [#allocation8]
        $region36: #{sine_positional_encoding.1} parent=11 // pred_fallthru
          _
        // Predicated region
        $region37: #{sine_positional_encoding.1} parent=11 // pred_check
          %p306 = pneg %p192
        $region38: #{sine_positional_encoding.1} parent=11 // pred_check_branch
          %308 = sbr.rel (%p306) target = $region40
        $region39: #{sine_positional_encoding.1} parent=11 // pred_region
          %s310 = ssub.s32 65536, 65536
          %311 = vsyncadd [#allocation8], %s310
          %s312 = sshll.u32 [#allocation9], 4
          %s313 = int_to_ptr.vmem [resolvable:$true] %s312
          %318 = dma.hbm_to_vmem [thread:$0]  %s7, 65536, %s313, [#allocation8], 1024, 1024, 64
        $region40: #{sine_positional_encoding.1} parent=11 // pred_fallthru
          _
        // Predicated region
        $region41: #{sine_positional_encoding.1} parent=11 // pred_check
          %p319 = pneg %p213
        $region42: #{sine_positional_encoding.1} parent=11 // pred_check_branch
          %321 = sbr.rel (%p319) target = $region44
        $region43: #{sine_positional_encoding.1} parent=11 // pred_region
          %s323 = ssub.s32 256, 256
          %324 = vsyncadd [#allocation11], %s323
          %s326 = sshll.u32 [#allocation10], 4
          %s327 = int_to_ptr.vmem [resolvable:$true] %s326
          %329 = dma.hbm_to_vmem [thread:$0]  %s8, 256, %s327, [#allocation11]
        $region44: #{sine_positional_encoding.1} parent=11 // pred_fallthru
          _
      $region12: #{sine_positional_encoding.1} parent=5 // pred_fallthru
        _
      %p330 = scmp.lt.s32.totalorder %s19, 2
      // Predicated region
      $region45: #{sine_positional_encoding.1} parent=5 // pred_check
        %p331 = pneg %p330
      $region46: #{sine_positional_encoding.1} parent=5 // pred_check_branch
        %333 = sbr.rel (%p331) target = $region48
      $region47: #{sine_positional_encoding.1} parent=5 // pred_region
        // Predicated region
        $region49: #{sine_positional_encoding.1} parent=47 // pred_check
          %p334 = pneg %p39
        $region50: #{sine_positional_encoding.1} parent=47 // pred_check_branch
          %336 = sbr.rel (%p334) target = $region52
        $region51: #{sine_positional_encoding.1} parent=47 // pred_region
          %p337 = scmp.lt.s32.totalorder %s19, 1
          %s338 = scalar_select %p337, %s19, 1
          %s339 = smul.addr %s338, 8
          %s340 = scalar_lea.vmem %s0, %s339
        $region52: #{sine_positional_encoding.1} parent=47 // pred_fallthru
          _
      $region48: #{sine_positional_encoding.1} parent=5 // pred_fallthru
        _
      %p341 = scmp.le.s32.totalorder 1, %s19
      %p342 = scmp.lt.s32.totalorder %s19, 3
      %p343 = pnand %p341, %p342
      %p344 = pneg %p343
      // Predicated region
      $region53: #{sine_positional_encoding.1} parent=5 // pred_check
        _
      $region54: #{sine_positional_encoding.1} parent=5 // pred_check_branch
        %346 = sbr.rel (%p343) target = $region56
      $region55: #{sine_positional_encoding.1} parent=5 // pred_region
        %s347 = ssub.s32 %s19, 1
        // Predicated region
        $region57: #{sine_positional_encoding.1} parent=55 // pred_check
          %p348 = pneg %p108
        $region58: #{sine_positional_encoding.1} parent=55 // pred_check_branch
          %350 = sbr.rel (%p348) target = $region60
        $region59: #{sine_positional_encoding.1} parent=55 // pred_region
          %351 = dma.done [#allocation3], 16384
        $region60: #{sine_positional_encoding.1} parent=55 // pred_fallthru
          _
        // Predicated region
        $region61: #{sine_positional_encoding.1} parent=55 // pred_check
          %p352 = pneg %p129
        $region62: #{sine_positional_encoding.1} parent=55 // pred_check_branch
          %354 = sbr.rel (%p352) target = $region64
        $region63: #{sine_positional_encoding.1} parent=55 // pred_region
          %355 = dma.done [#allocation5], 64
        $region64: #{sine_positional_encoding.1} parent=55 // pred_fallthru
          _
        // Predicated region
        $region65: #{sine_positional_encoding.1} parent=55 // pred_check
          %p356 = pneg %p150
        $region66: #{sine_positional_encoding.1} parent=55 // pred_check_branch
          %358 = sbr.rel (%p356) target = $region68
        $region67: #{sine_positional_encoding.1} parent=55 // pred_region
          %359 = dma.done [#allocation5], 64
        $region68: #{sine_positional_encoding.1} parent=55 // pred_fallthru
          _
        // Predicated region
        $region69: #{sine_positional_encoding.1} parent=55 // pred_check
          %p360 = pneg %p171
        $region70: #{sine_positional_encoding.1} parent=55 // pred_check_branch
          %362 = sbr.rel (%p360) target = $region72
        $region71: #{sine_positional_encoding.1} parent=55 // pred_region
          %363 = dma.done [#allocation8], 64
        $region72: #{sine_positional_encoding.1} parent=55 // pred_fallthru
          _
        // Predicated region
        $region73: #{sine_positional_encoding.1} parent=55 // pred_check
          %p364 = pneg %p192
        $region74: #{sine_positional_encoding.1} parent=55 // pred_check_branch
          %366 = sbr.rel (%p364) target = $region76
        $region75: #{sine_positional_encoding.1} parent=55 // pred_region
          %367 = dma.done [#allocation8], 65536
        $region76: #{sine_positional_encoding.1} parent=55 // pred_fallthru
          _
        // Predicated region
        $region77: #{sine_positional_encoding.1} parent=55 // pred_check
          %p368 = pneg %p213
        $region78: #{sine_positional_encoding.1} parent=55 // pred_check_branch
          %370 = sbr.rel (%p368) target = $region80
        $region79: #{sine_positional_encoding.1} parent=55 // pred_region
          %371 = dma.done [#allocation11], 256
        $region80: #{sine_positional_encoding.1} parent=55 // pred_fallthru
          _
        %p372 = scmp.lt.s32.totalorder %s24, 1
        %s373 = scalar_select %p372, %s24, 1
        %s374 = smul.addr %s373, 8
        %s375 = scalar_lea.vmem %s0, %s374
        %p376 = pneg %p45
        %p377 = pneg %p42
        %p378 = pneg %p66
        %p379 = pneg %p63
        %p380 = pneg %p87
        %p381 = pneg %p84
        %p382 = pneg %p108
        %p383 = pneg %p105
        %p384 = pneg %p129
        %p385 = pneg %p126
        %p386 = pneg %p150
        %p387 = pneg %p147
        %p388 = pneg %p171
        %p389 = pneg %p168
        %p390 = pneg %p192
        %p391 = pneg %p189
        %p392 = pneg %p213
        %p393 = pneg %p210
        %p394 = pneg %p239
        %p395 = pneg %p236
        %p396 = scmp.lt.s32.totalorder %s24, 1
        %s397 = scalar_select %p396, %s24, 1
        %s398 = smul.addr %s397, 16
        %s399 = smul.addr %s398, 4
        %s400 = scalar_lea.vmem %s9, %s399
        %p401 = scmp.lt.s32.totalorder %s24, 1
        %s402 = scalar_select %p401, %s24, 1
        %s403 = smul.addr %s402, 8
        %s404 = scalar_lea.vmem %s0, %s403
        %p405 = scmp.lt.s32.totalorder %s24, 1
        %s406 = scalar_select %p405, %s24, 1
        %s407 = smul.addr %s406, 16
        %s408 = smul.addr %s407, 4
        %s409 = scalar_lea.vmem %s9, %s408
        %v410 = vld [vmem:[%s404] sm:$0xff]
        %v411 = vld [vmem:[%s1] sm:$0xff]
        %v412 = vld [vmem:[%s1 + $0x8] sm:$0xff]
        %v413 = vld [vmem:[%s1 + $0x10] sm:$0xff]
        %v414 = vld [vmem:[%s1 + $0x18] sm:$0xff]
        %v415 = vld [vmem:[%s2] sm:$0xf]
        %v417 = vlaneseq
        %v418 = vshrl.u32 %v417, 7
        %v419 = vsub.s32 0, %v418
        %v420 = vrot.slane %v415, %v419
        %v421 = vlaneseq
        %v422 = vshrl.u32 %v421, 7
        %v423 = vsub.s32 1, %v422
        %v424 = vrot.slane %v415, %v423
        %v425 = vlaneseq
        %v426 = vshrl.u32 %v425, 7
        %v427 = vsub.s32 2, %v426
        %v428 = vrot.slane %v415, %v427
        %v429 = vlaneseq
        %v430 = vshrl.u32 %v429, 7
        %v431 = vsub.s32 3, %v430
        %v432 = vrot.slane %v415, %v431
        %vm437 = vcmask 64512
        %v439 = vsel %vm437, %v410, 0
        %v441 = vand.u32 %v412, 4294901760
        %442 = vmatprep.subr.mxu0 %v441
        %v443 = vand.u32 %v411, 4294901760
        %444 = vmatpush1.msra.mxu0 %v443
        %445 = vmatprep.subr.mxu0 0.0
        %446 = vmatpush1.msra.mxu0 0.0
        %447 = vmatprep.subr.mxu0 0.0
        %448 = vmatpush1.msra.mxu0 0.0
        %449 = vmatprep.subr.mxu0 0.0
        %450 = vmatpush1.msra.mxu0 0.0
        %451 = vmatprep.subr.mxu0 0.0
        %452 = vmatpush1.msra.mxu0 0.0
        %453 = vmatprep.subr.mxu0 0.0
        %454 = vmatpush1.msra.mxu0 0.0
        %455 = vmatprep.subr.mxu0 0.0
        %456 = vmatpush1.msra.mxu0 0.0
        %457 = vmatprep.subr.mxu0 0.0
        %458 = vmatpush1.msra.mxu0 0.0
        %459 = vmatprep.subr.mxu0 0.0
        %460 = vmatpush1.msra.mxu0 0.0
        %461 = vmatprep.subr.mxu0 0.0
        %462 = vmatpush1.msra.mxu0 0.0
        %463 = vmatprep.subr.mxu0 0.0
        %464 = vmatpush1.msra.mxu0 0.0
        %465 = vmatprep.subr.mxu0 0.0
        %466 = vmatpush1.msra.mxu0 0.0
        %467 = vmatprep.subr.mxu0 0.0
        %468 = vmatpush1.msra.mxu0 0.0
        %469 = vmatprep.subr.mxu0 0.0
        %470 = vmatpush1.msra.mxu0 0.0
        %471 = vmatprep.subr.mxu0 0.0
        %472 = vmatpush1.msra.mxu0 0.0
        %473 = vmatprep.subr.mxu0 0.0
        %474 = vmatpush1.msra.mxu0 0.0
        %475 = vmatprep.subr.mxu0 0.0
        %476 = vmatpush1.msra.mxu0 0.0
        %477 = vmatprep.subr.mxu0 0.0
        %478 = vmatpush1.msra.mxu0 0.0
        %479 = vmatprep.subr.mxu0 0.0
        %480 = vmatpush1.msra.mxu0 0.0
        %481 = vmatprep.subr.mxu0 0.0
        %482 = vmatpush1.msra.mxu0 0.0
        %483 = vmatprep.subr.mxu0 0.0
        %484 = vmatpush1.msra.mxu0 0.0
        %485 = vmatprep.subr.mxu0 0.0
        %486 = vmatpush1.msra.mxu0 0.0
        %487 = vmatprep.subr.mxu0 0.0
        %488 = vmatpush1.msra.mxu0 0.0
        %489 = vmatprep.subr.mxu0 0.0
        %490 = vmatpush1.msra.mxu0 0.0
        %491 = vmatprep.subr.mxu0 0.0
        %492 = vmatpush1.msra.mxu0 0.0
        %493 = vmatprep.subr.mxu0 0.0
        %494 = vmatpush1.msra.mxu0 0.0
        %495 = vmatprep.subr.mxu0 0.0
        %496 = vmatpush1.msra.mxu0 0.0
        %497 = vmatprep.subr.mxu0 0.0
        %498 = vmatpush1.msra.mxu0 0.0
        %499 = vmatprep.subr.mxu0 0.0
        %500 = vmatpush1.msra.mxu0 0.0
        %501 = vmatprep.subr.mxu0 0.0
        %502 = vmatpush1.msra.mxu0 0.0
        %503 = vmatprep.subr.mxu0 0.0
        %504 = vmatpush1.msra.mxu0 0.0
        %505 = vmatprep.subr.mxu0 0.0
        %506 = vmatpush1.msra.mxu0 0.0
        %507 = vmatprep.mubr.f32.mxu0 0.0
        %v508 = vand.u32 %v439, 4294901760
        %v509 = vsub.f32 %v439, %v508
        %v510 = vand.u32 %v509, 4294901760
        %v511 = vsub.f32 %v509, %v510
        %v512 = vand.u32 %v511, 4294901760
        %513 = vmatmul.mubr.f32.gmra.mrb[0].mxu0 %v512
        %v514 = vpop.f32.mrb[0].mxu0
        %v515 = vadd.f32 %v420, %v514
        %v516 = vpop.f32.mrb[0].mxu0
        %v517 = vadd.f32 %v424, %v516
        %518 = vdwg.mxu0
        %v519 = vand.u32 %v412, 4294901760
        %v520 = vsub.f32 %v412, %v519
        %v521 = vand.u32 %v520, 4294901760
        %v522 = vsub.f32 %v520, %v521
        %v523 = vand.u32 %v522, 4294901760
        %524 = vmatprep.subr.mxu0 %v523
        %v525 = vand.u32 %v411, 4294901760
        %v526 = vsub.f32 %v411, %v525
        %v527 = vand.u32 %v526, 4294901760
        %v528 = vsub.f32 %v526, %v527
        %v529 = vand.u32 %v528, 4294901760
        %530 = vmatpush1.msra.mxu0 %v529
        %531 = vmatprep.subr.mxu0 0.0
        %532 = vmatpush1.msra.mxu0 0.0
        %533 = vmatprep.subr.mxu0 0.0
        %534 = vmatpush1.msra.mxu0 0.0
        %535 = vmatprep.subr.mxu0 0.0
        %536 = vmatpush1.msra.mxu0 0.0
        %537 = vmatprep.subr.mxu0 0.0
        %538 = vmatpush1.msra.mxu0 0.0
        %539 = vmatprep.subr.mxu0 0.0
        %540 = vmatpush1.msra.mxu0 0.0
        %541 = vmatprep.subr.mxu0 0.0
        %542 = vmatpush1.msra.mxu0 0.0
        %543 = vmatprep.subr.mxu0 0.0
        %544 = vmatpush1.msra.mxu0 0.0
        %545 = vmatprep.subr.mxu0 0.0
        %546 = vmatpush1.msra.mxu0 0.0
        %547 = vmatprep.subr.mxu0 0.0
        %548 = vmatpush1.msra.mxu0 0.0
        %549 = vmatprep.subr.mxu0 0.0
        %550 = vmatpush1.msra.mxu0 0.0
        %551 = vmatprep.subr.mxu0 0.0
        %552 = vmatpush1.msra.mxu0 0.0
        %553 = vmatprep.subr.mxu0 0.0
        %554 = vmatpush1.msra.mxu0 0.0
        %555 = vmatprep.subr.mxu0 0.0
        %556 = vmatpush1.msra.mxu0 0.0
        %557 = vmatprep.subr.mxu0 0.0
        %558 = vmatpush1.msra.mxu0 0.0
        %559 = vmatprep.subr.mxu0 0.0
        %560 = vmatpush1.msra.mxu0 0.0
        %561 = vmatprep.subr.mxu0 0.0
        %562 = vmatpush1.msra.mxu0 0.0
        %563 = vmatprep.subr.mxu0 0.0
        %564 = vmatpush1.msra.mxu0 0.0
        %565 = vmatprep.subr.mxu0 0.0
        %566 = vmatpush1.msra.mxu0 0.0
        %567 = vmatprep.subr.mxu0 0.0
        %568 = vmatpush1.msra.mxu0 0.0
        %569 = vmatprep.subr.mxu0 0.0
        %570 = vmatpush1.msra.mxu0 0.0
        %571 = vmatprep.subr.mxu0 0.0
        %572 = vmatpush1.msra.mxu0 0.0
        %573 = vmatprep.subr.mxu0 0.0
        %574 = vmatpush1.msra.mxu0 0.0
        %575 = vmatprep.subr.mxu0 0.0
        %576 = vmatpush1.msra.mxu0 0.0
        %577 = vmatprep.subr.mxu0 0.0
        %578 = vmatpush1.msra.mxu0 0.0
        %579 = vmatprep.subr.mxu0 0.0
        %580 = vmatpush1.msra.mxu0 0.0
        %581 = vmatprep.subr.mxu0 0.0
        %582 = vmatpush1.msra.mxu0 0.0
        %583 = vmatprep.subr.mxu0 0.0
        %584 = vmatpush1.msra.mxu0 0.0
        %585 = vmatprep.subr.mxu0 0.0
        %586 = vmatpush1.msra.mxu0 0.0
        %587 = vmatprep.subr.mxu0 0.0
        %588 = vmatpush1.msra.mxu0 0.0
        %589 = vmatprep.subr.mxu0 0.0
        %590 = vmatpush1.msra.mxu0 0.0
        %591 = vmatprep.subr.mxu0 0.0
        %592 = vmatpush1.msra.mxu0 0.0
        %593 = vmatprep.mubr.f32.mxu0 0.0
        %v594 = vand.u32 %v439, 4294901760
        %595 = vmatmul.mubr.f32.gmra.mrb[0].mxu0 %v594
        %v596 = vpop.f32.mrb[0].mxu0
        %v597 = vadd.f32 %v515, %v596
        %v598 = vpop.f32.mrb[0].mxu0
        %v599 = vadd.f32 %v517, %v598
        %600 = vdwg.mxu0
        %v601 = vand.u32 %v412, 4294901760
        %v602 = vsub.f32 %v412, %v601
        %603 = vmatprep.subr.mxu0 %v602
        %v604 = vand.u32 %v411, 4294901760
        %v605 = vsub.f32 %v411, %v604
        %606 = vmatpush1.msra.mxu0 %v605
        %607 = vmatprep.subr.mxu0 0.0
        %608 = vmatpush1.msra.mxu0 0.0
        %609 = vmatprep.subr.mxu0 0.0
        %610 = vmatpush1.msra.mxu0 0.0
        %611 = vmatprep.subr.mxu0 0.0
        %612 = vmatpush1.msra.mxu0 0.0
        %613 = vmatprep.subr.mxu0 0.0
        %614 = vmatpush1.msra.mxu0 0.0
        %615 = vmatprep.subr.mxu0 0.0
        %616 = vmatpush1.msra.mxu0 0.0
        %617 = vmatprep.subr.mxu0 0.0
        %618 = vmatpush1.msra.mxu0 0.0
        %619 = vmatprep.subr.mxu0 0.0
        %620 = vmatpush1.msra.mxu0 0.0
        %621 = vmatprep.subr.mxu0 0.0
        %622 = vmatpush1.msra.mxu0 0.0
        %623 = vmatprep.subr.mxu0 0.0
        %624 = vmatpush1.msra.mxu0 0.0
        %625 = vmatprep.subr.mxu0 0.0
        %626 = vmatpush1.msra.mxu0 0.0
        %627 = vmatprep.subr.mxu0 0.0
        %628 = vmatpush1.msra.mxu0 0.0
        %629 = vmatprep.subr.mxu0 0.0
        %630 = vmatpush1.msra.mxu0 0.0
        %631 = vmatprep.subr.mxu0 0.0
        %632 = vmatpush1.msra.mxu0 0.0
        %633 = vmatprep.subr.mxu0 0.0
        %634 = vmatpush1.msra.mxu0 0.0
        %635 = vmatprep.subr.mxu0 0.0
        %636 = vmatpush1.msra.mxu0 0.0
        %637 = vmatprep.subr.mxu0 0.0
        %638 = vmatpush1.msra.mxu0 0.0
        %639 = vmatprep.subr.mxu0 0.0
        %640 = vmatpush1.msra.mxu0 0.0
        %641 = vmatprep.subr.mxu0 0.0
        %642 = vmatpush1.msra.mxu0 0.0
        %643 = vmatprep.subr.mxu0 0.0
        %644 = vmatpush1.msra.mxu0 0.0
        %645 = vmatprep.subr.mxu0 0.0
        %646 = vmatpush1.msra.mxu0 0.0
        %647 = vmatprep.subr.mxu0 0.0
        %648 = vmatpush1.msra.mxu0 0.0
        %649 = vmatprep.subr.mxu0 0.0
        %650 = vmatpush1.msra.mxu0 0.0
        %651 = vmatprep.subr.mxu0 0.0
        %652 = vmatpush1.msra.mxu0 0.0
        %653 = vmatprep.subr.mxu0 0.0
        %654 = vmatpush1.msra.mxu0 0.0
        %655 = vmatprep.subr.mxu0 0.0
        %656 = vmatpush1.msra.mxu0 0.0
        %657 = vmatprep.subr.mxu0 0.0
        %658 = vmatpush1.msra.mxu0 0.0
        %659 = vmatprep.subr.mxu0 0.0
        %660 = vmatpush1.msra.mxu0 0.0
        %661 = vmatprep.subr.mxu0 0.0
        %662 = vmatpush1.msra.mxu0 0.0
        %663 = vmatprep.subr.mxu0 0.0
        %664 = vmatpush1.msra.mxu0 0.0
        %665 = vmatprep.subr.mxu0 0.0
        %666 = vmatpush1.msra.mxu0 0.0
        %667 = vmatprep.subr.mxu0 0.0
        %668 = vmatpush1.msra.mxu0 0.0
        %669 = vmatprep.mubr.f32.mxu0 0.0
        %v670 = vand.u32 %v439, 4294901760
        %v671 = vsub.f32 %v439, %v670
        %672 = vmatmul.mubr.f32.gmra.mrb[0].mxu0 %v671
        %v673 = vpop.f32.mrb[0].mxu0
        %v674 = vadd.f32 %v597, %v673
        %v675 = vpop.f32.mrb[0].mxu0
        %v676 = vadd.f32 %v599, %v675
        %677 = vdwg.mxu0
        %v678 = vand.u32 %v412, 4294901760
        %679 = vmatprep.subr.mxu0 %v678
        %v680 = vand.u32 %v411, 4294901760
        %681 = vmatpush1.msra.mxu0 %v680
        %682 = vmatprep.subr.mxu0 0.0
        %683 = vmatpush1.msra.mxu0 0.0
        %684 = vmatprep.subr.mxu0 0.0
        %685 = vmatpush1.msra.mxu0 0.0
        %686 = vmatprep.subr.mxu0 0.0
        %687 = vmatpush1.msra.mxu0 0.0
        %688 = vmatprep.subr.mxu0 0.0
        %689 = vmatpush1.msra.mxu0 0.0
        %690 = vmatprep.subr.mxu0 0.0
        %691 = vmatpush1.msra.mxu0 0.0
        %692 = vmatprep.subr.mxu0 0.0
        %693 = vmatpush1.msra.mxu0 0.0
        %694 = vmatprep.subr.mxu0 0.0
        %695 = vmatpush1.msra.mxu0 0.0
        %696 = vmatprep.subr.mxu0 0.0
        %697 = vmatpush1.msra.mxu0 0.0
        %698 = vmatprep.subr.mxu0 0.0
        %699 = vmatpush1.msra.mxu0 0.0
        %700 = vmatprep.subr.mxu0 0.0
        %701 = vmatpush1.msra.mxu0 0.0
        %702 = vmatprep.subr.mxu0 0.0
        %703 = vmatpush1.msra.mxu0 0.0
        %704 = vmatprep.subr.mxu0 0.0
        %705 = vmatpush1.msra.mxu0 0.0
        %706 = vmatprep.subr.mxu0 0.0
        %707 = vmatpush1.msra.mxu0 0.0
        %708 = vmatprep.subr.mxu0 0.0
        %709 = vmatpush1.msra.mxu0 0.0
        %710 = vmatprep.subr.mxu0 0.0
        %711 = vmatpush1.msra.mxu0 0.0
        %712 = vmatprep.subr.mxu0 0.0
        %713 = vmatpush1.msra.mxu0 0.0
        %714 = vmatprep.subr.mxu0 0.0
        %715 = vmatpush1.msra.mxu0 0.0
        %716 = vmatprep.subr.mxu0 0.0
        %717 = vmatpush1.msra.mxu0 0.0
        %718 = vmatprep.subr.mxu0 0.0
        %719 = vmatpush1.msra.mxu0 0.0
        %720 = vmatprep.subr.mxu0 0.0
        %721 = vmatpush1.msra.mxu0 0.0
        %722 = vmatprep.subr.mxu0 0.0
        %723 = vmatpush1.msra.mxu0 0.0
        %724 = vmatprep.subr.mxu0 0.0
        %725 = vmatpush1.msra.mxu0 0.0
        %726 = vmatprep.subr.mxu0 0.0
        %727 = vmatpush1.msra.mxu0 0.0
        %728 = vmatprep.subr.mxu0 0.0
        %729 = vmatpush1.msra.mxu0 0.0
        %730 = vmatprep.subr.mxu0 0.0
        %731 = vmatpush1.msra.mxu0 0.0
        %732 = vmatprep.subr.mxu0 0.0
        %733 = vmatpush1.msra.mxu0 0.0
        %734 = vmatprep.subr.mxu0 0.0
        %735 = vmatpush1.msra.mxu0 0.0
        %736 = vmatprep.subr.mxu0 0.0
        %737 = vmatpush1.msra.mxu0 0.0
        %738 = vmatprep.subr.mxu0 0.0
        %739 = vmatpush1.msra.mxu0 0.0
        %740 = vmatprep.subr.mxu0 0.0
        %741 = vmatpush1.msra.mxu0 0.0
        %742 = vmatprep.subr.mxu0 0.0
        %743 = vmatpush1.msra.mxu0 0.0
        %744 = vmatprep.mubr.f32.mxu0 0.0
        %v745 = vand.u32 %v439, 4294901760
        %v746 = vsub.f32 %v439, %v745
        %v747 = vand.u32 %v746, 4294901760
        %748 = vmatmul.mubr.f32.gmra.mrb[0].mxu0 %v747
        %v749 = vpop.f32.mrb[0].mxu0
        %v750 = vadd.f32 %v674, %v749
        %v751 = vpop.f32.mrb[0].mxu0
        %v752 = vadd.f32 %v676, %v751
        %753 = vdwg.mxu0
        %v754 = vand.u32 %v412, 4294901760
        %v755 = vsub.f32 %v412, %v754
        %v756 = vand.u32 %v755, 4294901760
        %757 = vmatprep.subr.mxu0 %v756
        %v758 = vand.u32 %v411, 4294901760
        %v759 = vsub.f32 %v411, %v758
        %v760 = vand.u32 %v759, 4294901760
        %761 = vmatpush1.msra.mxu0 %v760
        %762 = vmatprep.subr.mxu0 0.0
        %763 = vmatpush1.msra.mxu0 0.0
        %764 = vmatprep.subr.mxu0 0.0
        %765 = vmatpush1.msra.mxu0 0.0
        %766 = vmatprep.subr.mxu0 0.0
        %767 = vmatpush1.msra.mxu0 0.0
        %768 = vmatprep.subr.mxu0 0.0
        %769 = vmatpush1.msra.mxu0 0.0
        %770 = vmatprep.subr.mxu0 0.0
        %771 = vmatpush1.msra.mxu0 0.0
        %772 = vmatprep.subr.mxu0 0.0
        %773 = vmatpush1.msra.mxu0 0.0
        %774 = vmatprep.subr.mxu0 0.0
        %775 = vmatpush1.msra.mxu0 0.0
        %776 = vmatprep.subr.mxu0 0.0
        %777 = vmatpush1.msra.mxu0 0.0
        %778 = vmatprep.subr.mxu0 0.0
        %779 = vmatpush1.msra.mxu0 0.0
        %780 = vmatprep.subr.mxu0 0.0
        %781 = vmatpush1.msra.mxu0 0.0
        %782 = vmatprep.subr.mxu0 0.0
        %783 = vmatpush1.msra.mxu0 0.0
        %784 = vmatprep.subr.mxu0 0.0
        %785 = vmatpush1.msra.mxu0 0.0
        %786 = vmatprep.subr.mxu0 0.0
        %787 = vmatpush1.msra.mxu0 0.0
        %788 = vmatprep.subr.mxu0 0.0
        %789 = vmatpush1.msra.mxu0 0.0
        %790 = vmatprep.subr.mxu0 0.0
        %791 = vmatpush1.msra.mxu0 0.0
        %792 = vmatprep.subr.mxu0 0.0
        %793 = vmatpush1.msra.mxu0 0.0
        %794 = vmatprep.subr.mxu0 0.0
        %795 = vmatpush1.msra.mxu0 0.0
        %796 = vmatprep.subr.mxu0 0.0
        %797 = vmatpush1.msra.mxu0 0.0
        %798 = vmatprep.subr.mxu0 0.0
        %799 = vmatpush1.msra.mxu0 0.0
        %800 = vmatprep.subr.mxu0 0.0
        %801 = vmatpush1.msra.mxu0 0.0
        %802 = vmatprep.subr.mxu0 0.0
        %803 = vmatpush1.msra.mxu0 0.0
        %804 = vmatprep.subr.mxu0 0.0
        %805 = vmatpush1.msra.mxu0 0.0
        %806 = vmatprep.subr.mxu0 0.0
        %807 = vmatpush1.msra.mxu0 0.0
        %808 = vmatprep.subr.mxu0 0.0
        %809 = vmatpush1.msra.mxu0 0.0
        %810 = vmatprep.subr.mxu0 0.0
        %811 = vmatpush1.msra.mxu0 0.0
        %812 = vmatprep.subr.mxu0 0.0
        %813 = vmatpush1.msra.mxu0 0.0
        %814 = vmatprep.subr.mxu0 0.0
        %815 = vmatpush1.msra.mxu0 0.0
        %816 = vmatprep.subr.mxu0 0.0
        %817 = vmatpush1.msra.mxu0 0.0
        %818 = vmatprep.subr.mxu0 0.0
        %819 = vmatpush1.msra.mxu0 0.0
        %820 = vmatprep.subr.mxu0 0.0
        %821 = vmatpush1.msra.mxu0 0.0
        %822 = vmatprep.subr.mxu0 0.0
        %823 = vmatpush1.msra.mxu0 0.0
        %824 = vmatprep.mubr.f32.mxu0 0.0
        %v825 = vand.u32 %v439, 4294901760
        %826 = vmatmul.mubr.f32.gmra.mrb[0].mxu0 %v825
        %v827 = vpop.f32.mrb[0].mxu0
        %v828 = vadd.f32 %v750, %v827
        %v829 = vpop.f32.mrb[0].mxu0
        %v830 = vadd.f32 %v752, %v829
        %831 = vdwg.mxu0
        %v832 = vand.u32 %v412, 4294901760
        %833 = vmatprep.subr.mxu0 %v832
        %v834 = vand.u32 %v411, 4294901760
        %835 = vmatpush1.msra.mxu0 %v834
        %836 = vmatprep.subr.mxu0 0.0
        %837 = vmatpush1.msra.mxu0 0.0
        %838 = vmatprep.subr.mxu0 0.0
        %839 = vmatpush1.msra.mxu0 0.0
        %840 = vmatprep.subr.mxu0 0.0
        %841 = vmatpush1.msra.mxu0 0.0
        %842 = vmatprep.subr.mxu0 0.0
        %843 = vmatpush1.msra.mxu0 0.0
        %844 = vmatprep.subr.mxu0 0.0
        %845 = vmatpush1.msra.mxu0 0.0
        %846 = vmatprep.subr.mxu0 0.0
        %847 = vmatpush1.msra.mxu0 0.0
        %848 = vmatprep.subr.mxu0 0.0
        %849 = vmatpush1.msra.mxu0 0.0
        %850 = vmatprep.subr.mxu0 0.0
        %851 = vmatpush1.msra.mxu0 0.0
        %852 = vmatprep.subr.mxu0 0.0
        %853 = vmatpush1.msra.mxu0 0.0
        %854 = vmatprep.subr.mxu0 0.0
        %855 = vmatpush1.msra.mxu0 0.0
        %856 = vmatprep.subr.mxu0 0.0
        %857 = vmatpush1.msra.mxu0 0.0
        %858 = vmatprep.subr.mxu0 0.0
        %859 = vmatpush1.msra.mxu0 0.0
        %860 = vmatprep.subr.mxu0 0.0
        %861 = vmatpush1.msra.mxu0 0.0
        %862 = vmatprep.subr.mxu0 0.0
        %863 = vmatpush1.msra.mxu0 0.0
        %864 = vmatprep.subr.mxu0 0.0
        %865 = vmatpush1.msra.mxu0 0.0
        %866 = vmatprep.subr.mxu0 0.0
        %867 = vmatpush1.msra.mxu0 0.0
        %868 = vmatprep.subr.mxu0 0.0
        %869 = vmatpush1.msra.mxu0 0.0
        %870 = vmatprep.subr.mxu0 0.0
        %871 = vmatpush1.msra.mxu0 0.0
        %872 = vmatprep.subr.mxu0 0.0
        %873 = vmatpush1.msra.mxu0 0.0
        %874 = vmatprep.subr.mxu0 0.0
        %875 = vmatpush1.msra.mxu0 0.0
        %876 = vmatprep.subr.mxu0 0.0
        %877 = vmatpush1.msra.mxu0 0.0
        %878 = vmatprep.subr.mxu0 0.0
        %879 = vmatpush1.msra.mxu0 0.0
        %880 = vmatprep.subr.mxu0 0.0
        %881 = vmatpush1.msra.mxu0 0.0
        %882 = vmatprep.subr.mxu0 0.0
        %883 = vmatpush1.msra.mxu0 0.0
        %884 = vmatprep.subr.mxu0 0.0
        %885 = vmatpush1.msra.mxu0 0.0
        %886 = vmatprep.subr.mxu0 0.0
        %887 = vmatpush1.msra.mxu0 0.0
        %888 = vmatprep.subr.mxu0 0.0
        %889 = vmatpush1.msra.mxu0 0.0
        %890 = vmatprep.subr.mxu0 0.0
        %891 = vmatpush1.msra.mxu0 0.0
        %892 = vmatprep.subr.mxu0 0.0
        %893 = vmatpush1.msra.mxu0 0.0
        %894 = vmatprep.subr.mxu0 0.0
        %895 = vmatpush1.msra.mxu0 0.0
        %896 = vmatprep.subr.mxu0 0.0
        %897 = vmatpush1.msra.mxu0 0.0
        %898 = vmatprep.mubr.f32.mxu0 0.0
        %v899 = vand.u32 %v439, 4294901760
        %900 = vmatmul.mubr.f32.gmra.mrb[0].mxu0 %v899
        %v901 = vpop.f32.mrb[0].mxu0
        %v902 = vadd.f32 %v828, %v901
        %v903 = vpop.f32.mrb[0].mxu0
        %v904 = vadd.f32 %v830, %v903
        %905 = vdwg.mxu0
        %v906 = vand.u32 %v414, 4294901760
        %907 = vmatprep.subr.mxu0 %v906
        %v908 = vand.u32 %v413, 4294901760
        %909 = vmatpush1.msra.mxu0 %v908
        %910 = vmatprep.subr.mxu0 0.0
        %911 = vmatpush1.msra.mxu0 0.0
        %912 = vmatprep.subr.mxu0 0.0
        %913 = vmatpush1.msra.mxu0 0.0
        %914 = vmatprep.subr.mxu0 0.0
        %915 = vmatpush1.msra.mxu0 0.0
        %916 = vmatprep.subr.mxu0 0.0
        %917 = vmatpush1.msra.mxu0 0.0
        %918 = vmatprep.subr.mxu0 0.0
        %919 = vmatpush1.msra.mxu0 0.0
        %920 = vmatprep.subr.mxu0 0.0
        %921 = vmatpush1.msra.mxu0 0.0
        %922 = vmatprep.subr.mxu0 0.0
        %923 = vmatpush1.msra.mxu0 0.0
        %924 = vmatprep.subr.mxu0 0.0
        %925 = vmatpush1.msra.mxu0 0.0
        %926 = vmatprep.subr.mxu0 0.0
        %927 = vmatpush1.msra.mxu0 0.0
        %928 = vmatprep.subr.mxu0 0.0
        %929 = vmatpush1.msra.mxu0 0.0
        %930 = vmatprep.subr.mxu0 0.0
        %931 = vmatpush1.msra.mxu0 0.0
        %932 = vmatprep.subr.mxu0 0.0
        %933 = vmatpush1.msra.mxu0 0.0
        %934 = vmatprep.subr.mxu0 0.0
        %935 = vmatpush1.msra.mxu0 0.0
        %936 = vmatprep.subr.mxu0 0.0
        %937 = vmatpush1.msra.mxu0 0.0
        %938 = vmatprep.subr.mxu0 0.0
        %939 = vmatpush1.msra.mxu0 0.0
        %940 = vmatprep.subr.mxu0 0.0
        %941 = vmatpush1.msra.mxu0 0.0
        %942 = vmatprep.subr.mxu0 0.0
        %943 = vmatpush1.msra.mxu0 0.0
        %944 = vmatprep.subr.mxu0 0.0
        %945 = vmatpush1.msra.mxu0 0.0
        %946 = vmatprep.subr.mxu0 0.0
        %947 = vmatpush1.msra.mxu0 0.0
        %948 = vmatprep.subr.mxu0 0.0
        %949 = vmatpush1.msra.mxu0 0.0
        %950 = vmatprep.subr.mxu0 0.0
        %951 = vmatpush1.msra.mxu0 0.0
        %952 = vmatprep.subr.mxu0 0.0
        %953 = vmatpush1.msra.mxu0 0.0
        %954 = vmatprep.subr.mxu0 0.0
        %955 = vmatpush1.msra.mxu0 0.0
        %956 = vmatprep.subr.mxu0 0.0
        %957 = vmatpush1.msra.mxu0 0.0
        %958 = vmatprep.subr.mxu0 0.0
        %959 = vmatpush1.msra.mxu0 0.0
        %960 = vmatprep.subr.mxu0 0.0
        %961 = vmatpush1.msra.mxu0 0.0
        %962 = vmatprep.subr.mxu0 0.0
        %963 = vmatpush1.msra.mxu0 0.0
        %964 = vmatprep.subr.mxu0 0.0
        %965 = vmatpush1.msra.mxu0 0.0
        %966 = vmatprep.subr.mxu0 0.0
        %967 = vmatpush1.msra.mxu0 0.0
        %968 = vmatprep.subr.mxu0 0.0
        %969 = vmatpush1.msra.mxu0 0.0
        %970 = vmatprep.subr.mxu0 0.0
        %971 = vmatpush1.msra.mxu0 0.0
        %972 = vmatprep.mubr.f32.mxu0 0.0
        %v973 = vand.u32 %v439, 4294901760
        %v974 = vsub.f32 %v439, %v973
        %v975 = vand.u32 %v974, 4294901760
        %v976 = vsub.f32 %v974, %v975
        %v977 = vand.u32 %v976, 4294901760
        %978 = vmatmul.mubr.f32.gmra.mrb[0].mxu0 %v977
        %v979 = vpop.f32.mrb[0].mxu0
        %v980 = vadd.f32 %v428, %v979
        %v981 = vpop.f32.mrb[0].mxu0
        %v982 = vadd.f32 %v432, %v981
        %983 = vdwg.mxu0
        %v984 = vand.u32 %v414, 4294901760
        %v985 = vsub.f32 %v414, %v984
        %v986 = vand.u32 %v985, 4294901760
        %v987 = vsub.f32 %v985, %v986
        %v988 = vand.u32 %v987, 4294901760
        %989 = vmatprep.subr.mxu0 %v988
        %v990 = vand.u32 %v413, 4294901760
        %v991 = vsub.f32 %v413, %v990
        %v992 = vand.u32 %v991, 4294901760
        %v993 = vsub.f32 %v991, %v992
        %v994 = vand.u32 %v993, 4294901760
        %995 = vmatpush1.msra.mxu0 %v994
        %996 = vmatprep.subr.mxu0 0.0
        %997 = vmatpush1.msra.mxu0 0.0
        %998 = vmatprep.subr.mxu0 0.0
        %999 = vmatpush1.msra.mxu0 0.0
        %1000 = vmatprep.subr.mxu0 0.0
        %1001 = vmatpush1.msra.mxu0 0.0
        %1002 = vmatprep.subr.mxu0 0.0
        %1003 = vmatpush1.msra.mxu0 0.0
        %1004 = vmatprep.subr.mxu0 0.0
        %1005 = vmatpush1.msra.mxu0 0.0
        %1006 = vmatprep.subr.mxu0 0.0
        %1007 = vmatpush1.msra.mxu0 0.0
        %1008 = vmatprep.subr.mxu0 0.0
        %1009 = vmatpush1.msra.mxu0 0.0
        %1010 = vmatprep.subr.mxu0 0.0
        %1011 = vmatpush1.msra.mxu0 0.0
        %1012 = vmatprep.subr.mxu0 0.0
        %1013 = vmatpush1.msra.mxu0 0.0
        %1014 = vmatprep.subr.mxu0 0.0
        %1015 = vmatpush1.msra.mxu0 0.0
        %1016 = vmatprep.subr.mxu0 0.0
        %1017 = vmatpush1.msra.mxu0 0.0
        %1018 = vmatprep.subr.mxu0 0.0
        %1019 = vmatpush1.msra.mxu0 0.0
        %1020 = vmatprep.subr.mxu0 0.0
        %1021 = vmatpush1.msra.mxu0 0.0
        %1022 = vmatprep.subr.mxu0 0.0
        %1023 = vmatpush1.msra.mxu0 0.0
        %1024 = vmatprep.subr.mxu0 0.0
        %1025 = vmatpush1.msra.mxu0 0.0
        %1026 = vmatprep.subr.mxu0 0.0
        %1027 = vmatpush1.msra.mxu0 0.0
        %1028 = vmatprep.subr.mxu0 0.0
        %1029 = vmatpush1.msra.mxu0 0.0
        %1030 = vmatprep.subr.mxu0 0.0
        %1031 = vmatpush1.msra.mxu0 0.0
        %1032 = vmatprep.subr.mxu0 0.0
        %1033 = vmatpush1.msra.mxu0 0.0
        %1034 = vmatprep.subr.mxu0 0.0
        %1035 = vmatpush1.msra.mxu0 0.0
        %1036 = vmatprep.subr.mxu0 0.0
        %1037 = vmatpush1.msra.mxu0 0.0
        %1038 = vmatprep.subr.mxu0 0.0
        %1039 = vmatpush1.msra.mxu0 0.0
        %1040 = vmatprep.subr.mxu0 0.0
        %1041 = vmatpush1.msra.mxu0 0.0
        %1042 = vmatprep.subr.mxu0 0.0
        %1043 = vmatpush1.msra.mxu0 0.0
        %1044 = vmatprep.subr.mxu0 0.0
        %1045 = vmatpush1.msra.mxu0 0.0
        %1046 = vmatprep.subr.mxu0 0.0
        %1047 = vmatpush1.msra.mxu0 0.0
        %1048 = vmatprep.subr.mxu0 0.0
        %1049 = vmatpush1.msra.mxu0 0.0
        %1050 = vmatprep.subr.mxu0 0.0
        %1051 = vmatpush1.msra.mxu0 0.0
        %1052 = vmatprep.subr.mxu0 0.0
        %1053 = vmatpush1.msra.mxu0 0.0
        %1054 = vmatprep.subr.mxu0 0.0
        %1055 = vmatpush1.msra.mxu0 0.0
        %1056 = vmatprep.subr.mxu0 0.0
        %1057 = vmatpush1.msra.mxu0 0.0
        %1058 = vmatprep.mubr.f32.mxu0 0.0
        %v1059 = vand.u32 %v439, 4294901760
        %1060 = vmatmul.mubr.f32.gmra.mrb[0].mxu0 %v1059
        %v1061 = vpop.f32.mrb[0].mxu0
        %v1062 = vadd.f32 %v980, %v1061
        %v1063 = vpop.f32.mrb[0].mxu0
        %v1064 = vadd.f32 %v982, %v1063
        %1065 = vdwg.mxu0
        %v1066 = vand.u32 %v414, 4294901760
        %v1067 = vsub.f32 %v414, %v1066
        %1068 = vmatprep.subr.mxu0 %v1067
        %v1069 = vand.u32 %v413, 4294901760
        %v1070 = vsub.f32 %v413, %v1069
        %1071 = vmatpush1.msra.mxu0 %v1070
        %1072 = vmatprep.subr.mxu0 0.0
        %1073 = vmatpush1.msra.mxu0 0.0
        %1074 = vmatprep.subr.mxu0 0.0
        %1075 = vmatpush1.msra.mxu0 0.0
        %1076 = vmatprep.subr.mxu0 0.0
        %1077 = vmatpush1.msra.mxu0 0.0
        %1078 = vmatprep.subr.mxu0 0.0
        %1079 = vmatpush1.msra.mxu0 0.0
        %1080 = vmatprep.subr.mxu0 0.0
        %1081 = vmatpush1.msra.mxu0 0.0
        %1082 = vmatprep.subr.mxu0 0.0
        %1083 = vmatpush1.msra.mxu0 0.0
        %1084 = vmatprep.subr.mxu0 0.0
        %1085 = vmatpush1.msra.mxu0 0.0
        %1086 = vmatprep.subr.mxu0 0.0
        %1087 = vmatpush1.msra.mxu0 0.0
        %1088 = vmatprep.subr.mxu0 0.0
        %1089 = vmatpush1.msra.mxu0 0.0
        %1090 = vmatprep.subr.mxu0 0.0
        %1091 = vmatpush1.msra.mxu0 0.0
        %1092 = vmatprep.subr.mxu0 0.0
        %1093 = vmatpush1.msra.mxu0 0.0
        %1094 = vmatprep.subr.mxu0 0.0
        %1095 = vmatpush1.msra.mxu0 0.0
        %1096 = vmatprep.subr.mxu0 0.0
        %1097 = vmatpush1.msra.mxu0 0.0
        %1098 = vmatprep.subr.mxu0 0.0
        %1099 = vmatpush1.msra.mxu0 0.0
        %1100 = vmatprep.subr.mxu0 0.0
        %1101 = vmatpush1.msra.mxu0 0.0
        %1102 = vmatprep.subr.mxu0 0.0
        %1103 = vmatpush1.msra.mxu0 0.0
        %1104 = vmatprep.subr.mxu0 0.0
        %1105 = vmatpush1.msra.mxu0 0.0
        %1106 = vmatprep.subr.mxu0 0.0
        %1107 = vmatpush1.msra.mxu0 0.0
        %1108 = vmatprep.subr.mxu0 0.0
        %1109 = vmatpush1.msra.mxu0 0.0
        %1110 = vmatprep.subr.mxu0 0.0
        %1111 = vmatpush1.msra.mxu0 0.0
        %1112 = vmatprep.subr.mxu0 0.0
        %1113 = vmatpush1.msra.mxu0 0.0
        %1114 = vmatprep.subr.mxu0 0.0
        %1115 = vmatpush1.msra.mxu0 0.0
        %1116 = vmatprep.subr.mxu0 0.0
        %1117 = vmatpush1.msra.mxu0 0.0
        %1118 = vmatprep.subr.mxu0 0.0
        %1119 = vmatpush1.msra.mxu0 0.0
        %1120 = vmatprep.subr.mxu0 0.0
        %1121 = vmatpush1.msra.mxu0 0.0
        %1122 = vmatprep.subr.mxu0 0.0
        %1123 = vmatpush1.msra.mxu0 0.0
        %1124 = vmatprep.subr.mxu0 0.0
        %1125 = vmatpush1.msra.mxu0 0.0
        %1126 = vmatprep.subr.mxu0 0.0
        %1127 = vmatpush1.msra.mxu0 0.0
        %1128 = vmatprep.subr.mxu0 0.0
        %1129 = vmatpush1.msra.mxu0 0.0
        %1130 = vmatprep.subr.mxu0 0.0
        %1131 = vmatpush1.msra.mxu0 0.0
        %1132 = vmatprep.subr.mxu0 0.0
        %1133 = vmatpush1.msra.mxu0 0.0
        %1134 = vmatprep.mubr.f32.mxu0 0.0
        %v1135 = vand.u32 %v439, 4294901760
        %v1136 = vsub.f32 %v439, %v1135
        %1137 = vmatmul.mubr.f32.gmra.mrb[0].mxu0 %v1136
        %v1138 = vpop.f32.mrb[0].mxu0
        %v1139 = vadd.f32 %v1062, %v1138
        %v1140 = vpop.f32.mrb[0].mxu0
        %v1141 = vadd.f32 %v1064, %v1140
        %1142 = vdwg.mxu0
        %v1143 = vand.u32 %v414, 4294901760
        %1144 = vmatprep.subr.mxu0 %v1143
        %v1145 = vand.u32 %v413, 4294901760
        %1146 = vmatpush1.msra.mxu0 %v1145
        %1147 = vmatprep.subr.mxu0 0.0
        %1148 = vmatpush1.msra.mxu0 0.0
        %1149 = vmatprep.subr.mxu0 0.0
        %1150 = vmatpush1.msra.mxu0 0.0
        %1151 = vmatprep.subr.mxu0 0.0
        %1152 = vmatpush1.msra.mxu0 0.0
        %1153 = vmatprep.subr.mxu0 0.0
        %1154 = vmatpush1.msra.mxu0 0.0
        %1155 = vmatprep.subr.mxu0 0.0
        %1156 = vmatpush1.msra.mxu0 0.0
        %1157 = vmatprep.subr.mxu0 0.0
        %1158 = vmatpush1.msra.mxu0 0.0
        %1159 = vmatprep.subr.mxu0 0.0
        %1160 = vmatpush1.msra.mxu0 0.0
        %1161 = vmatprep.subr.mxu0 0.0
        %1162 = vmatpush1.msra.mxu0 0.0
        %1163 = vmatprep.subr.mxu0 0.0
        %1164 = vmatpush1.msra.mxu0 0.0
        %1165 = vmatprep.subr.mxu0 0.0
        %1166 = vmatpush1.msra.mxu0 0.0
        %1167 = vmatprep.subr.mxu0 0.0
        %1168 = vmatpush1.msra.mxu0 0.0
        %1169 = vmatprep.subr.mxu0 0.0
        %1170 = vmatpush1.msra.mxu0 0.0
        %1171 = vmatprep.subr.mxu0 0.0
        %1172 = vmatpush1.msra.mxu0 0.0
        %1173 = vmatprep.subr.mxu0 0.0
        %1174 = vmatpush1.msra.mxu0 0.0
        %1175 = vmatprep.subr.mxu0 0.0
        %1176 = vmatpush1.msra.mxu0 0.0
        %1177 = vmatprep.subr.mxu0 0.0
        %1178 = vmatpush1.msra.mxu0 0.0
        %1179 = vmatprep.subr.mxu0 0.0
        %1180 = vmatpush1.msra.mxu0 0.0
        %1181 = vmatprep.subr.mxu0 0.0
        %1182 = vmatpush1.msra.mxu0 0.0
        %1183 = vmatprep.subr.mxu0 0.0
        %1184 = vmatpush1.msra.mxu0 0.0
        %1185 = vmatprep.subr.mxu0 0.0
        %1186 = vmatpush1.msra.mxu0 0.0
        %1187 = vmatprep.subr.mxu0 0.0
        %1188 = vmatpush1.msra.mxu0 0.0
        %1189 = vmatprep.subr.mxu0 0.0
        %1190 = vmatpush1.msra.mxu0 0.0
        %1191 = vmatprep.subr.mxu0 0.0
        %1192 = vmatpush1.msra.mxu0 0.0
        %1193 = vmatprep.subr.mxu0 0.0
        %1194 = vmatpush1.msra.mxu0 0.0
        %1195 = vmatprep.subr.mxu0 0.0
        %1196 = vmatpush1.msra.mxu0 0.0
        %1197 = vmatprep.subr.mxu0 0.0
        %1198 = vmatpush1.msra.mxu0 0.0
        %1199 = vmatprep.subr.mxu0 0.0
        %1200 = vmatpush1.msra.mxu0 0.0
        %1201 = vmatprep.subr.mxu0 0.0
        %1202 = vmatpush1.msra.mxu0 0.0
        %1203 = vmatprep.subr.mxu0 0.0
        %1204 = vmatpush1.msra.mxu0 0.0
        %1205 = vmatprep.subr.mxu0 0.0
        %1206 = vmatpush1.msra.mxu0 0.0
        %1207 = vmatprep.subr.mxu0 0.0
        %1208 = vmatpush1.msra.mxu0 0.0
        %1209 = vmatprep.mubr.f32.mxu0 0.0
        %v1210 = vand.u32 %v439, 4294901760
        %v1211 = vsub.f32 %v439, %v1210
        %v1212 = vand.u32 %v1211, 4294901760
        %1213 = vmatmul.mubr.f32.gmra.mrb[0].mxu0 %v1212
        %v1214 = vpop.f32.mrb[0].mxu0
        %v1215 = vadd.f32 %v1139, %v1214
        %v1216 = vpop.f32.mrb[0].mxu0
        %v1217 = vadd.f32 %v1141, %v1216
        %1218 = vdwg.mxu0
        %v1219 = vand.u32 %v414, 4294901760
        %v1220 = vsub.f32 %v414, %v1219
        %v1221 = vand.u32 %v1220, 4294901760
        %1222 = vmatprep.subr.mxu0 %v1221
        %v1223 = vand.u32 %v413, 4294901760
        %v1224 = vsub.f32 %v413, %v1223
        %v1225 = vand.u32 %v1224, 4294901760
        %1226 = vmatpush1.msra.mxu0 %v1225
        %1227 = vmatprep.subr.mxu0 0.0
        %1228 = vmatpush1.msra.mxu0 0.0
        %1229 = vmatprep.subr.mxu0 0.0
        %1230 = vmatpush1.msra.mxu0 0.0
        %1231 = vmatprep.subr.mxu0 0.0
        %1232 = vmatpush1.msra.mxu0 0.0
        %1233 = vmatprep.subr.mxu0 0.0
        %1234 = vmatpush1.msra.mxu0 0.0
        %1235 = vmatprep.subr.mxu0 0.0
        %1236 = vmatpush1.msra.mxu0 0.0
        %1237 = vmatprep.subr.mxu0 0.0
        %1238 = vmatpush1.msra.mxu0 0.0
        %1239 = vmatprep.subr.mxu0 0.0
        %1240 = vmatpush1.msra.mxu0 0.0
        %1241 = vmatprep.subr.mxu0 0.0
        %1242 = vmatpush1.msra.mxu0 0.0
        %1243 = vmatprep.subr.mxu0 0.0
        %1244 = vmatpush1.msra.mxu0 0.0
        %1245 = vmatprep.subr.mxu0 0.0
        %1246 = vmatpush1.msra.mxu0 0.0
        %1247 = vmatprep.subr.mxu0 0.0
        %1248 = vmatpush1.msra.mxu0 0.0
        %1249 = vmatprep.subr.mxu0 0.0
        %1250 = vmatpush1.msra.mxu0 0.0
        %1251 = vmatprep.subr.mxu0 0.0
        %1252 = vmatpush1.msra.mxu0 0.0
        %1253 = vmatprep.subr.mxu0 0.0
        %1254 = vmatpush1.msra.mxu0 0.0
        %1255 = vmatprep.subr.mxu0 0.0
        %1256 = vmatpush1.msra.mxu0 0.0
        %1257 = vmatprep.subr.mxu0 0.0
        %1258 = vmatpush1.msra.mxu0 0.0
        %1259 = vmatprep.subr.mxu0 0.0
        %1260 = vmatpush1.msra.mxu0 0.0
        %1261 = vmatprep.subr.mxu0 0.0
        %1262 = vmatpush1.msra.mxu0 0.0
        %1263 = vmatprep.subr.mxu0 0.0
        %1264 = vmatpush1.msra.mxu0 0.0
        %1265 = vmatprep.subr.mxu0 0.0
        %1266 = vmatpush1.msra.mxu0 0.0
        %1267 = vmatprep.subr.mxu0 0.0
        %1268 = vmatpush1.msra.mxu0 0.0
        %1269 = vmatprep.subr.mxu0 0.0
        %1270 = vmatpush1.msra.mxu0 0.0
        %1271 = vmatprep.subr.mxu0 0.0
        %1272 = vmatpush1.msra.mxu0 0.0
        %1273 = vmatprep.subr.mxu0 0.0
        %1274 = vmatpush1.msra.mxu0 0.0
        %1275 = vmatprep.subr.mxu0 0.0
        %1276 = vmatpush1.msra.mxu0 0.0
        %1277 = vmatprep.subr.mxu0 0.0
        %1278 = vmatpush1.msra.mxu0 0.0
        %1279 = vmatprep.subr.mxu0 0.0
        %1280 = vmatpush1.msra.mxu0 0.0
        %1281 = vmatprep.subr.mxu0 0.0
        %1282 = vmatpush1.msra.mxu0 0.0
        %1283 = vmatprep.subr.mxu0 0.0
        %1284 = vmatpush1.msra.mxu0 0.0
        %1285 = vmatprep.subr.mxu0 0.0
        %1286 = vmatpush1.msra.mxu0 0.0
        %1287 = vmatprep.subr.mxu0 0.0
        %1288 = vmatpush1.msra.mxu0 0.0
        %1289 = vmatprep.mubr.f32.mxu0 0.0
        %v1290 = vand.u32 %v439, 4294901760
        %1291 = vmatmul.mubr.f32.gmra.mrb[0].mxu0 %v1290
        %v1292 = vpop.f32.mrb[0].mxu0
        %v1293 = vadd.f32 %v1215, %v1292
        %v1294 = vpop.f32.mrb[0].mxu0
        %v1295 = vadd.f32 %v1217, %v1294
        %1296 = vdwg.mxu0
        %v1297 = vand.u32 %v414, 4294901760
        %1298 = vmatprep.subr.mxu0 %v1297
        %v1299 = vand.u32 %v413, 4294901760
        %1300 = vmatpush1.msra.mxu0 %v1299
        %1301 = vmatprep.subr.mxu0 0.0
        %1302 = vmatpush1.msra.mxu0 0.0
        %1303 = vmatprep.subr.mxu0 0.0
        %1304 = vmatpush1.msra.mxu0 0.0
        %1305 = vmatprep.subr.mxu0 0.0
        %1306 = vmatpush1.msra.mxu0 0.0
        %1307 = vmatprep.subr.mxu0 0.0
        %1308 = vmatpush1.msra.mxu0 0.0
        %1309 = vmatprep.subr.mxu0 0.0
        %1310 = vmatpush1.msra.mxu0 0.0
        %1311 = vmatprep.subr.mxu0 0.0
        %1312 = vmatpush1.msra.mxu0 0.0
        %1313 = vmatprep.subr.mxu0 0.0
        %1314 = vmatpush1.msra.mxu0 0.0
        %1315 = vmatprep.subr.mxu0 0.0
        %1316 = vmatpush1.msra.mxu0 0.0
        %1317 = vmatprep.subr.mxu0 0.0
        %1318 = vmatpush1.msra.mxu0 0.0
        %1319 = vmatprep.subr.mxu0 0.0
        %1320 = vmatpush1.msra.mxu0 0.0
        %1321 = vmatprep.subr.mxu0 0.0
        %1322 = vmatpush1.msra.mxu0 0.0
        %1323 = vmatprep.subr.mxu0 0.0
        %1324 = vmatpush1.msra.mxu0 0.0
        %1325 = vmatprep.subr.mxu0 0.0
        %1326 = vmatpush1.msra.mxu0 0.0
        %1327 = vmatprep.subr.mxu0 0.0
        %1328 = vmatpush1.msra.mxu0 0.0
        %1329 = vmatprep.subr.mxu0 0.0
        %1330 = vmatpush1.msra.mxu0 0.0
        %1331 = vmatprep.subr.mxu0 0.0
        %1332 = vmatpush1.msra.mxu0 0.0
        %1333 = vmatprep.subr.mxu0 0.0
        %1334 = vmatpush1.msra.mxu0 0.0
        %1335 = vmatprep.subr.mxu0 0.0
        %1336 = vmatpush1.msra.mxu0 0.0
        %1337 = vmatprep.subr.mxu0 0.0
        %1338 = vmatpush1.msra.mxu0 0.0
        %1339 = vmatprep.subr.mxu0 0.0
        %1340 = vmatpush1.msra.mxu0 0.0
        %1341 = vmatprep.subr.mxu0 0.0
        %1342 = vmatpush1.msra.mxu0 0.0
        %1343 = vmatprep.subr.mxu0 0.0
        %1344 = vmatpush1.msra.mxu0 0.0
        %1345 = vmatprep.subr.mxu0 0.0
        %1346 = vmatpush1.msra.mxu0 0.0
        %1347 = vmatprep.subr.mxu0 0.0
        %1348 = vmatpush1.msra.mxu0 0.0
        %1349 = vmatprep.subr.mxu0 0.0
        %1350 = vmatpush1.msra.mxu0 0.0
        %1351 = vmatprep.subr.mxu0 0.0
        %1352 = vmatpush1.msra.mxu0 0.0
        %1353 = vmatprep.subr.mxu0 0.0
        %1354 = vmatpush1.msra.mxu0 0.0
        %1355 = vmatprep.subr.mxu0 0.0
        %1356 = vmatpush1.msra.mxu0 0.0
        %1357 = vmatprep.subr.mxu0 0.0
        %1358 = vmatpush1.msra.mxu0 0.0
        %1359 = vmatprep.subr.mxu0 0.0
        %1360 = vmatpush1.msra.mxu0 0.0
        %1361 = vmatprep.subr.mxu0 0.0
        %1362 = vmatpush1.msra.mxu0 0.0
        %1363 = vmatprep.mubr.f32.mxu0 0.0
        %v1364 = vand.u32 %v439, 4294901760
        %1365 = vmatmul.mubr.f32.gmra.mrb[0].mxu0 %v1364
        %v1366 = vpop.f32.mrb[0].mxu0
        %v1367 = vadd.f32 %v1293, %v1366
        %v1368 = vpop.f32.mrb[0].mxu0
        %v1369 = vadd.f32 %v1295, %v1368
        %1370 = vdwg.mxu0
        %v1371 = vand.u32 2147483647, %v902
        %vm1372 = vcmp.le.f32.partialorder %v1371, 0.7853982
        %vm1373 = vcmp.lt.s32.totalorder %v902, 0
        %v1374 = vand.u32 %v902, 2139095040
        %v1375 = vshrl.u32 %v1374, 23
        %v1376 = vsub.s32 %v1375, 127
        %v1377 = vand.u32 2147483647, %v902
        %v1378 = vand.u32 %v1377, 8388607
        %v1379 = vor.u32 %v1378, 8388608
        %v1380 = vsub.s32 0, %v1379
        %v1381 = vadd.s32 %v1376, 1
        %vm1382 = vcmp.gt.s32.totalorder %v1381, 0
        %v1383 = vsel %vm1382, %v1381, 0
        %v1384 = vshrl.u32 %v1383, 5
        %v1385 = vand.u32 %v1383, 31
        %v1386 = vsub.s32 32, %v1385
        %v1387 = vshrl.u32 683565275, %v1386
        %v1388 = vshll.u32 683565275, %v1385
        %v1389 = vshrl.u32 2475754826, %v1386
        %v1390 = vor.u32 %v1388, %v1389
        %v1391 = vshll.u32 2475754826, %v1385
        %v1392 = vshrl.u32 2131351028, %v1386
        %v1393 = vor.u32 %v1391, %v1392
        %v1394 = vshll.u32 2131351028, %v1385
        %v1395 = vshrl.u32 2102212464, %v1386
        %v1396 = vor.u32 %v1394, %v1395
        %v1397 = vshll.u32 2102212464, %v1385
        %v1398 = vshrl.u32 920167782, %v1386
        %v1399 = vor.u32 %v1397, %v1398
        %v1400 = vshll.u32 920167782, %v1385
        %v1401 = vshrl.u32 1326507024, %v1386
        %v1402 = vor.u32 %v1400, %v1401
        %vm1403 = vcmp.lt.s32.totalorder %v1384, 1
        %vm1404 = vcmp.lt.s32.totalorder %v1384, 2
        %vm1405 = vcmp.lt.s32.totalorder %v1384, 3
        %vm1406 = vcmp.lt.s32.totalorder %v1384, 4
        %v1407 = vsel %vm1403, %v1387, %v1390
        %v1408 = vsel %vm1406, %v1396, 2102212464
        %v1409 = vsel %vm1405, %v1393, %v1408
        %v1410 = vsel %vm1404, %v1407, %v1409
        %v1411 = vsel %vm1403, %v1390, %v1393
        %v1412 = vsel %vm1406, %v1399, 920167782
        %v1413 = vsel %vm1405, %v1396, %v1412
        %v1414 = vsel %vm1404, %v1411, %v1413
        %v1415 = vsel %vm1403, %v1393, %v1396
        %v1416 = vsel %vm1406, %v1402, 1326507024
        %v1417 = vsel %vm1405, %v1399, %v1416
        %v1418 = vsel %vm1404, %v1415, %v1417
        %v1419 = vshll.u32 %v1379, 8
        %v1420 = vmul.u32.u64.compose %v1419, %v1418
        %v1421 = vextract.low.u32 %v1420
        %v1422 = vextract.high.u32 %v1420
        %v1423 = vmul.u32.u64.compose %v1419, %v1414
        %v1424 = vextract.low.u32 %v1423
        %v1425 = vextract.high.u32 %v1423
        %v1426 = vmul.u32 %v1419, %v1410
        %v1427 = vadd.s32 %v1422, %v1424
        %vm1428 = vc.u32 %v1422, %v1424
        %v1429 = vadd.s32 %v1425, 1
        %v1430 = vsel %vm1428, %v1429, %v1425
        %v1431 = vadd.s32 %v1426, %v1430
        %v1432 = vadd.s32 %v1431, 536870912
        %v1433 = vshrl.u32 %v1432, 30
        %v1434 = vshll.u32 %v1433, 30
        %v1435 = vsub.s32 %v1431, %v1434
        %vm1436 = vcmp.lt.s32.totalorder %v1435, 0
        %v1437 = vsub.s32 0, %v1435
        %v1438 = vsel %vm1436, %v1437, %v1435
        %v1439 = vclz %v1438
        %v1440 = vsub.s32 %v1439, 2
        %vm1441 = vcmp.gt.s32.totalorder 0, %v1440
        %v1442 = vsel %vm1441, 0, %v1440
        %v1443 = vsub.s32 32, %v1442
        %v1444 = vshll.u32 %v1435, %v1442
        %v1445 = vshrl.u32 %v1427, %v1443
        %v1446 = vor.u32 %v1444, %v1445
        %v1447 = vsub.s32 4294967266, %v1442
        %v1448 = vadd.s32 %v1447, 127
        %v1449 = vshll.u32 %v1448, 23
        %v1450 = vor.u32 4788187, %v1449
        %v1451 = vand.u32 2147483647, %v1450
        %v1453 = vcvt.s32.f32 %v1446
        %v1454 = vmul.f32 %v1453, %v1451
        %v1455 = vxor.u32 %v1454, 2147483648
        %v1456 = vsel %vm1373, %v1455, %v1454
        %v1457 = vsub.s32 4, %v1433
        %v1458 = vsel %vm1373, %v1457, %v1433
        %v1459 = vsel %vm1372, %v902, %v1456
        %v1460 = vsel %vm1372, 0, %v1458
        %v1461 = vcosq.f32.pop %v1459
        %v1462 = vsinq.f32.pop %v1459
        %vm1463 = vweird.f32 %v902
        %v1464 = vadd.s32 %v1460, 3
        %v1465 = vand.u32 %v1464, 3
        %vm1466 = vcmp.lt.s32.totalorder %v1465, 2
        %vm1467 = vcmp.eq.s32.totalorder %v1465, 0
        %v1468 = vxor.u32 %v1462, 2147483648
        %v1469 = vsel %vm1467, %v1461, %v1468
        %vm1470 = vcmp.eq.s32.totalorder %v1465, 2
        %v1471 = vxor.u32 %v1461, 2147483648
        %v1472 = vsel %vm1470, %v1471, %v1462
        %v1473 = vsel %vm1466, %v1469, %v1472
        %v1474 = vsel %vm1463, nan, %v1473
        %v1475 = vand.u32 2147483647, %v904
        %vm1476 = vcmp.le.f32.partialorder %v1475, 0.7853982
        %vm1477 = vcmp.lt.s32.totalorder %v904, 0
        %v1478 = vand.u32 %v904, 2139095040
        %v1479 = vshrl.u32 %v1478, 23
        %v1480 = vsub.s32 %v1479, 127
        %v1481 = vand.u32 2147483647, %v904
        %v1482 = vand.u32 %v1481, 8388607
        %v1483 = vor.u32 %v1482, 8388608
        %v1484 = vsub.s32 0, %v1483
        %v1485 = vadd.s32 %v1480, 1
        %vm1486 = vcmp.gt.s32.totalorder %v1485, 0
        %v1487 = vsel %vm1486, %v1485, 0
        %v1488 = vshrl.u32 %v1487, 5
        %v1489 = vand.u32 %v1487, 31
        %v1490 = vsub.s32 32, %v1489
        %v1491 = vshrl.u32 683565275, %v1490
        %v1492 = vshll.u32 683565275, %v1489
        %v1493 = vshrl.u32 2475754826, %v1490
        %v1494 = vor.u32 %v1492, %v1493
        %v1495 = vshll.u32 2475754826, %v1489
        %v1496 = vshrl.u32 2131351028, %v1490
        %v1497 = vor.u32 %v1495, %v1496
        %v1498 = vshll.u32 2131351028, %v1489
        %v1499 = vshrl.u32 2102212464, %v1490
        %v1500 = vor.u32 %v1498, %v1499
        %v1501 = vshll.u32 2102212464, %v1489
        %v1502 = vshrl.u32 920167782, %v1490
        %v1503 = vor.u32 %v1501, %v1502
        %v1504 = vshll.u32 920167782, %v1489
        %v1505 = vshrl.u32 1326507024, %v1490
        %v1506 = vor.u32 %v1504, %v1505
        %vm1507 = vcmp.lt.s32.totalorder %v1488, 1
        %vm1508 = vcmp.lt.s32.totalorder %v1488, 2
        %vm1509 = vcmp.lt.s32.totalorder %v1488, 3
        %vm1510 = vcmp.lt.s32.totalorder %v1488, 4
        %v1511 = vsel %vm1507, %v1491, %v1494
        %v1512 = vsel %vm1510, %v1500, 2102212464
        %v1513 = vsel %vm1509, %v1497, %v1512
        %v1514 = vsel %vm1508, %v1511, %v1513
        %v1515 = vsel %vm1507, %v1494, %v1497
        %v1516 = vsel %vm1510, %v1503, 920167782
        %v1517 = vsel %vm1509, %v1500, %v1516
        %v1518 = vsel %vm1508, %v1515, %v1517
        %v1519 = vsel %vm1507, %v1497, %v1500
        %v1520 = vsel %vm1510, %v1506, 1326507024
        %v1521 = vsel %vm1509, %v1503, %v1520
        %v1522 = vsel %vm1508, %v1519, %v1521
        %v1523 = vshll.u32 %v1483, 8
        %v1524 = vmul.u32.u64.compose %v1523, %v1522
        %v1525 = vextract.low.u32 %v1524
        %v1526 = vextract.high.u32 %v1524
        %v1527 = vmul.u32.u64.compose %v1523, %v1518
        %v1528 = vextract.low.u32 %v1527
        %v1529 = vextract.high.u32 %v1527
        %v1530 = vmul.u32 %v1523, %v1514
        %v1531 = vadd.s32 %v1526, %v1528
        %vm1532 = vc.u32 %v1526, %v1528
        %v1533 = vadd.s32 %v1529, 1
        %v1534 = vsel %vm1532, %v1533, %v1529
        %v1535 = vadd.s32 %v1530, %v1534
        %v1536 = vadd.s32 %v1535, 536870912
        %v1537 = vshrl.u32 %v1536, 30
        %v1538 = vshll.u32 %v1537, 30
        %v1539 = vsub.s32 %v1535, %v1538
        %vm1540 = vcmp.lt.s32.totalorder %v1539, 0
        %v1541 = vsub.s32 0, %v1539
        %v1542 = vsel %vm1540, %v1541, %v1539
        %v1543 = vclz %v1542
        %v1544 = vsub.s32 %v1543, 2
        %vm1545 = vcmp.gt.s32.totalorder 0, %v1544
        %v1546 = vsel %vm1545, 0, %v1544
        %v1547 = vsub.s32 32, %v1546
        %v1548 = vshll.u32 %v1539, %v1546
        %v1549 = vshrl.u32 %v1531, %v1547
        %v1550 = vor.u32 %v1548, %v1549
        %v1551 = vsub.s32 4294967266, %v1546
        %v1552 = vadd.s32 %v1551, 127
        %v1553 = vshll.u32 %v1552, 23
        %v1554 = vor.u32 4788187, %v1553
        %v1555 = vand.u32 2147483647, %v1554
        %v1557 = vcvt.s32.f32 %v1550
        %v1558 = vmul.f32 %v1557, %v1555
        %v1559 = vxor.u32 %v1558, 2147483648
        %v1560 = vsel %vm1477, %v1559, %v1558
        %v1561 = vsub.s32 4, %v1537
        %v1562 = vsel %vm1477, %v1561, %v1537
        %v1563 = vsel %vm1476, %v904, %v1560
        %v1564 = vsel %vm1476, 0, %v1562
        %v1565 = vcosq.f32.pop %v1563
        %v1566 = vsinq.f32.pop %v1563
        %vm1567 = vweird.f32 %v904
        %v1568 = vadd.s32 %v1564, 3
        %v1569 = vand.u32 %v1568, 3
        %vm1570 = vcmp.lt.s32.totalorder %v1569, 2
        %vm1571 = vcmp.eq.s32.totalorder %v1569, 0
        %v1572 = vxor.u32 %v1566, 2147483648
        %v1573 = vsel %vm1571, %v1565, %v1572
        %vm1574 = vcmp.eq.s32.totalorder %v1569, 2
        %v1575 = vxor.u32 %v1565, 2147483648
        %v1576 = vsel %vm1574, %v1575, %v1566
        %v1577 = vsel %vm1570, %v1573, %v1576
        %v1578 = vsel %vm1567, nan, %v1577
        %v1579 = vand.u32 2147483647, %v1367
        %vm1580 = vcmp.le.f32.partialorder %v1579, 0.7853982
        %vm1581 = vcmp.lt.s32.totalorder %v1367, 0
        %v1582 = vand.u32 %v1367, 2139095040
        %v1583 = vshrl.u32 %v1582, 23
        %v1584 = vsub.s32 %v1583, 127
        %v1585 = vand.u32 2147483647, %v1367
        %v1586 = vand.u32 %v1585, 8388607
        %v1587 = vor.u32 %v1586, 8388608
        %v1588 = vsub.s32 0, %v1587
        %v1589 = vadd.s32 %v1584, 1
        %vm1590 = vcmp.gt.s32.totalorder %v1589, 0
        %v1591 = vsel %vm1590, %v1589, 0
        %v1592 = vshrl.u32 %v1591, 5
        %v1593 = vand.u32 %v1591, 31
        %v1594 = vsub.s32 32, %v1593
        %v1595 = vshrl.u32 683565275, %v1594
        %v1596 = vshll.u32 683565275, %v1593
        %v1597 = vshrl.u32 2475754826, %v1594
        %v1598 = vor.u32 %v1596, %v1597
        %v1599 = vshll.u32 2475754826, %v1593
        %v1600 = vshrl.u32 2131351028, %v1594
        %v1601 = vor.u32 %v1599, %v1600
        %v1602 = vshll.u32 2131351028, %v1593
        %v1603 = vshrl.u32 2102212464, %v1594
        %v1604 = vor.u32 %v1602, %v1603
        %v1605 = vshll.u32 2102212464, %v1593
        %v1606 = vshrl.u32 920167782, %v1594
        %v1607 = vor.u32 %v1605, %v1606
        %v1608 = vshll.u32 920167782, %v1593
        %v1609 = vshrl.u32 1326507024, %v1594
        %v1610 = vor.u32 %v1608, %v1609
        %vm1611 = vcmp.lt.s32.totalorder %v1592, 1
        %vm1612 = vcmp.lt.s32.totalorder %v1592, 2
        %vm1613 = vcmp.lt.s32.totalorder %v1592, 3
        %vm1614 = vcmp.lt.s32.totalorder %v1592, 4
        %v1615 = vsel %vm1611, %v1595, %v1598
        %v1616 = vsel %vm1614, %v1604, 2102212464
        %v1617 = vsel %vm1613, %v1601, %v1616
        %v1618 = vsel %vm1612, %v1615, %v1617
        %v1619 = vsel %vm1611, %v1598, %v1601
        %v1620 = vsel %vm1614, %v1607, 920167782
        %v1621 = vsel %vm1613, %v1604, %v1620
        %v1622 = vsel %vm1612, %v1619, %v1621
        %v1623 = vsel %vm1611, %v1601, %v1604
        %v1624 = vsel %vm1614, %v1610, 1326507024
        %v1625 = vsel %vm1613, %v1607, %v1624
        %v1626 = vsel %vm1612, %v1623, %v1625
        %v1627 = vshll.u32 %v1587, 8
        %v1628 = vmul.u32.u64.compose %v1627, %v1626
        %v1629 = vextract.low.u32 %v1628
        %v1630 = vextract.high.u32 %v1628
        %v1631 = vmul.u32.u64.compose %v1627, %v1622
        %v1632 = vextract.low.u32 %v1631
        %v1633 = vextract.high.u32 %v1631
        %v1634 = vmul.u32 %v1627, %v1618
        %v1635 = vadd.s32 %v1630, %v1632
        %vm1636 = vc.u32 %v1630, %v1632
        %v1637 = vadd.s32 %v1633, 1
        %v1638 = vsel %vm1636, %v1637, %v1633
        %v1639 = vadd.s32 %v1634, %v1638
        %v1640 = vadd.s32 %v1639, 536870912
        %v1641 = vshrl.u32 %v1640, 30
        %v1642 = vshll.u32 %v1641, 30
        %v1643 = vsub.s32 %v1639, %v1642
        %vm1644 = vcmp.lt.s32.totalorder %v1643, 0
        %v1645 = vsub.s32 0, %v1643
        %v1646 = vsel %vm1644, %v1645, %v1643
        %v1647 = vclz %v1646
        %v1648 = vsub.s32 %v1647, 2
        %vm1649 = vcmp.gt.s32.totalorder 0, %v1648
        %v1650 = vsel %vm1649, 0, %v1648
        %v1651 = vsub.s32 32, %v1650
        %v1652 = vshll.u32 %v1643, %v1650
        %v1653 = vshrl.u32 %v1635, %v1651
        %v1654 = vor.u32 %v1652, %v1653
        %v1655 = vsub.s32 4294967266, %v1650
        %v1656 = vadd.s32 %v1655, 127
        %v1657 = vshll.u32 %v1656, 23
        %v1658 = vor.u32 4788187, %v1657
        %v1659 = vand.u32 2147483647, %v1658
        %v1661 = vcvt.s32.f32 %v1654
        %v1662 = vmul.f32 %v1661, %v1659
        %v1663 = vxor.u32 %v1662, 2147483648
        %v1664 = vsel %vm1581, %v1663, %v1662
        %v1665 = vsub.s32 4, %v1641
        %v1666 = vsel %vm1581, %v1665, %v1641
        %v1667 = vsel %vm1580, %v1367, %v1664
        %v1668 = vsel %vm1580, 0, %v1666
        %v1669 = vcosq.f32.pop %v1667
        %v1670 = vsinq.f32.pop %v1667
        %vm1671 = vweird.f32 %v1367
        %v1672 = vadd.s32 %v1668, 3
        %v1673 = vand.u32 %v1672, 3
        %vm1674 = vcmp.lt.s32.totalorder %v1673, 2
        %vm1675 = vcmp.eq.s32.totalorder %v1673, 0
        %v1676 = vxor.u32 %v1670, 2147483648
        %v1677 = vsel %vm1675, %v1669, %v1676
        %vm1678 = vcmp.eq.s32.totalorder %v1673, 2
        %v1679 = vxor.u32 %v1669, 2147483648
        %v1680 = vsel %vm1678, %v1679, %v1670
        %v1681 = vsel %vm1674, %v1677, %v1680
        %v1682 = vsel %vm1671, nan, %v1681
        %v1683 = vand.u32 2147483647, %v1369
        %vm1684 = vcmp.le.f32.partialorder %v1683, 0.7853982
        %vm1685 = vcmp.lt.s32.totalorder %v1369, 0
        %v1686 = vand.u32 %v1369, 2139095040
        %v1687 = vshrl.u32 %v1686, 23
        %v1688 = vsub.s32 %v1687, 127
        %v1689 = vand.u32 2147483647, %v1369
        %v1690 = vand.u32 %v1689, 8388607
        %v1691 = vor.u32 %v1690, 8388608
        %v1692 = vsub.s32 0, %v1691
        %v1693 = vadd.s32 %v1688, 1
        %vm1694 = vcmp.gt.s32.totalorder %v1693, 0
        %v1695 = vsel %vm1694, %v1693, 0
        %v1696 = vshrl.u32 %v1695, 5
        %v1697 = vand.u32 %v1695, 31
        %v1698 = vsub.s32 32, %v1697
        %v1699 = vshrl.u32 683565275, %v1698
        %v1700 = vshll.u32 683565275, %v1697
        %v1701 = vshrl.u32 2475754826, %v1698
        %v1702 = vor.u32 %v1700, %v1701
        %v1703 = vshll.u32 2475754826, %v1697
        %v1704 = vshrl.u32 2131351028, %v1698
        %v1705 = vor.u32 %v1703, %v1704
        %v1706 = vshll.u32 2131351028, %v1697
        %v1707 = vshrl.u32 2102212464, %v1698
        %v1708 = vor.u32 %v1706, %v1707
        %v1709 = vshll.u32 2102212464, %v1697
        %v1710 = vshrl.u32 920167782, %v1698
        %v1711 = vor.u32 %v1709, %v1710
        %v1712 = vshll.u32 920167782, %v1697
        %v1713 = vshrl.u32 1326507024, %v1698
        %v1714 = vor.u32 %v1712, %v1713
        %vm1715 = vcmp.lt.s32.totalorder %v1696, 1
        %vm1716 = vcmp.lt.s32.totalorder %v1696, 2
        %vm1717 = vcmp.lt.s32.totalorder %v1696, 3
        %vm1718 = vcmp.lt.s32.totalorder %v1696, 4
        %v1719 = vsel %vm1715, %v1699, %v1702
        %v1720 = vsel %vm1718, %v1708, 2102212464
        %v1721 = vsel %vm1717, %v1705, %v1720
        %v1722 = vsel %vm1716, %v1719, %v1721
        %v1723 = vsel %vm1715, %v1702, %v1705
        %v1724 = vsel %vm1718, %v1711, 920167782
        %v1725 = vsel %vm1717, %v1708, %v1724
        %v1726 = vsel %vm1716, %v1723, %v1725
        %v1727 = vsel %vm1715, %v1705, %v1708
        %v1728 = vsel %vm1718, %v1714, 1326507024
        %v1729 = vsel %vm1717, %v1711, %v1728
        %v1730 = vsel %vm1716, %v1727, %v1729
        %v1731 = vshll.u32 %v1691, 8
        %v1732 = vmul.u32.u64.compose %v1731, %v1730
        %v1733 = vextract.low.u32 %v1732
        %v1734 = vextract.high.u32 %v1732
        %v1735 = vmul.u32.u64.compose %v1731, %v1726
        %v1736 = vextract.low.u32 %v1735
        %v1737 = vextract.high.u32 %v1735
        %v1738 = vmul.u32 %v1731, %v1722
        %v1739 = vadd.s32 %v1734, %v1736
        %vm1740 = vc.u32 %v1734, %v1736
        %v1741 = vadd.s32 %v1737, 1
        %v1742 = vsel %vm1740, %v1741, %v1737
        %v1743 = vadd.s32 %v1738, %v1742
        %v1744 = vadd.s32 %v1743, 536870912
        %v1745 = vshrl.u32 %v1744, 30
        %v1746 = vshll.u32 %v1745, 30
        %v1747 = vsub.s32 %v1743, %v1746
        %vm1748 = vcmp.lt.s32.totalorder %v1747, 0
        %v1749 = vsub.s32 0, %v1747
        %v1750 = vsel %vm1748, %v1749, %v1747
        %v1751 = vclz %v1750
        %v1752 = vsub.s32 %v1751, 2
        %vm1753 = vcmp.gt.s32.totalorder 0, %v1752
        %v1754 = vsel %vm1753, 0, %v1752
        %v1755 = vsub.s32 32, %v1754
        %v1756 = vshll.u32 %v1747, %v1754
        %v1757 = vshrl.u32 %v1739, %v1755
        %v1758 = vor.u32 %v1756, %v1757
        %v1759 = vsub.s32 4294967266, %v1754
        %v1760 = vadd.s32 %v1759, 127
        %v1761 = vshll.u32 %v1760, 23
        %v1762 = vor.u32 4788187, %v1761
        %v1763 = vand.u32 2147483647, %v1762
        %v1765 = vcvt.s32.f32 %v1758
        %v1766 = vmul.f32 %v1765, %v1763
        %v1767 = vxor.u32 %v1766, 2147483648
        %v1768 = vsel %vm1685, %v1767, %v1766
        %v1769 = vsub.s32 4, %v1745
        %v1770 = vsel %vm1685, %v1769, %v1745
        %v1771 = vsel %vm1684, %v1369, %v1768
        %v1772 = vsel %vm1684, 0, %v1770
        %v1773 = vcosq.f32.pop %v1771
        %v1774 = vsinq.f32.pop %v1771
        %vm1775 = vweird.f32 %v1369
        %v1776 = vadd.s32 %v1772, 3
        %v1777 = vand.u32 %v1776, 3
        %vm1778 = vcmp.lt.s32.totalorder %v1777, 2
        %vm1779 = vcmp.eq.s32.totalorder %v1777, 0
        %v1780 = vxor.u32 %v1774, 2147483648
        %v1781 = vsel %vm1779, %v1773, %v1780
        %vm1782 = vcmp.eq.s32.totalorder %v1777, 2
        %v1783 = vxor.u32 %v1773, 2147483648
        %v1784 = vsel %vm1782, %v1783, %v1774
        %v1785 = vsel %vm1778, %v1781, %v1784
        %v1786 = vsel %vm1775, nan, %v1785
        %v1787 = vpack.c.bf16 %v1474, %v1474
        %v1788 = vpack.c.bf16 %v1578, %v1578
        %v1789 = vpack.c.bf16 %v1682, %v1682
        %v1790 = vpack.c.bf16 %v1786, %v1786
        %v1791 = vld [vmem:[#allocation2] sm:$0xff]
        %v1792 = vld [vmem:[#allocation2 + $0x8] sm:$0xff]
        %v1793 = vld [vmem:[#allocation2 + $0x10] sm:$0xff]
        %v1794 = vld [vmem:[#allocation2 + $0x18] sm:$0xff]
        %v1795 = vld [vmem:[#allocation2 + $0x20] sm:$0xff]
        %v1796 = vld [vmem:[#allocation2 + $0x28] sm:$0xff]
        %v1797 = vld [vmem:[#allocation2 + $0x30] sm:$0xff]
        %v1798 = vld [vmem:[#allocation2 + $0x38] sm:$0xff]
        %v1799 = vld [vmem:[#allocation2 + $0x40] sm:$0xff]
        %v1800 = vld [vmem:[#allocation2 + $0x48] sm:$0xff]
        %v1801 = vld [vmem:[#allocation2 + $0x50] sm:$0xff]
        %v1802 = vld [vmem:[#allocation2 + $0x58] sm:$0xff]
        %v1803 = vld [vmem:[#allocation2 + $0x60] sm:$0xff]
        %v1804 = vld [vmem:[#allocation2 + $0x68] sm:$0xff]
        %v1805 = vld [vmem:[#allocation2 + $0x70] sm:$0xff]
        %v1806 = vld [vmem:[#allocation2 + $0x78] sm:$0xff]
        %v1807 = vld [vmem:[#allocation2 + $0x80] sm:$0xff]
        %v1808 = vld [vmem:[#allocation2 + $0x88] sm:$0xff]
        %v1809 = vld [vmem:[#allocation2 + $0x90] sm:$0xff]
        %v1810 = vld [vmem:[#allocation2 + $0x98] sm:$0xff]
        %v1811 = vld [vmem:[#allocation2 + $0xa0] sm:$0xff]
        %v1812 = vld [vmem:[#allocation2 + $0xa8] sm:$0xff]
        %v1813 = vld [vmem:[#allocation2 + $0xb0] sm:$0xff]
        %v1814 = vld [vmem:[#allocation2 + $0xb8] sm:$0xff]
        %v1815 = vld [vmem:[#allocation2 + $0xc0] sm:$0xff]
        %v1816 = vld [vmem:[#allocation2 + $0xc8] sm:$0xff]
        %v1817 = vld [vmem:[#allocation2 + $0xd0] sm:$0xff]
        %v1818 = vld [vmem:[#allocation2 + $0xd8] sm:$0xff]
        %v1819 = vld [vmem:[#allocation2 + $0xe0] sm:$0xff]
        %v1820 = vld [vmem:[#allocation2 + $0xe8] sm:$0xff]
        %v1821 = vld [vmem:[#allocation2 + $0xf0] sm:$0xff]
        %v1822 = vld [vmem:[#allocation2 + $0xf8] sm:$0xff]
        %v1823 = vld [vmem:[#allocation2 + $0x100] sm:$0xff]
        %v1824 = vld [vmem:[#allocation2 + $0x108] sm:$0xff]
        %v1825 = vld [vmem:[#allocation2 + $0x110] sm:$0xff]
        %v1826 = vld [vmem:[#allocation2 + $0x118] sm:$0xff]
        %v1827 = vld [vmem:[#allocation2 + $0x120] sm:$0xff]
        %v1828 = vld [vmem:[#allocation2 + $0x128] sm:$0xff]
        %v1829 = vld [vmem:[#allocation2 + $0x130] sm:$0xff]
        %v1830 = vld [vmem:[#allocation2 + $0x138] sm:$0xff]
        %v1831 = vld [vmem:[#allocation2 + $0x140] sm:$0xff]
        %v1832 = vld [vmem:[#allocation2 + $0x148] sm:$0xff]
        %v1833 = vld [vmem:[#allocation2 + $0x150] sm:$0xff]
        %v1834 = vld [vmem:[#allocation2 + $0x158] sm:$0xff]
        %v1835 = vld [vmem:[#allocation2 + $0x160] sm:$0xff]
        %v1836 = vld [vmem:[#allocation2 + $0x168] sm:$0xff]
        %v1837 = vld [vmem:[#allocation2 + $0x170] sm:$0xff]
        %v1838 = vld [vmem:[#allocation2 + $0x178] sm:$0xff]
        %v1839 = vld [vmem:[#allocation2 + $0x180] sm:$0xff]
        %v1840 = vld [vmem:[#allocation2 + $0x188] sm:$0xff]
        %v1841 = vld [vmem:[#allocation2 + $0x190] sm:$0xff]
        %v1842 = vld [vmem:[#allocation2 + $0x198] sm:$0xff]
        %v1843 = vld [vmem:[#allocation2 + $0x1a0] sm:$0xff]
        %v1844 = vld [vmem:[#allocation2 + $0x1a8] sm:$0xff]
        %v1845 = vld [vmem:[#allocation2 + $0x1b0] sm:$0xff]
        %v1846 = vld [vmem:[#allocation2 + $0x1b8] sm:$0xff]
        %v1847 = vld [vmem:[#allocation2 + $0x1c0] sm:$0xff]
        %v1848 = vld [vmem:[#allocation2 + $0x1c8] sm:$0xff]
        %v1849 = vld [vmem:[#allocation2 + $0x1d0] sm:$0xff]
        %v1850 = vld [vmem:[#allocation2 + $0x1d8] sm:$0xff]
        %v1851 = vld [vmem:[#allocation2 + $0x1e0] sm:$0xff]
        %v1852 = vld [vmem:[#allocation2 + $0x1e8] sm:$0xff]
        %v1853 = vld [vmem:[#allocation2 + $0x1f0] sm:$0xff]
        %v1854 = vld [vmem:[#allocation2 + $0x1f8] sm:$0xff]
        %v1855 = vld [vmem:[#allocation2 + $0x200] sm:$0xff]
        %v1856 = vld [vmem:[#allocation2 + $0x208] sm:$0xff]
        %v1857 = vld [vmem:[#allocation2 + $0x210] sm:$0xff]
        %v1858 = vld [vmem:[#allocation2 + $0x218] sm:$0xff]
        %v1859 = vld [vmem:[#allocation2 + $0x220] sm:$0xff]
        %v1860 = vld [vmem:[#allocation2 + $0x228] sm:$0xff]
        %v1861 = vld [vmem:[#allocation2 + $0x230] sm:$0xff]
        %v1862 = vld [vmem:[#allocation2 + $0x238] sm:$0xff]
        %v1863 = vld [vmem:[#allocation2 + $0x240] sm:$0xff]
        %v1864 = vld [vmem:[#allocation2 + $0x248] sm:$0xff]
        %v1865 = vld [vmem:[#allocation2 + $0x250] sm:$0xff]
        %v1866 = vld [vmem:[#allocation2 + $0x258] sm:$0xff]
        %v1867 = vld [vmem:[#allocation2 + $0x260] sm:$0xff]
        %v1868 = vld [vmem:[#allocation2 + $0x268] sm:$0xff]
        %v1869 = vld [vmem:[#allocation2 + $0x270] sm:$0xff]
        %v1870 = vld [vmem:[#allocation2 + $0x278] sm:$0xff]
        %v1871 = vld [vmem:[#allocation2 + $0x280] sm:$0xff]
        %v1872 = vld [vmem:[#allocation2 + $0x288] sm:$0xff]
        %v1873 = vld [vmem:[#allocation2 + $0x290] sm:$0xff]
        %v1874 = vld [vmem:[#allocation2 + $0x298] sm:$0xff]
        %v1875 = vld [vmem:[#allocation2 + $0x2a0] sm:$0xff]
        %v1876 = vld [vmem:[#allocation2 + $0x2a8] sm:$0xff]
        %v1877 = vld [vmem:[#allocation2 + $0x2b0] sm:$0xff]
        %v1878 = vld [vmem:[#allocation2 + $0x2b8] sm:$0xff]
        %v1879 = vld [vmem:[#allocation2 + $0x2c0] sm:$0xff]
        %v1880 = vld [vmem:[#allocation2 + $0x2c8] sm:$0xff]
        %v1881 = vld [vmem:[#allocation2 + $0x2d0] sm:$0xff]
        %v1882 = vld [vmem:[#allocation2 + $0x2d8] sm:$0xff]
        %v1883 = vld [vmem:[#allocation2 + $0x2e0] sm:$0xff]
        %v1884 = vld [vmem:[#allocation2 + $0x2e8] sm:$0xff]
        %v1885 = vld [vmem:[#allocation2 + $0x2f0] sm:$0xff]
        %v1886 = vld [vmem:[#allocation2 + $0x2f8] sm:$0xff]
        %v1887 = vld [vmem:[#allocation2 + $0x300] sm:$0xff]
        %v1888 = vld [vmem:[#allocation2 + $0x308] sm:$0xff]
        %v1889 = vld [vmem:[#allocation2 + $0x310] sm:$0xff]
        %v1890 = vld [vmem:[#allocation2 + $0x318] sm:$0xff]
        %v1891 = vld [vmem:[#allocation2 + $0x320] sm:$0xff]
        %v1892 = vld [vmem:[#allocation2 + $0x328] sm:$0xff]
        %v1893 = vld [vmem:[#allocation2 + $0x330] sm:$0xff]
        %v1894 = vld [vmem:[#allocation2 + $0x338] sm:$0xff]
        %v1895 = vld [vmem:[#allocation2 + $0x340] sm:$0xff]
        %v1896 = vld [vmem:[#allocation2 + $0x348] sm:$0xff]
        %v1897 = vld [vmem:[#allocation2 + $0x350] sm:$0xff]
        %v1898 = vld [vmem:[#allocation2 + $0x358] sm:$0xff]
        %v1899 = vld [vmem:[#allocation2 + $0x360] sm:$0xff]
        %v1900 = vld [vmem:[#allocation2 + $0x368] sm:$0xff]
        %v1901 = vld [vmem:[#allocation2 + $0x370] sm:$0xff]
        %v1902 = vld [vmem:[#allocation2 + $0x378] sm:$0xff]
        %v1903 = vld [vmem:[#allocation2 + $0x380] sm:$0xff]
        %v1904 = vld [vmem:[#allocation2 + $0x388] sm:$0xff]
        %v1905 = vld [vmem:[#allocation2 + $0x390] sm:$0xff]
        %v1906 = vld [vmem:[#allocation2 + $0x398] sm:$0xff]
        %v1907 = vld [vmem:[#allocation2 + $0x3a0] sm:$0xff]
        %v1908 = vld [vmem:[#allocation2 + $0x3a8] sm:$0xff]
        %v1909 = vld [vmem:[#allocation2 + $0x3b0] sm:$0xff]
        %v1910 = vld [vmem:[#allocation2 + $0x3b8] sm:$0xff]
        %v1911 = vld [vmem:[#allocation2 + $0x3c0] sm:$0xff]
        %v1912 = vld [vmem:[#allocation2 + $0x3c8] sm:$0xff]
        %v1913 = vld [vmem:[#allocation2 + $0x3d0] sm:$0xff]
        %v1914 = vld [vmem:[#allocation2 + $0x3d8] sm:$0xff]
        %v1915 = vld [vmem:[#allocation2 + $0x3e0] sm:$0xff]
        %v1916 = vld [vmem:[#allocation2 + $0x3e8] sm:$0xff]
        %v1917 = vld [vmem:[#allocation2 + $0x3f0] sm:$0xff]
        %v1918 = vld [vmem:[#allocation2 + $0x3f8] sm:$0xff]
        %v1919 = vld [vmem:[#allocation4] sm:$0xf]
        %v1921 = vlaneseq
        %v1922 = vshrl.u32 %v1921, 7
        %v1923 = vsub.s32 0, %v1922
        %v1924 = vrot.slane %v1919, %v1923
        %v1925 = vlaneseq
        %v1926 = vshrl.u32 %v1925, 7
        %v1927 = vsub.s32 1, %v1926
        %v1928 = vrot.slane %v1919, %v1927
        %v1929 = vlaneseq
        %v1930 = vshrl.u32 %v1929, 7
        %v1931 = vsub.s32 2, %v1930
        %v1932 = vrot.slane %v1919, %v1931
        %v1933 = vlaneseq
        %v1934 = vshrl.u32 %v1933, 7
        %v1935 = vsub.s32 3, %v1934
        %v1936 = vrot.slane %v1919, %v1935
        %v2069 = vunpack.c.l.b16 %v1791
        %v2070 = vunpack.c.h.b16 %v1791
        %v2071 = vunpack.c.l.b16 %v1792
        %v2072 = vunpack.c.h.b16 %v1792
        %v2073 = vunpack.c.l.b16 %v1793
        %v2074 = vunpack.c.h.b16 %v1793
        %v2075 = vunpack.c.l.b16 %v1794
        %v2076 = vunpack.c.h.b16 %v1794
        %v2077 = vunpack.c.l.b16 %v1795
        %v2078 = vunpack.c.h.b16 %v1795
        %v2079 = vunpack.c.l.b16 %v1796
        %v2080 = vunpack.c.h.b16 %v1796
        %v2081 = vunpack.c.l.b16 %v1797
        %v2082 = vunpack.c.h.b16 %v1797
        %v2083 = vunpack.c.l.b16 %v1798
        %v2084 = vunpack.c.h.b16 %v1798
        %v2085 = vunpack.c.l.b16 %v1799
        %v2086 = vunpack.c.h.b16 %v1799
        %v2087 = vunpack.c.l.b16 %v1800
        %v2088 = vunpack.c.h.b16 %v1800
        %v2089 = vunpack.c.l.b16 %v1801
        %v2090 = vunpack.c.h.b16 %v1801
        %v2091 = vunpack.c.l.b16 %v1802
        %v2092 = vunpack.c.h.b16 %v1802
        %v2093 = vunpack.c.l.b16 %v1803
        %v2094 = vunpack.c.h.b16 %v1803
        %v2095 = vunpack.c.l.b16 %v1804
        %v2096 = vunpack.c.h.b16 %v1804
        %v2097 = vunpack.c.l.b16 %v1805
        %v2098 = vunpack.c.h.b16 %v1805
        %v2099 = vunpack.c.l.b16 %v1806
        %v2100 = vunpack.c.h.b16 %v1806
        %v2101 = vunpack.c.l.b16 %v1807
        %v2102 = vunpack.c.h.b16 %v1807
        %v2103 = vunpack.c.l.b16 %v1808
        %v2104 = vunpack.c.h.b16 %v1808
        %v2105 = vunpack.c.l.b16 %v1809
        %v2106 = vunpack.c.h.b16 %v1809
        %v2107 = vunpack.c.l.b16 %v1810
        %v2108 = vunpack.c.h.b16 %v1810
        %v2109 = vunpack.c.l.b16 %v1811
        %v2110 = vunpack.c.h.b16 %v1811
        %v2111 = vunpack.c.l.b16 %v1812
        %v2112 = vunpack.c.h.b16 %v1812
        %v2113 = vunpack.c.l.b16 %v1813
        %v2114 = vunpack.c.h.b16 %v1813
        %v2115 = vunpack.c.l.b16 %v1814
        %v2116 = vunpack.c.h.b16 %v1814
        %v2117 = vunpack.c.l.b16 %v1815
        %v2118 = vunpack.c.h.b16 %v1815
        %v2119 = vunpack.c.l.b16 %v1816
        %v2120 = vunpack.c.h.b16 %v1816
        %v2121 = vunpack.c.l.b16 %v1817
        %v2122 = vunpack.c.h.b16 %v1817
        %v2123 = vunpack.c.l.b16 %v1818
        %v2124 = vunpack.c.h.b16 %v1818
        %v2125 = vunpack.c.l.b16 %v1819
        %v2126 = vunpack.c.h.b16 %v1819
        %v2127 = vunpack.c.l.b16 %v1820
        %v2128 = vunpack.c.h.b16 %v1820
        %v2129 = vunpack.c.l.b16 %v1821
        %v2130 = vunpack.c.h.b16 %v1821
        %v2131 = vunpack.c.l.b16 %v1822
        %v2132 = vunpack.c.h.b16 %v1822
        %v2133 = vunpack.c.l.b16 %v1823
        %v2134 = vunpack.c.h.b16 %v1823
        %v2135 = vunpack.c.l.b16 %v1824
        %v2136 = vunpack.c.h.b16 %v1824
        %v2137 = vunpack.c.l.b16 %v1825
        %v2138 = vunpack.c.h.b16 %v1825
        %v2139 = vunpack.c.l.b16 %v1826
        %v2140 = vunpack.c.h.b16 %v1826
        %v2141 = vunpack.c.l.b16 %v1827
        %v2142 = vunpack.c.h.b16 %v1827
        %v2143 = vunpack.c.l.b16 %v1828
        %v2144 = vunpack.c.h.b16 %v1828
        %v2145 = vunpack.c.l.b16 %v1829
        %v2146 = vunpack.c.h.b16 %v1829
        %v2147 = vunpack.c.l.b16 %v1830
        %v2148 = vunpack.c.h.b16 %v1830
        %v2149 = vunpack.c.l.b16 %v1831
        %v2150 = vunpack.c.h.b16 %v1831
        %v2151 = vunpack.c.l.b16 %v1832
        %v2152 = vunpack.c.h.b16 %v1832
        %v2153 = vunpack.c.l.b16 %v1833
        %v2154 = vunpack.c.h.b16 %v1833
        %v2155 = vunpack.c.l.b16 %v1834
        %v2156 = vunpack.c.h.b16 %v1834
        %v2157 = vunpack.c.l.b16 %v1835
        %v2158 = vunpack.c.h.b16 %v1835
        %v2159 = vunpack.c.l.b16 %v1836
        %v2160 = vunpack.c.h.b16 %v1836
        %v2161 = vunpack.c.l.b16 %v1837
        %v2162 = vunpack.c.h.b16 %v1837
        %v2163 = vunpack.c.l.b16 %v1838
        %v2164 = vunpack.c.h.b16 %v1838
        %v2165 = vunpack.c.l.b16 %v1839
        %v2166 = vunpack.c.h.b16 %v1839
        %v2167 = vunpack.c.l.b16 %v1840
        %v2168 = vunpack.c.h.b16 %v1840
        %v2169 = vunpack.c.l.b16 %v1841
        %v2170 = vunpack.c.h.b16 %v1841
        %v2171 = vunpack.c.l.b16 %v1842
        %v2172 = vunpack.c.h.b16 %v1842
        %v2173 = vunpack.c.l.b16 %v1843
        %v2174 = vunpack.c.h.b16 %v1843
        %v2175 = vunpack.c.l.b16 %v1844
        %v2176 = vunpack.c.h.b16 %v1844
        %v2177 = vunpack.c.l.b16 %v1845
        %v2178 = vunpack.c.h.b16 %v1845
        %v2179 = vunpack.c.l.b16 %v1846
        %v2180 = vunpack.c.h.b16 %v1846
        %v2181 = vunpack.c.l.b16 %v1847
        %v2182 = vunpack.c.h.b16 %v1847
        %v2183 = vunpack.c.l.b16 %v1848
        %v2184 = vunpack.c.h.b16 %v1848
        %v2185 = vunpack.c.l.b16 %v1849
        %v2186 = vunpack.c.h.b16 %v1849
        %v2187 = vunpack.c.l.b16 %v1850
        %v2188 = vunpack.c.h.b16 %v1850
        %v2189 = vunpack.c.l.b16 %v1851
        %v2190 = vunpack.c.h.b16 %v1851
        %v2191 = vunpack.c.l.b16 %v1852
        %v2192 = vunpack.c.h.b16 %v1852
        %v2193 = vunpack.c.l.b16 %v1853
        %v2194 = vunpack.c.h.b16 %v1853
        %v2195 = vunpack.c.l.b16 %v1854
        %v2196 = vunpack.c.h.b16 %v1854
        %v2197 = vunpack.c.l.b16 %v1855
        %v2198 = vunpack.c.h.b16 %v1855
        %v2199 = vunpack.c.l.b16 %v1856
        %v2200 = vunpack.c.h.b16 %v1856
        %v2201 = vunpack.c.l.b16 %v1857
        %v2202 = vunpack.c.h.b16 %v1857
        %v2203 = vunpack.c.l.b16 %v1858
        %v2204 = vunpack.c.h.b16 %v1858
        %v2205 = vunpack.c.l.b16 %v1859
        %v2206 = vunpack.c.h.b16 %v1859
        %v2207 = vunpack.c.l.b16 %v1860
        %v2208 = vunpack.c.h.b16 %v1860
        %v2209 = vunpack.c.l.b16 %v1861
        %v2210 = vunpack.c.h.b16 %v1861
        %v2211 = vunpack.c.l.b16 %v1862
        %v2212 = vunpack.c.h.b16 %v1862
        %v2213 = vunpack.c.l.b16 %v1863
        %v2214 = vunpack.c.h.b16 %v1863
        %v2215 = vunpack.c.l.b16 %v1864
        %v2216 = vunpack.c.h.b16 %v1864
        %v2217 = vunpack.c.l.b16 %v1865
        %v2218 = vunpack.c.h.b16 %v1865
        %v2219 = vunpack.c.l.b16 %v1866
        %v2220 = vunpack.c.h.b16 %v1866
        %v2221 = vunpack.c.l.b16 %v1867
        %v2222 = vunpack.c.h.b16 %v1867
        %v2223 = vunpack.c.l.b16 %v1868
        %v2224 = vunpack.c.h.b16 %v1868
        %v2225 = vunpack.c.l.b16 %v1869
        %v2226 = vunpack.c.h.b16 %v1869
        %v2227 = vunpack.c.l.b16 %v1870
        %v2228 = vunpack.c.h.b16 %v1870
        %v2229 = vunpack.c.l.b16 %v1871
        %v2230 = vunpack.c.h.b16 %v1871
        %v2231 = vunpack.c.l.b16 %v1872
        %v2232 = vunpack.c.h.b16 %v1872
        %v2233 = vunpack.c.l.b16 %v1873
        %v2234 = vunpack.c.h.b16 %v1873
        %v2235 = vunpack.c.l.b16 %v1874
        %v2236 = vunpack.c.h.b16 %v1874
        %v2237 = vunpack.c.l.b16 %v1875
        %v2238 = vunpack.c.h.b16 %v1875
        %v2239 = vunpack.c.l.b16 %v1876
        %v2240 = vunpack.c.h.b16 %v1876
        %v2241 = vunpack.c.l.b16 %v1877
        %v2242 = vunpack.c.h.b16 %v1877
        %v2243 = vunpack.c.l.b16 %v1878
        %v2244 = vunpack.c.h.b16 %v1878
        %v2245 = vunpack.c.l.b16 %v1879
        %v2246 = vunpack.c.h.b16 %v1879
        %v2247 = vunpack.c.l.b16 %v1880
        %v2248 = vunpack.c.h.b16 %v1880
        %v2249 = vunpack.c.l.b16 %v1881
        %v2250 = vunpack.c.h.b16 %v1881
        %v2251 = vunpack.c.l.b16 %v1882
        %v2252 = vunpack.c.h.b16 %v1882
        %v2253 = vunpack.c.l.b16 %v1883
        %v2254 = vunpack.c.h.b16 %v1883
        %v2255 = vunpack.c.l.b16 %v1884
        %v2256 = vunpack.c.h.b16 %v1884
        %v2257 = vunpack.c.l.b16 %v1885
        %v2258 = vunpack.c.h.b16 %v1885
        %v2259 = vunpack.c.l.b16 %v1886
        %v2260 = vunpack.c.h.b16 %v1886
        %v2261 = vunpack.c.l.b16 %v1887
        %v2262 = vunpack.c.h.b16 %v1887
        %v2263 = vunpack.c.l.b16 %v1888
        %v2264 = vunpack.c.h.b16 %v1888
        %v2265 = vunpack.c.l.b16 %v1889
        %v2266 = vunpack.c.h.b16 %v1889
        %v2267 = vunpack.c.l.b16 %v1890
        %v2268 = vunpack.c.h.b16 %v1890
        %v2269 = vunpack.c.l.b16 %v1891
        %v2270 = vunpack.c.h.b16 %v1891
        %v2271 = vunpack.c.l.b16 %v1892
        %v2272 = vunpack.c.h.b16 %v1892
        %v2273 = vunpack.c.l.b16 %v1893
        %v2274 = vunpack.c.h.b16 %v1893
        %v2275 = vunpack.c.l.b16 %v1894
        %v2276 = vunpack.c.h.b16 %v1894
        %v2277 = vunpack.c.l.b16 %v1895
        %v2278 = vunpack.c.h.b16 %v1895
        %v2279 = vunpack.c.l.b16 %v1896
        %v2280 = vunpack.c.h.b16 %v1896
        %v2281 = vunpack.c.l.b16 %v1897
        %v2282 = vunpack.c.h.b16 %v1897
        %v2283 = vunpack.c.l.b16 %v1898
        %v2284 = vunpack.c.h.b16 %v1898
        %v2285 = vunpack.c.l.b16 %v1899
        %v2286 = vunpack.c.h.b16 %v1899
        %v2287 = vunpack.c.l.b16 %v1900
        %v2288 = vunpack.c.h.b16 %v1900
        %v2289 = vunpack.c.l.b16 %v1901
        %v2290 = vunpack.c.h.b16 %v1901
        %v2291 = vunpack.c.l.b16 %v1902
        %v2292 = vunpack.c.h.b16 %v1902
        %v2293 = vunpack.c.l.b16 %v1903
        %v2294 = vunpack.c.h.b16 %v1903
        %v2295 = vunpack.c.l.b16 %v1904
        %v2296 = vunpack.c.h.b16 %v1904
        %v2297 = vunpack.c.l.b16 %v1905
        %v2298 = vunpack.c.h.b16 %v1905
        %v2299 = vunpack.c.l.b16 %v1906
        %v2300 = vunpack.c.h.b16 %v1906
        %v2301 = vunpack.c.l.b16 %v1907
        %v2302 = vunpack.c.h.b16 %v1907
        %v2303 = vunpack.c.l.b16 %v1908
        %v2304 = vunpack.c.h.b16 %v1908
        %v2305 = vunpack.c.l.b16 %v1909
        %v2306 = vunpack.c.h.b16 %v1909
        %v2307 = vunpack.c.l.b16 %v1910
        %v2308 = vunpack.c.h.b16 %v1910
        %v2309 = vunpack.c.l.b16 %v1911
        %v2310 = vunpack.c.h.b16 %v1911
        %v2311 = vunpack.c.l.b16 %v1912
        %v2312 = vunpack.c.h.b16 %v1912
        %v2313 = vunpack.c.l.b16 %v1913
        %v2314 = vunpack.c.h.b16 %v1913
        %v2315 = vunpack.c.l.b16 %v1914
        %v2316 = vunpack.c.h.b16 %v1914
        %v2317 = vunpack.c.l.b16 %v1915
        %v2318 = vunpack.c.h.b16 %v1915
        %v2319 = vunpack.c.l.b16 %v1916
        %v2320 = vunpack.c.h.b16 %v1916
        %v2321 = vunpack.c.l.b16 %v1917
        %v2322 = vunpack.c.h.b16 %v1917
        %v2323 = vunpack.c.l.b16 %v1918
        %v2324 = vunpack.c.h.b16 %v1918
        %v2325 = vpack.c.b16 %v2073, %v2069
        %v2326 = vpack.c.b16 %v2074, %v2070
        %v2327 = vpack.c.b16 %v2075, %v2071
        %v2328 = vpack.c.b16 %v2076, %v2072
        %v2329 = vpack.c.b16 %v2081, %v2077
        %v2330 = vpack.c.b16 %v2082, %v2078
        %v2331 = vpack.c.b16 %v2083, %v2079
        %v2332 = vpack.c.b16 %v2084, %v2080
        %v2333 = vpack.c.b16 %v2089, %v2085
        %v2334 = vpack.c.b16 %v2090, %v2086
        %v2335 = vpack.c.b16 %v2091, %v2087
        %v2336 = vpack.c.b16 %v2092, %v2088
        %v2337 = vpack.c.b16 %v2097, %v2093
        %v2338 = vpack.c.b16 %v2098, %v2094
        %v2339 = vpack.c.b16 %v2099, %v2095
        %v2340 = vpack.c.b16 %v2100, %v2096
        %v2341 = vpack.c.b16 %v2105, %v2101
        %v2342 = vpack.c.b16 %v2106, %v2102
        %v2343 = vpack.c.b16 %v2107, %v2103
        %v2344 = vpack.c.b16 %v2108, %v2104
        %v2345 = vpack.c.b16 %v2113, %v2109
        %v2346 = vpack.c.b16 %v2114, %v2110
        %v2347 = vpack.c.b16 %v2115, %v2111
        %v2348 = vpack.c.b16 %v2116, %v2112
        %v2349 = vpack.c.b16 %v2121, %v2117
        %v2350 = vpack.c.b16 %v2122, %v2118
        %v2351 = vpack.c.b16 %v2123, %v2119
        %v2352 = vpack.c.b16 %v2124, %v2120
        %v2353 = vpack.c.b16 %v2129, %v2125
        %v2354 = vpack.c.b16 %v2130, %v2126
        %v2355 = vpack.c.b16 %v2131, %v2127
        %v2356 = vpack.c.b16 %v2132, %v2128
        %v2357 = vpack.c.b16 %v2137, %v2133
        %v2358 = vpack.c.b16 %v2138, %v2134
        %v2359 = vpack.c.b16 %v2139, %v2135
        %v2360 = vpack.c.b16 %v2140, %v2136
        %v2361 = vpack.c.b16 %v2145, %v2141
        %v2362 = vpack.c.b16 %v2146, %v2142
        %v2363 = vpack.c.b16 %v2147, %v2143
        %v2364 = vpack.c.b16 %v2148, %v2144
        %v2365 = vpack.c.b16 %v2153, %v2149
        %v2366 = vpack.c.b16 %v2154, %v2150
        %v2367 = vpack.c.b16 %v2155, %v2151
        %v2368 = vpack.c.b16 %v2156, %v2152
        %v2369 = vpack.c.b16 %v2161, %v2157
        %v2370 = vpack.c.b16 %v2162, %v2158
        %v2371 = vpack.c.b16 %v2163, %v2159
        %v2372 = vpack.c.b16 %v2164, %v2160
        %v2373 = vpack.c.b16 %v2169, %v2165
        %v2374 = vpack.c.b16 %v2170, %v2166
        %v2375 = vpack.c.b16 %v2171, %v2167
        %v2376 = vpack.c.b16 %v2172, %v2168
        %v2377 = vpack.c.b16 %v2177, %v2173
        %v2378 = vpack.c.b16 %v2178, %v2174
        %v2379 = vpack.c.b16 %v2179, %v2175
        %v2380 = vpack.c.b16 %v2180, %v2176
        %v2381 = vpack.c.b16 %v2185, %v2181
        %v2382 = vpack.c.b16 %v2186, %v2182
        %v2383 = vpack.c.b16 %v2187, %v2183
        %v2384 = vpack.c.b16 %v2188, %v2184
        %v2385 = vpack.c.b16 %v2193, %v2189
        %v2386 = vpack.c.b16 %v2194, %v2190
        %v2387 = vpack.c.b16 %v2195, %v2191
        %v2388 = vpack.c.b16 %v2196, %v2192
        %v2389 = vpack.c.b16 %v2201, %v2197
        %v2390 = vpack.c.b16 %v2202, %v2198
        %v2391 = vpack.c.b16 %v2203, %v2199
        %v2392 = vpack.c.b16 %v2204, %v2200
        %v2393 = vpack.c.b16 %v2209, %v2205
        %v2394 = vpack.c.b16 %v2210, %v2206
        %v2395 = vpack.c.b16 %v2211, %v2207
        %v2396 = vpack.c.b16 %v2212, %v2208
        %v2397 = vpack.c.b16 %v2217, %v2213
        %v2398 = vpack.c.b16 %v2218, %v2214
        %v2399 = vpack.c.b16 %v2219, %v2215
        %v2400 = vpack.c.b16 %v2220, %v2216
        %v2401 = vpack.c.b16 %v2225, %v2221
        %v2402 = vpack.c.b16 %v2226, %v2222
        %v2403 = vpack.c.b16 %v2227, %v2223
        %v2404 = vpack.c.b16 %v2228, %v2224
        %v2405 = vpack.c.b16 %v2233, %v2229
        %v2406 = vpack.c.b16 %v2234, %v2230
        %v2407 = vpack.c.b16 %v2235, %v2231
        %v2408 = vpack.c.b16 %v2236, %v2232
        %v2409 = vpack.c.b16 %v2241, %v2237
        %v2410 = vpack.c.b16 %v2242, %v2238
        %v2411 = vpack.c.b16 %v2243, %v2239
        %v2412 = vpack.c.b16 %v2244, %v2240
        %v2413 = vpack.c.b16 %v2249, %v2245
        %v2414 = vpack.c.b16 %v2250, %v2246
        %v2415 = vpack.c.b16 %v2251, %v2247
        %v2416 = vpack.c.b16 %v2252, %v2248
        %v2417 = vpack.c.b16 %v2257, %v2253
        %v2418 = vpack.c.b16 %v2258, %v2254
        %v2419 = vpack.c.b16 %v2259, %v2255
        %v2420 = vpack.c.b16 %v2260, %v2256
        %v2421 = vpack.c.b16 %v2265, %v2261
        %v2422 = vpack.c.b16 %v2266, %v2262
        %v2423 = vpack.c.b16 %v2267, %v2263
        %v2424 = vpack.c.b16 %v2268, %v2264
        %v2425 = vpack.c.b16 %v2273, %v2269
        %v2426 = vpack.c.b16 %v2274, %v2270
        %v2427 = vpack.c.b16 %v2275, %v2271
        %v2428 = vpack.c.b16 %v2276, %v2272
        %v2429 = vpack.c.b16 %v2281, %v2277
        %v2430 = vpack.c.b16 %v2282, %v2278
        %v2431 = vpack.c.b16 %v2283, %v2279
        %v2432 = vpack.c.b16 %v2284, %v2280
        %v2433 = vpack.c.b16 %v2289, %v2285
        %v2434 = vpack.c.b16 %v2290, %v2286
        %v2435 = vpack.c.b16 %v2291, %v2287
        %v2436 = vpack.c.b16 %v2292, %v2288
        %v2437 = vpack.c.b16 %v2297, %v2293
        %v2438 = vpack.c.b16 %v2298, %v2294
        %v2439 = vpack.c.b16 %v2299, %v2295
        %v2440 = vpack.c.b16 %v2300, %v2296
        %v2441 = vpack.c.b16 %v2305, %v2301
        %v2442 = vpack.c.b16 %v2306, %v2302
        %v2443 = vpack.c.b16 %v2307, %v2303
        %v2444 = vpack.c.b16 %v2308, %v2304
        %v2445 = vpack.c.b16 %v2313, %v2309
        %v2446 = vpack.c.b16 %v2314, %v2310
        %v2447 = vpack.c.b16 %v2315, %v2311
        %v2448 = vpack.c.b16 %v2316, %v2312
        %v2449 = vpack.c.b16 %v2321, %v2317
        %v2450 = vpack.c.b16 %v2322, %v2318
        %v2451 = vpack.c.b16 %v2323, %v2319
        %v2452 = vpack.c.b16 %v2324, %v2320
        %2581 = vmatprep.subr.bf16.mxu0 %v2326
        %2582 = vmatpush1.bf16.msra.mxu0 %v2325
        %2583 = vmatprep.subr.bf16.mxu0 %v2330
        %2584 = vmatpush1.bf16.msra.mxu0 %v2329
        %2585 = vmatprep.subr.bf16.mxu0 %v2334
        %2586 = vmatpush1.bf16.msra.mxu0 %v2333
        %2587 = vmatprep.subr.bf16.mxu0 %v2338
        %2588 = vmatpush1.bf16.msra.mxu0 %v2337
        %2589 = vmatprep.subr.bf16.mxu0 %v2342
        %2590 = vmatpush1.bf16.msra.mxu0 %v2341
        %2591 = vmatprep.subr.bf16.mxu0 %v2346
        %2592 = vmatpush1.bf16.msra.mxu0 %v2345
        %2593 = vmatprep.subr.bf16.mxu0 %v2350
        %2594 = vmatpush1.bf16.msra.mxu0 %v2349
        %2595 = vmatprep.subr.bf16.mxu0 %v2354
        %2596 = vmatpush1.bf16.msra.mxu0 %v2353
        %2597 = vmatprep.subr.bf16.mxu0 %v2358
        %2598 = vmatpush1.bf16.msra.mxu0 %v2357
        %2599 = vmatprep.subr.bf16.mxu0 %v2362
        %2600 = vmatpush1.bf16.msra.mxu0 %v2361
        %2601 = vmatprep.subr.bf16.mxu0 %v2366
        %2602 = vmatpush1.bf16.msra.mxu0 %v2365
        %2603 = vmatprep.subr.bf16.mxu0 %v2370
        %2604 = vmatpush1.bf16.msra.mxu0 %v2369
        %2605 = vmatprep.subr.bf16.mxu0 %v2374
        %2606 = vmatpush1.bf16.msra.mxu0 %v2373
        %2607 = vmatprep.subr.bf16.mxu0 %v2378
        %2608 = vmatpush1.bf16.msra.mxu0 %v2377
        %2609 = vmatprep.subr.bf16.mxu0 %v2382
        %2610 = vmatpush1.bf16.msra.mxu0 %v2381
        %2611 = vmatprep.subr.bf16.mxu0 %v2386
        %2612 = vmatpush1.bf16.msra.mxu0 %v2385
        %2613 = vmatprep.mubr.bf16.mxu0 %v1788
        %2614 = vmatmul.mubr.bf16.gmra.mrb[0].mxu0 %v1787
        %v2615 = vpop.f32.mrb[0].mxu0
        %v2616 = vadd.f32 %v1924, %v2615
        %v2617 = vpop.f32.mrb[0].mxu0
        %v2618 = vadd.f32 %v1928, %v2617
        %v2619 = vpop.f32.mrb[0].mxu0
        %v2620 = vpop.f32.mrb[0].mxu0
        %2621 = vdwg.mxu0
        %2622 = vmatprep.subr.bf16.mxu0 %v2390
        %2623 = vmatpush1.bf16.msra.mxu0 %v2389
        %2624 = vmatprep.subr.bf16.mxu0 %v2394
        %2625 = vmatpush1.bf16.msra.mxu0 %v2393
        %2626 = vmatprep.subr.bf16.mxu0 %v2398
        %2627 = vmatpush1.bf16.msra.mxu0 %v2397
        %2628 = vmatprep.subr.bf16.mxu0 %v2402
        %2629 = vmatpush1.bf16.msra.mxu0 %v2401
        %2630 = vmatprep.subr.bf16.mxu0 %v2406
        %2631 = vmatpush1.bf16.msra.mxu0 %v2405
        %2632 = vmatprep.subr.bf16.mxu0 %v2410
        %2633 = vmatpush1.bf16.msra.mxu0 %v2409
        %2634 = vmatprep.subr.bf16.mxu0 %v2414
        %2635 = vmatpush1.bf16.msra.mxu0 %v2413
        %2636 = vmatprep.subr.bf16.mxu0 %v2418
        %2637 = vmatpush1.bf16.msra.mxu0 %v2417
        %2638 = vmatprep.subr.bf16.mxu0 %v2422
        %2639 = vmatpush1.bf16.msra.mxu0 %v2421
        %2640 = vmatprep.subr.bf16.mxu0 %v2426
        %2641 = vmatpush1.bf16.msra.mxu0 %v2425
        %2642 = vmatprep.subr.bf16.mxu0 %v2430
        %2643 = vmatpush1.bf16.msra.mxu0 %v2429
        %2644 = vmatprep.subr.bf16.mxu0 %v2434
        %2645 = vmatpush1.bf16.msra.mxu0 %v2433
        %2646 = vmatprep.subr.bf16.mxu0 %v2438
        %2647 = vmatpush1.bf16.msra.mxu0 %v2437
        %2648 = vmatprep.subr.bf16.mxu0 %v2442
        %2649 = vmatpush1.bf16.msra.mxu0 %v2441
        %2650 = vmatprep.subr.bf16.mxu0 %v2446
        %2651 = vmatpush1.bf16.msra.mxu0 %v2445
        %2652 = vmatprep.subr.bf16.mxu0 %v2450
        %2653 = vmatpush1.bf16.msra.mxu0 %v2449
        %2654 = vmatprep.mubr.bf16.mxu0 %v1790
        %2655 = vmatmul.mubr.bf16.gmra.mrb[0].mxu0 %v1789
        %v2656 = vpop.f32.mrb[0].mxu0
        %v2657 = vadd.f32 %v2616, %v2656
        %v2658 = vpop.f32.mrb[0].mxu0
        %v2659 = vadd.f32 %v2618, %v2658
        %v2660 = vpop.f32.mrb[0].mxu0
        %v2661 = vpop.f32.mrb[0].mxu0
        %2662 = vdwg.mxu0
        %2663 = vmatprep.subr.bf16.mxu0 %v2328
        %2664 = vmatpush1.bf16.msra.mxu0 %v2327
        %2665 = vmatprep.subr.bf16.mxu0 %v2332
        %2666 = vmatpush1.bf16.msra.mxu0 %v2331
        %2667 = vmatprep.subr.bf16.mxu0 %v2336
        %2668 = vmatpush1.bf16.msra.mxu0 %v2335
        %2669 = vmatprep.subr.bf16.mxu0 %v2340
        %2670 = vmatpush1.bf16.msra.mxu0 %v2339
        %2671 = vmatprep.subr.bf16.mxu0 %v2344
        %2672 = vmatpush1.bf16.msra.mxu0 %v2343
        %2673 = vmatprep.subr.bf16.mxu0 %v2348
        %2674 = vmatpush1.bf16.msra.mxu0 %v2347
        %2675 = vmatprep.subr.bf16.mxu0 %v2352
        %2676 = vmatpush1.bf16.msra.mxu0 %v2351
        %2677 = vmatprep.subr.bf16.mxu0 %v2356
        %2678 = vmatpush1.bf16.msra.mxu0 %v2355
        %2679 = vmatprep.subr.bf16.mxu0 %v2360
        %2680 = vmatpush1.bf16.msra.mxu0 %v2359
        %2681 = vmatprep.subr.bf16.mxu0 %v2364
        %2682 = vmatpush1.bf16.msra.mxu0 %v2363
        %2683 = vmatprep.subr.bf16.mxu0 %v2368
        %2684 = vmatpush1.bf16.msra.mxu0 %v2367
        %2685 = vmatprep.subr.bf16.mxu0 %v2372
        %2686 = vmatpush1.bf16.msra.mxu0 %v2371
        %2687 = vmatprep.subr.bf16.mxu0 %v2376
        %2688 = vmatpush1.bf16.msra.mxu0 %v2375
        %2689 = vmatprep.subr.bf16.mxu0 %v2380
        %2690 = vmatpush1.bf16.msra.mxu0 %v2379
        %2691 = vmatprep.subr.bf16.mxu0 %v2384
        %2692 = vmatpush1.bf16.msra.mxu0 %v2383
        %2693 = vmatprep.subr.bf16.mxu0 %v2388
        %2694 = vmatpush1.bf16.msra.mxu0 %v2387
        %2695 = vmatprep.mubr.bf16.mxu0 %v1788
        %2696 = vmatmul.mubr.bf16.gmra.mrb[0].mxu0 %v1787
        %v2697 = vpop.f32.mrb[0].mxu0
        %v2698 = vadd.f32 %v1932, %v2697
        %v2699 = vpop.f32.mrb[0].mxu0
        %v2700 = vadd.f32 %v1936, %v2699
        %v2701 = vpop.f32.mrb[0].mxu0
        %v2702 = vpop.f32.mrb[0].mxu0
        %2703 = vdwg.mxu0
        %2704 = vmatprep.subr.bf16.mxu0 %v2392
        %2705 = vmatpush1.bf16.msra.mxu0 %v2391
        %2706 = vmatprep.subr.bf16.mxu0 %v2396
        %2707 = vmatpush1.bf16.msra.mxu0 %v2395
        %2708 = vmatprep.subr.bf16.mxu0 %v2400
        %2709 = vmatpush1.bf16.msra.mxu0 %v2399
        %2710 = vmatprep.subr.bf16.mxu0 %v2404
        %2711 = vmatpush1.bf16.msra.mxu0 %v2403
        %2712 = vmatprep.subr.bf16.mxu0 %v2408
        %2713 = vmatpush1.bf16.msra.mxu0 %v2407
        %2714 = vmatprep.subr.bf16.mxu0 %v2412
        %2715 = vmatpush1.bf16.msra.mxu0 %v2411
        %2716 = vmatprep.subr.bf16.mxu0 %v2416
        %2717 = vmatpush1.bf16.msra.mxu0 %v2415
        %2718 = vmatprep.subr.bf16.mxu0 %v2420
        %2719 = vmatpush1.bf16.msra.mxu0 %v2419
        %2720 = vmatprep.subr.bf16.mxu0 %v2424
        %2721 = vmatpush1.bf16.msra.mxu0 %v2423
        %2722 = vmatprep.subr.bf16.mxu0 %v2428
        %2723 = vmatpush1.bf16.msra.mxu0 %v2427
        %2724 = vmatprep.subr.bf16.mxu0 %v2432
        %2725 = vmatpush1.bf16.msra.mxu0 %v2431
        %2726 = vmatprep.subr.bf16.mxu0 %v2436
        %2727 = vmatpush1.bf16.msra.mxu0 %v2435
        %2728 = vmatprep.subr.bf16.mxu0 %v2440
        %2729 = vmatpush1.bf16.msra.mxu0 %v2439
        %2730 = vmatprep.subr.bf16.mxu0 %v2444
        %2731 = vmatpush1.bf16.msra.mxu0 %v2443
        %2732 = vmatprep.subr.bf16.mxu0 %v2448
        %2733 = vmatpush1.bf16.msra.mxu0 %v2447
        %2734 = vmatprep.subr.bf16.mxu0 %v2452
        %2735 = vmatpush1.bf16.msra.mxu0 %v2451
        %2736 = vmatprep.mubr.bf16.mxu0 %v1790
        %2737 = vmatmul.mubr.bf16.gmra.mrb[0].mxu0 %v1789
        %v2738 = vpop.f32.mrb[0].mxu0
        %v2739 = vadd.f32 %v2698, %v2738
        %v2740 = vpop.f32.mrb[0].mxu0
        %v2741 = vadd.f32 %v2700, %v2740
        %v2742 = vpop.f32.mrb[0].mxu0
        %v2743 = vpop.f32.mrb[0].mxu0
        %2744 = vdwg.mxu0
        %v2745 = vadd.f32 %v2657, %v2659
        %v2746 = vadd.f32 %v2745, %v2739
        %v2747 = vadd.f32 %v2746, %v2741
        %2748 = vadd.xlane.f32.xlu0 %v2747
        %v2749 = vpop.xlane.xlu0 %2748
        %v2750 = vrcp.pop 512.0
        %v2751 = vmul.f32 %v2749, %v2750
        %v2752 = vmul.f32 %v2657, %v2657
        %v2753 = vmul.f32 %v2659, %v2659
        %v2754 = vmul.f32 %v2739, %v2739
        %v2755 = vmul.f32 %v2741, %v2741
        %v2756 = vadd.f32 %v2752, %v2753
        %v2757 = vadd.f32 %v2756, %v2754
        %v2758 = vadd.f32 %v2757, %v2755
        %2759 = vadd.xlane.f32.xlu0 %v2758
        %v2760 = vpop.xlane.xlu0 %2759
        %v2761 = vmul.f32 %v2760, %v2750
        %v2762 = vmul.f32 %v2751, %v2751
        %v2763 = vsub.f32 %v2761, %v2762
        %v2764 = vmax.f32 %v2763, 0.0
        %v2765 = vsub.f32 %v2657, %v2751
        %v2766 = vsub.f32 %v2659, %v2751
        %v2767 = vsub.f32 %v2739, %v2751
        %v2768 = vsub.f32 %v2741, %v2751
        %v2769 = vadd.f32 %v2764, 1e-05
        %v2770 = vrsqrt.pop %v2769
        %v2771 = vmul.f32 %v2765, %v2770
        %v2772 = vmul.f32 %v2766, %v2770
        %v2773 = vmul.f32 %v2767, %v2770
        %v2774 = vmul.f32 %v2768, %v2770
        %v2775 = vld [vmem:[#allocation6] sm:$0xf]
        %v2777 = vlaneseq
        %v2778 = vshrl.u32 %v2777, 7
        %v2779 = vsub.s32 0, %v2778
        %v2780 = vrot.slane %v2775, %v2779
        %v2781 = vlaneseq
        %v2782 = vshrl.u32 %v2781, 7
        %v2783 = vsub.s32 1, %v2782
        %v2784 = vrot.slane %v2775, %v2783
        %v2785 = vlaneseq
        %v2786 = vshrl.u32 %v2785, 7
        %v2787 = vsub.s32 2, %v2786
        %v2788 = vrot.slane %v2775, %v2787
        %v2789 = vlaneseq
        %v2790 = vshrl.u32 %v2789, 7
        %v2791 = vsub.s32 3, %v2790
        %v2792 = vrot.slane %v2775, %v2791
        %v2797 = vmul.f32 %v2771, %v2780
        %v2798 = vmul.f32 %v2772, %v2784
        %v2799 = vmul.f32 %v2773, %v2788
        %v2800 = vmul.f32 %v2774, %v2792
        %v2801 = vld [vmem:[#allocation7] sm:$0xf]
        %v2803 = vlaneseq
        %v2804 = vshrl.u32 %v2803, 7
        %v2805 = vsub.s32 0, %v2804
        %v2806 = vrot.slane %v2801, %v2805
        %v2807 = vlaneseq
        %v2808 = vshrl.u32 %v2807, 7
        %v2809 = vsub.s32 1, %v2808
        %v2810 = vrot.slane %v2801, %v2809
        %v2811 = vlaneseq
        %v2812 = vshrl.u32 %v2811, 7
        %v2813 = vsub.s32 2, %v2812
        %v2814 = vrot.slane %v2801, %v2813
        %v2815 = vlaneseq
        %v2816 = vshrl.u32 %v2815, 7
        %v2817 = vsub.s32 3, %v2816
        %v2818 = vrot.slane %v2801, %v2817
        %v2823 = vadd.f32 %v2797, %v2806
        %v2824 = vadd.f32 %v2798, %v2810
        %v2825 = vadd.f32 %v2799, %v2814
        %v2826 = vadd.f32 %v2800, %v2818
        %v2827 = vpack.c.bf16 %v2823, %v2823
        %v2828 = vpack.c.bf16 %v2824, %v2824
        %v2829 = vpack.c.bf16 %v2825, %v2825
        %v2830 = vpack.c.bf16 %v2826, %v2826
        %v2831 = vld [vmem:[#allocation9] sm:$0xff]
        %v2832 = vld [vmem:[#allocation9 + $0x8] sm:$0xff]
        %v2833 = vld [vmem:[#allocation9 + $0x10] sm:$0xff]
        %v2834 = vld [vmem:[#allocation9 + $0x18] sm:$0xff]
        %v2835 = vld [vmem:[#allocation9 + $0x20] sm:$0xff]
        %v2836 = vld [vmem:[#allocation9 + $0x28] sm:$0xff]
        %v2837 = vld [vmem:[#allocation9 + $0x30] sm:$0xff]
        %v2838 = vld [vmem:[#allocation9 + $0x38] sm:$0xff]
        %v2839 = vld [vmem:[#allocation9 + $0x40] sm:$0xff]
        %v2840 = vld [vmem:[#allocation9 + $0x48] sm:$0xff]
        %v2841 = vld [vmem:[#allocation9 + $0x50] sm:$0xff]
        %v2842 = vld [vmem:[#allocation9 + $0x58] sm:$0xff]
        %v2843 = vld [vmem:[#allocation9 + $0x60] sm:$0xff]
        %v2844 = vld [vmem:[#allocation9 + $0x68] sm:$0xff]
        %v2845 = vld [vmem:[#allocation9 + $0x70] sm:$0xff]
        %v2846 = vld [vmem:[#allocation9 + $0x78] sm:$0xff]
        %v2847 = vld [vmem:[#allocation9 + $0x80] sm:$0xff]
        %v2848 = vld [vmem:[#allocation9 + $0x88] sm:$0xff]
        %v2849 = vld [vmem:[#allocation9 + $0x90] sm:$0xff]
        %v2850 = vld [vmem:[#allocation9 + $0x98] sm:$0xff]
        %v2851 = vld [vmem:[#allocation9 + $0xa0] sm:$0xff]
        %v2852 = vld [vmem:[#allocation9 + $0xa8] sm:$0xff]
        %v2853 = vld [vmem:[#allocation9 + $0xb0] sm:$0xff]
        %v2854 = vld [vmem:[#allocation9 + $0xb8] sm:$0xff]
        %v2855 = vld [vmem:[#allocation9 + $0xc0] sm:$0xff]
        %v2856 = vld [vmem:[#allocation9 + $0xc8] sm:$0xff]
        %v2857 = vld [vmem:[#allocation9 + $0xd0] sm:$0xff]
        %v2858 = vld [vmem:[#allocation9 + $0xd8] sm:$0xff]
        %v2859 = vld [vmem:[#allocation9 + $0xe0] sm:$0xff]
        %v2860 = vld [vmem:[#allocation9 + $0xe8] sm:$0xff]
        %v2861 = vld [vmem:[#allocation9 + $0xf0] sm:$0xff]
        %v2862 = vld [vmem:[#allocation9 + $0xf8] sm:$0xff]
        %v2863 = vld [vmem:[#allocation9 + $0x100] sm:$0xff]
        %v2864 = vld [vmem:[#allocation9 + $0x108] sm:$0xff]
        %v2865 = vld [vmem:[#allocation9 + $0x110] sm:$0xff]
        %v2866 = vld [vmem:[#allocation9 + $0x118] sm:$0xff]
        %v2867 = vld [vmem:[#allocation9 + $0x120] sm:$0xff]
        %v2868 = vld [vmem:[#allocation9 + $0x128] sm:$0xff]
        %v2869 = vld [vmem:[#allocation9 + $0x130] sm:$0xff]
        %v2870 = vld [vmem:[#allocation9 + $0x138] sm:$0xff]
        %v2871 = vld [vmem:[#allocation9 + $0x140] sm:$0xff]
        %v2872 = vld [vmem:[#allocation9 + $0x148] sm:$0xff]
        %v2873 = vld [vmem:[#allocation9 + $0x150] sm:$0xff]
        %v2874 = vld [vmem:[#allocation9 + $0x158] sm:$0xff]
        %v2875 = vld [vmem:[#allocation9 + $0x160] sm:$0xff]
        %v2876 = vld [vmem:[#allocation9 + $0x168] sm:$0xff]
        %v2877 = vld [vmem:[#allocation9 + $0x170] sm:$0xff]
        %v2878 = vld [vmem:[#allocation9 + $0x178] sm:$0xff]
        %v2879 = vld [vmem:[#allocation9 + $0x180] sm:$0xff]
        %v2880 = vld [vmem:[#allocation9 + $0x188] sm:$0xff]
        %v2881 = vld [vmem:[#allocation9 + $0x190] sm:$0xff]
        %v2882 = vld [vmem:[#allocation9 + $0x198] sm:$0xff]
        %v2883 = vld [vmem:[#allocation9 + $0x1a0] sm:$0xff]
        %v2884 = vld [vmem:[#allocation9 + $0x1a8] sm:$0xff]
        %v2885 = vld [vmem:[#allocation9 + $0x1b0] sm:$0xff]
        %v2886 = vld [vmem:[#allocation9 + $0x1b8] sm:$0xff]
        %v2887 = vld [vmem:[#allocation9 + $0x1c0] sm:$0xff]
        %v2888 = vld [vmem:[#allocation9 + $0x1c8] sm:$0xff]
        %v2889 = vld [vmem:[#allocation9 + $0x1d0] sm:$0xff]
        %v2890 = vld [vmem:[#allocation9 + $0x1d8] sm:$0xff]
        %v2891 = vld [vmem:[#allocation9 + $0x1e0] sm:$0xff]
        %v2892 = vld [vmem:[#allocation9 + $0x1e8] sm:$0xff]
        %v2893 = vld [vmem:[#allocation9 + $0x1f0] sm:$0xff]
        %v2894 = vld [vmem:[#allocation9 + $0x1f8] sm:$0xff]
        %v2895 = vld [vmem:[#allocation9 + $0x200] sm:$0xff]
        %v2896 = vld [vmem:[#allocation9 + $0x208] sm:$0xff]
        %v2897 = vld [vmem:[#allocation9 + $0x210] sm:$0xff]
        %v2898 = vld [vmem:[#allocation9 + $0x218] sm:$0xff]
        %v2899 = vld [vmem:[#allocation9 + $0x220] sm:$0xff]
        %v2900 = vld [vmem:[#allocation9 + $0x228] sm:$0xff]
        %v2901 = vld [vmem:[#allocation9 + $0x230] sm:$0xff]
        %v2902 = vld [vmem:[#allocation9 + $0x238] sm:$0xff]
        %v2903 = vld [vmem:[#allocation9 + $0x240] sm:$0xff]
        %v2904 = vld [vmem:[#allocation9 + $0x248] sm:$0xff]
        %v2905 = vld [vmem:[#allocation9 + $0x250] sm:$0xff]
        %v2906 = vld [vmem:[#allocation9 + $0x258] sm:$0xff]
        %v2907 = vld [vmem:[#allocation9 + $0x260] sm:$0xff]
        %v2908 = vld [vmem:[#allocation9 + $0x268] sm:$0xff]
        %v2909 = vld [vmem:[#allocation9 + $0x270] sm:$0xff]
        %v2910 = vld [vmem:[#allocation9 + $0x278] sm:$0xff]
        %v2911 = vld [vmem:[#allocation9 + $0x280] sm:$0xff]
        %v2912 = vld [vmem:[#allocation9 + $0x288] sm:$0xff]
        %v2913 = vld [vmem:[#allocation9 + $0x290] sm:$0xff]
        %v2914 = vld [vmem:[#allocation9 + $0x298] sm:$0xff]
        %v2915 = vld [vmem:[#allocation9 + $0x2a0] sm:$0xff]
        %v2916 = vld [vmem:[#allocation9 + $0x2a8] sm:$0xff]
        %v2917 = vld [vmem:[#allocation9 + $0x2b0] sm:$0xff]
        %v2918 = vld [vmem:[#allocation9 + $0x2b8] sm:$0xff]
        %v2919 = vld [vmem:[#allocation9 + $0x2c0] sm:$0xff]
        %v2920 = vld [vmem:[#allocation9 + $0x2c8] sm:$0xff]
        %v2921 = vld [vmem:[#allocation9 + $0x2d0] sm:$0xff]
        %v2922 = vld [vmem:[#allocation9 + $0x2d8] sm:$0xff]
        %v2923 = vld [vmem:[#allocation9 + $0x2e0] sm:$0xff]
        %v2924 = vld [vmem:[#allocation9 + $0x2e8] sm:$0xff]
        %v2925 = vld [vmem:[#allocation9 + $0x2f0] sm:$0xff]
        %v2926 = vld [vmem:[#allocation9 + $0x2f8] sm:$0xff]
        %v2927 = vld [vmem:[#allocation9 + $0x300] sm:$0xff]
        %v2928 = vld [vmem:[#allocation9 + $0x308] sm:$0xff]
        %v2929 = vld [vmem:[#allocation9 + $0x310] sm:$0xff]
        %v2930 = vld [vmem:[#allocation9 + $0x318] sm:$0xff]
        %v2931 = vld [vmem:[#allocation9 + $0x320] sm:$0xff]
        %v2932 = vld [vmem:[#allocation9 + $0x328] sm:$0xff]
        %v2933 = vld [vmem:[#allocation9 + $0x330] sm:$0xff]
        %v2934 = vld [vmem:[#allocation9 + $0x338] sm:$0xff]
        %v2935 = vld [vmem:[#allocation9 + $0x340] sm:$0xff]
        %v2936 = vld [vmem:[#allocation9 + $0x348] sm:$0xff]
        %v2937 = vld [vmem:[#allocation9 + $0x350] sm:$0xff]
        %v2938 = vld [vmem:[#allocation9 + $0x358] sm:$0xff]
        %v2939 = vld [vmem:[#allocation9 + $0x360] sm:$0xff]
        %v2940 = vld [vmem:[#allocation9 + $0x368] sm:$0xff]
        %v2941 = vld [vmem:[#allocation9 + $0x370] sm:$0xff]
        %v2942 = vld [vmem:[#allocation9 + $0x378] sm:$0xff]
        %v2943 = vld [vmem:[#allocation9 + $0x380] sm:$0xff]
        %v2944 = vld [vmem:[#allocation9 + $0x388] sm:$0xff]
        %v2945 = vld [vmem:[#allocation9 + $0x390] sm:$0xff]
        %v2946 = vld [vmem:[#allocation9 + $0x398] sm:$0xff]
        %v2947 = vld [vmem:[#allocation9 + $0x3a0] sm:$0xff]
        %v2948 = vld [vmem:[#allocation9 + $0x3a8] sm:$0xff]
        %v2949 = vld [vmem:[#allocation9 + $0x3b0] sm:$0xff]
        %v2950 = vld [vmem:[#allocation9 + $0x3b8] sm:$0xff]
        %v2951 = vld [vmem:[#allocation9 + $0x3c0] sm:$0xff]
        %v2952 = vld [vmem:[#allocation9 + $0x3c8] sm:$0xff]
        %v2953 = vld [vmem:[#allocation9 + $0x3d0] sm:$0xff]
        %v2954 = vld [vmem:[#allocation9 + $0x3d8] sm:$0xff]
        %v2955 = vld [vmem:[#allocation9 + $0x3e0] sm:$0xff]
        %v2956 = vld [vmem:[#allocation9 + $0x3e8] sm:$0xff]
        %v2957 = vld [vmem:[#allocation9 + $0x3f0] sm:$0xff]
        %v2958 = vld [vmem:[#allocation9 + $0x3f8] sm:$0xff]
        %v2959 = vld [vmem:[#allocation9 + $0x400] sm:$0xff]
        %v2960 = vld [vmem:[#allocation9 + $0x408] sm:$0xff]
        %v2961 = vld [vmem:[#allocation9 + $0x410] sm:$0xff]
        %v2962 = vld [vmem:[#allocation9 + $0x418] sm:$0xff]
        %v2963 = vld [vmem:[#allocation9 + $0x420] sm:$0xff]
        %v2964 = vld [vmem:[#allocation9 + $0x428] sm:$0xff]
        %v2965 = vld [vmem:[#allocation9 + $0x430] sm:$0xff]
        %v2966 = vld [vmem:[#allocation9 + $0x438] sm:$0xff]
        %v2967 = vld [vmem:[#allocation9 + $0x440] sm:$0xff]
        %v2968 = vld [vmem:[#allocation9 + $0x448] sm:$0xff]
        %v2969 = vld [vmem:[#allocation9 + $0x450] sm:$0xff]
        %v2970 = vld [vmem:[#allocation9 + $0x458] sm:$0xff]
        %v2971 = vld [vmem:[#allocation9 + $0x460] sm:$0xff]
        %v2972 = vld [vmem:[#allocation9 + $0x468] sm:$0xff]
        %v2973 = vld [vmem:[#allocation9 + $0x470] sm:$0xff]
        %v2974 = vld [vmem:[#allocation9 + $0x478] sm:$0xff]
        %v2975 = vld [vmem:[#allocation9 + $0x480] sm:$0xff]
        %v2976 = vld [vmem:[#allocation9 + $0x488] sm:$0xff]
        %v2977 = vld [vmem:[#allocation9 + $0x490] sm:$0xff]
        %v2978 = vld [vmem:[#allocation9 + $0x498] sm:$0xff]
        %v2979 = vld [vmem:[#allocation9 + $0x4a0] sm:$0xff]
        %v2980 = vld [vmem:[#allocation9 + $0x4a8] sm:$0xff]
        %v2981 = vld [vmem:[#allocation9 + $0x4b0] sm:$0xff]
        %v2982 = vld [vmem:[#allocation9 + $0x4b8] sm:$0xff]
        %v2983 = vld [vmem:[#allocation9 + $0x4c0] sm:$0xff]
        %v2984 = vld [vmem:[#allocation9 + $0x4c8] sm:$0xff]
        %v2985 = vld [vmem:[#allocation9 + $0x4d0] sm:$0xff]
        %v2986 = vld [vmem:[#allocation9 + $0x4d8] sm:$0xff]
        %v2987 = vld [vmem:[#allocation9 + $0x4e0] sm:$0xff]
        %v2988 = vld [vmem:[#allocation9 + $0x4e8] sm:$0xff]
        %v2989 = vld [vmem:[#allocation9 + $0x4f0] sm:$0xff]
        %v2990 = vld [vmem:[#allocation9 + $0x4f8] sm:$0xff]
        %v2991 = vld [vmem:[#allocation9 + $0x500] sm:$0xff]
        %v2992 = vld [vmem:[#allocation9 + $0x508] sm:$0xff]
        %v2993 = vld [vmem:[#allocation9 + $0x510] sm:$0xff]
        %v2994 = vld [vmem:[#allocation9 + $0x518] sm:$0xff]
        %v2995 = vld [vmem:[#allocation9 + $0x520] sm:$0xff]
        %v2996 = vld [vmem:[#allocation9 + $0x528] sm:$0xff]
        %v2997 = vld [vmem:[#allocation9 + $0x530] sm:$0xff]
        %v2998 = vld [vmem:[#allocation9 + $0x538] sm:$0xff]
        %v2999 = vld [vmem:[#allocation9 + $0x540] sm:$0xff]
        %v3000 = vld [vmem:[#allocation9 + $0x548] sm:$0xff]
        %v3001 = vld [vmem:[#allocation9 + $0x550] sm:$0xff]
        %v3002 = vld [vmem:[#allocation9 + $0x558] sm:$0xff]
        %v3003 = vld [vmem:[#allocation9 + $0x560] sm:$0xff]
        %v3004 = vld [vmem:[#allocation9 + $0x568] sm:$0xff]
        %v3005 = vld [vmem:[#allocation9 + $0x570] sm:$0xff]
        %v3006 = vld [vmem:[#allocation9 + $0x578] sm:$0xff]
        %v3007 = vld [vmem:[#allocation9 + $0x580] sm:$0xff]
        %v3008 = vld [vmem:[#allocation9 + $0x588] sm:$0xff]
        %v3009 = vld [vmem:[#allocation9 + $0x590] sm:$0xff]
        %v3010 = vld [vmem:[#allocation9 + $0x598] sm:$0xff]
        %v3011 = vld [vmem:[#allocation9 + $0x5a0] sm:$0xff]
        %v3012 = vld [vmem:[#allocation9 + $0x5a8] sm:$0xff]
        %v3013 = vld [vmem:[#allocation9 + $0x5b0] sm:$0xff]
        %v3014 = vld [vmem:[#allocation9 + $0x5b8] sm:$0xff]
        %v3015 = vld [vmem:[#allocation9 + $0x5c0] sm:$0xff]
        %v3016 = vld [vmem:[#allocation9 + $0x5c8] sm:$0xff]
        %v3017 = vld [vmem:[#allocation9 + $0x5d0] sm:$0xff]
        %v3018 = vld [vmem:[#allocation9 + $0x5d8] sm:$0xff]
        %v3019 = vld [vmem:[#allocation9 + $0x5e0] sm:$0xff]
        %v3020 = vld [vmem:[#allocation9 + $0x5e8] sm:$0xff]
        %v3021 = vld [vmem:[#allocation9 + $0x5f0] sm:$0xff]
        %v3022 = vld [vmem:[#allocation9 + $0x5f8] sm:$0xff]
        %v3023 = vld [vmem:[#allocation9 + $0x600] sm:$0xff]
        %v3024 = vld [vmem:[#allocation9 + $0x608] sm:$0xff]
        %v3025 = vld [vmem:[#allocation9 + $0x610] sm:$0xff]
        %v3026 = vld [vmem:[#allocation9 + $0x618] sm:$0xff]
        %v3027 = vld [vmem:[#allocation9 + $0x620] sm:$0xff]
        %v3028 = vld [vmem:[#allocation9 + $0x628] sm:$0xff]
        %v3029 = vld [vmem:[#allocation9 + $0x630] sm:$0xff]
        %v3030 = vld [vmem:[#allocation9 + $0x638] sm:$0xff]
        %v3031 = vld [vmem:[#allocation9 + $0x640] sm:$0xff]
        %v3032 = vld [vmem:[#allocation9 + $0x648] sm:$0xff]
        %v3033 = vld [vmem:[#allocation9 + $0x650] sm:$0xff]
        %v3034 = vld [vmem:[#allocation9 + $0x658] sm:$0xff]
        %v3035 = vld [vmem:[#allocation9 + $0x660] sm:$0xff]
        %v3036 = vld [vmem:[#allocation9 + $0x668] sm:$0xff]
        %v3037 = vld [vmem:[#allocation9 + $0x670] sm:$0xff]
        %v3038 = vld [vmem:[#allocation9 + $0x678] sm:$0xff]
        %v3039 = vld [vmem:[#allocation9 + $0x680] sm:$0xff]
        %v3040 = vld [vmem:[#allocation9 + $0x688] sm:$0xff]
        %v3041 = vld [vmem:[#allocation9 + $0x690] sm:$0xff]
        %v3042 = vld [vmem:[#allocation9 + $0x698] sm:$0xff]
        %v3043 = vld [vmem:[#allocation9 + $0x6a0] sm:$0xff]
        %v3044 = vld [vmem:[#allocation9 + $0x6a8] sm:$0xff]
        %v3045 = vld [vmem:[#allocation9 + $0x6b0] sm:$0xff]
        %v3046 = vld [vmem:[#allocation9 + $0x6b8] sm:$0xff]
        %v3047 = vld [vmem:[#allocation9 + $0x6c0] sm:$0xff]
        %v3048 = vld [vmem:[#allocation9 + $0x6c8] sm:$0xff]
        %v3049 = vld [vmem:[#allocation9 + $0x6d0] sm:$0xff]
        %v3050 = vld [vmem:[#allocation9 + $0x6d8] sm:$0xff]
        %v3051 = vld [vmem:[#allocation9 + $0x6e0] sm:$0xff]
        %v3052 = vld [vmem:[#allocation9 + $0x6e8] sm:$0xff]
        %v3053 = vld [vmem:[#allocation9 + $0x6f0] sm:$0xff]
        %v3054 = vld [vmem:[#allocation9 + $0x6f8] sm:$0xff]
        %v3055 = vld [vmem:[#allocation9 + $0x700] sm:$0xff]
        %v3056 = vld [vmem:[#allocation9 + $0x708] sm:$0xff]
        %v3057 = vld [vmem:[#allocation9 + $0x710] sm:$0xff]
        %v3058 = vld [vmem:[#allocation9 + $0x718] sm:$0xff]
        %v3059 = vld [vmem:[#allocation9 + $0x720] sm:$0xff]
        %v3060 = vld [vmem:[#allocation9 + $0x728] sm:$0xff]
        %v3061 = vld [vmem:[#allocation9 + $0x730] sm:$0xff]
        %v3062 = vld [vmem:[#allocation9 + $0x738] sm:$0xff]
        %v3063 = vld [vmem:[#allocation9 + $0x740] sm:$0xff]
        %v3064 = vld [vmem:[#allocation9 + $0x748] sm:$0xff]
        %v3065 = vld [vmem:[#allocation9 + $0x750] sm:$0xff]
        %v3066 = vld [vmem:[#allocation9 + $0x758] sm:$0xff]
        %v3067 = vld [vmem:[#allocation9 + $0x760] sm:$0xff]
        %v3068 = vld [vmem:[#allocation9 + $0x768] sm:$0xff]
        %v3069 = vld [vmem:[#allocation9 + $0x770] sm:$0xff]
        %v3070 = vld [vmem:[#allocation9 + $0x778] sm:$0xff]
        %v3071 = vld [vmem:[#allocation9 + $0x780] sm:$0xff]
        %v3072 = vld [vmem:[#allocation9 + $0x788] sm:$0xff]
        %v3073 = vld [vmem:[#allocation9 + $0x790] sm:$0xff]
        %v3074 = vld [vmem:[#allocation9 + $0x798] sm:$0xff]
        %v3075 = vld [vmem:[#allocation9 + $0x7a0] sm:$0xff]
        %v3076 = vld [vmem:[#allocation9 + $0x7a8] sm:$0xff]
        %v3077 = vld [vmem:[#allocation9 + $0x7b0] sm:$0xff]
        %v3078 = vld [vmem:[#allocation9 + $0x7b8] sm:$0xff]
        %v3079 = vld [vmem:[#allocation9 + $0x7c0] sm:$0xff]
        %v3080 = vld [vmem:[#allocation9 + $0x7c8] sm:$0xff]
        %v3081 = vld [vmem:[#allocation9 + $0x7d0] sm:$0xff]
        %v3082 = vld [vmem:[#allocation9 + $0x7d8] sm:$0xff]
        %v3083 = vld [vmem:[#allocation9 + $0x7e0] sm:$0xff]
        %v3084 = vld [vmem:[#allocation9 + $0x7e8] sm:$0xff]
        %v3085 = vld [vmem:[#allocation9 + $0x7f0] sm:$0xff]
        %v3086 = vld [vmem:[#allocation9 + $0x7f8] sm:$0xff]
        %v3087 = vld [vmem:[#allocation9 + $0x800] sm:$0xff]
        %v3088 = vld [vmem:[#allocation9 + $0x808] sm:$0xff]
        %v3089 = vld [vmem:[#allocation9 + $0x810] sm:$0xff]
        %v3090 = vld [vmem:[#allocation9 + $0x818] sm:$0xff]
        %v3091 = vld [vmem:[#allocation9 + $0x820] sm:$0xff]
        %v3092 = vld [vmem:[#allocation9 + $0x828] sm:$0xff]
        %v3093 = vld [vmem:[#allocation9 + $0x830] sm:$0xff]
        %v3094 = vld [vmem:[#allocation9 + $0x838] sm:$0xff]
        %v3095 = vld [vmem:[#allocation9 + $0x840] sm:$0xff]
        %v3096 = vld [vmem:[#allocation9 + $0x848] sm:$0xff]
        %v3097 = vld [vmem:[#allocation9 + $0x850] sm:$0xff]
        %v3098 = vld [vmem:[#allocation9 + $0x858] sm:$0xff]
        %v3099 = vld [vmem:[#allocation9 + $0x860] sm:$0xff]
        %v3100 = vld [vmem:[#allocation9 + $0x868] sm:$0xff]
        %v3101 = vld [vmem:[#allocation9 + $0x870] sm:$0xff]
        %v3102 = vld [vmem:[#allocation9 + $0x878] sm:$0xff]
        %v3103 = vld [vmem:[#allocation9 + $0x880] sm:$0xff]
        %v3104 = vld [vmem:[#allocation9 + $0x888] sm:$0xff]
        %v3105 = vld [vmem:[#allocation9 + $0x890] sm:$0xff]
        %v3106 = vld [vmem:[#allocation9 + $0x898] sm:$0xff]
        %v3107 = vld [vmem:[#allocation9 + $0x8a0] sm:$0xff]
        %v3108 = vld [vmem:[#allocation9 + $0x8a8] sm:$0xff]
        %v3109 = vld [vmem:[#allocation9 + $0x8b0] sm:$0xff]
        %v3110 = vld [vmem:[#allocation9 + $0x8b8] sm:$0xff]
        %v3111 = vld [vmem:[#allocation9 + $0x8c0] sm:$0xff]
        %v3112 = vld [vmem:[#allocation9 + $0x8c8] sm:$0xff]
        %v3113 = vld [vmem:[#allocation9 + $0x8d0] sm:$0xff]
        %v3114 = vld [vmem:[#allocation9 + $0x8d8] sm:$0xff]
        %v3115 = vld [vmem:[#allocation9 + $0x8e0] sm:$0xff]
        %v3116 = vld [vmem:[#allocation9 + $0x8e8] sm:$0xff]
        %v3117 = vld [vmem:[#allocation9 + $0x8f0] sm:$0xff]
        %v3118 = vld [vmem:[#allocation9 + $0x8f8] sm:$0xff]
        %v3119 = vld [vmem:[#allocation9 + $0x900] sm:$0xff]
        %v3120 = vld [vmem:[#allocation9 + $0x908] sm:$0xff]
        %v3121 = vld [vmem:[#allocation9 + $0x910] sm:$0xff]
        %v3122 = vld [vmem:[#allocation9 + $0x918] sm:$0xff]
        %v3123 = vld [vmem:[#allocation9 + $0x920] sm:$0xff]
        %v3124 = vld [vmem:[#allocation9 + $0x928] sm:$0xff]
        %v3125 = vld [vmem:[#allocation9 + $0x930] sm:$0xff]
        %v3126 = vld [vmem:[#allocation9 + $0x938] sm:$0xff]
        %v3127 = vld [vmem:[#allocation9 + $0x940] sm:$0xff]
        %v3128 = vld [vmem:[#allocation9 + $0x948] sm:$0xff]
        %v3129 = vld [vmem:[#allocation9 + $0x950] sm:$0xff]
        %v3130 = vld [vmem:[#allocation9 + $0x958] sm:$0xff]
        %v3131 = vld [vmem:[#allocation9 + $0x960] sm:$0xff]
        %v3132 = vld [vmem:[#allocation9 + $0x968] sm:$0xff]
        %v3133 = vld [vmem:[#allocation9 + $0x970] sm:$0xff]
        %v3134 = vld [vmem:[#allocation9 + $0x978] sm:$0xff]
        %v3135 = vld [vmem:[#allocation9 + $0x980] sm:$0xff]
        %v3136 = vld [vmem:[#allocation9 + $0x988] sm:$0xff]
        %v3137 = vld [vmem:[#allocation9 + $0x990] sm:$0xff]
        %v3138 = vld [vmem:[#allocation9 + $0x998] sm:$0xff]
        %v3139 = vld [vmem:[#allocation9 + $0x9a0] sm:$0xff]
        %v3140 = vld [vmem:[#allocation9 + $0x9a8] sm:$0xff]
        %v3141 = vld [vmem:[#allocation9 + $0x9b0] sm:$0xff]
        %v3142 = vld [vmem:[#allocation9 + $0x9b8] sm:$0xff]
        %v3143 = vld [vmem:[#allocation9 + $0x9c0] sm:$0xff]
        %v3144 = vld [vmem:[#allocation9 + $0x9c8] sm:$0xff]
        %v3145 = vld [vmem:[#allocation9 + $0x9d0] sm:$0xff]
        %v3146 = vld [vmem:[#allocation9 + $0x9d8] sm:$0xff]
        %v3147 = vld [vmem:[#allocation9 + $0x9e0] sm:$0xff]
        %v3148 = vld [vmem:[#allocation9 + $0x9e8] sm:$0xff]
        %v3149 = vld [vmem:[#allocation9 + $0x9f0] sm:$0xff]
        %v3150 = vld [vmem:[#allocation9 + $0x9f8] sm:$0xff]
        %v3151 = vld [vmem:[#allocation9 + $0xa00] sm:$0xff]
        %v3152 = vld [vmem:[#allocation9 + $0xa08] sm:$0xff]
        %v3153 = vld [vmem:[#allocation9 + $0xa10] sm:$0xff]
        %v3154 = vld [vmem:[#allocation9 + $0xa18] sm:$0xff]
        %v3155 = vld [vmem:[#allocation9 + $0xa20] sm:$0xff]
        %v3156 = vld [vmem:[#allocation9 + $0xa28] sm:$0xff]
        %v3157 = vld [vmem:[#allocation9 + $0xa30] sm:$0xff]
        %v3158 = vld [vmem:[#allocation9 + $0xa38] sm:$0xff]
        %v3159 = vld [vmem:[#allocation9 + $0xa40] sm:$0xff]
        %v3160 = vld [vmem:[#allocation9 + $0xa48] sm:$0xff]
        %v3161 = vld [vmem:[#allocation9 + $0xa50] sm:$0xff]
        %v3162 = vld [vmem:[#allocation9 + $0xa58] sm:$0xff]
        %v3163 = vld [vmem:[#allocation9 + $0xa60] sm:$0xff]
        %v3164 = vld [vmem:[#allocation9 + $0xa68] sm:$0xff]
        %v3165 = vld [vmem:[#allocation9 + $0xa70] sm:$0xff]
        %v3166 = vld [vmem:[#allocation9 + $0xa78] sm:$0xff]
        %v3167 = vld [vmem:[#allocation9 + $0xa80] sm:$0xff]
        %v3168 = vld [vmem:[#allocation9 + $0xa88] sm:$0xff]
        %v3169 = vld [vmem:[#allocation9 + $0xa90] sm:$0xff]
        %v3170 = vld [vmem:[#allocation9 + $0xa98] sm:$0xff]
        %v3171 = vld [vmem:[#allocation9 + $0xaa0] sm:$0xff]
        %v3172 = vld [vmem:[#allocation9 + $0xaa8] sm:$0xff]
        %v3173 = vld [vmem:[#allocation9 + $0xab0] sm:$0xff]
        %v3174 = vld [vmem:[#allocation9 + $0xab8] sm:$0xff]
        %v3175 = vld [vmem:[#allocation9 + $0xac0] sm:$0xff]
        %v3176 = vld [vmem:[#allocation9 + $0xac8] sm:$0xff]
        %v3177 = vld [vmem:[#allocation9 + $0xad0] sm:$0xff]
        %v3178 = vld [vmem:[#allocation9 + $0xad8] sm:$0xff]
        %v3179 = vld [vmem:[#allocation9 + $0xae0] sm:$0xff]
        %v3180 = vld [vmem:[#allocation9 + $0xae8] sm:$0xff]
        %v3181 = vld [vmem:[#allocation9 + $0xaf0] sm:$0xff]
        %v3182 = vld [vmem:[#allocation9 + $0xaf8] sm:$0xff]
        %v3183 = vld [vmem:[#allocation9 + $0xb00] sm:$0xff]
        %v3184 = vld [vmem:[#allocation9 + $0xb08] sm:$0xff]
        %v3185 = vld [vmem:[#allocation9 + $0xb10] sm:$0xff]
        %v3186 = vld [vmem:[#allocation9 + $0xb18] sm:$0xff]
        %v3187 = vld [vmem:[#allocation9 + $0xb20] sm:$0xff]
        %v3188 = vld [vmem:[#allocation9 + $0xb28] sm:$0xff]
        %v3189 = vld [vmem:[#allocation9 + $0xb30] sm:$0xff]
        %v3190 = vld [vmem:[#allocation9 + $0xb38] sm:$0xff]
        %v3191 = vld [vmem:[#allocation9 + $0xb40] sm:$0xff]
        %v3192 = vld [vmem:[#allocation9 + $0xb48] sm:$0xff]
        %v3193 = vld [vmem:[#allocation9 + $0xb50] sm:$0xff]
        %v3194 = vld [vmem:[#allocation9 + $0xb58] sm:$0xff]
        %v3195 = vld [vmem:[#allocation9 + $0xb60] sm:$0xff]
        %v3196 = vld [vmem:[#allocation9 + $0xb68] sm:$0xff]
        %v3197 = vld [vmem:[#allocation9 + $0xb70] sm:$0xff]
        %v3198 = vld [vmem:[#allocation9 + $0xb78] sm:$0xff]
        %v3199 = vld [vmem:[#allocation9 + $0xb80] sm:$0xff]
        %v3200 = vld [vmem:[#allocation9 + $0xb88] sm:$0xff]
        %v3201 = vld [vmem:[#allocation9 + $0xb90] sm:$0xff]
        %v3202 = vld [vmem:[#allocation9 + $0xb98] sm:$0xff]
        %v3203 = vld [vmem:[#allocation9 + $0xba0] sm:$0xff]
        %v3204 = vld [vmem:[#allocation9 + $0xba8] sm:$0xff]
        %v3205 = vld [vmem:[#allocation9 + $0xbb0] sm:$0xff]
        %v3206 = vld [vmem:[#allocation9 + $0xbb8] sm:$0xff]
        %v3207 = vld [vmem:[#allocation9 + $0xbc0] sm:$0xff]
        %v3208 = vld [vmem:[#allocation9 + $0xbc8] sm:$0xff]
        %v3209 = vld [vmem:[#allocation9 + $0xbd0] sm:$0xff]
        %v3210 = vld [vmem:[#allocation9 + $0xbd8] sm:$0xff]
        %v3211 = vld [vmem:[#allocation9 + $0xbe0] sm:$0xff]
        %v3212 = vld [vmem:[#allocation9 + $0xbe8] sm:$0xff]
        %v3213 = vld [vmem:[#allocation9 + $0xbf0] sm:$0xff]
        %v3214 = vld [vmem:[#allocation9 + $0xbf8] sm:$0xff]
        %v3215 = vld [vmem:[#allocation9 + $0xc00] sm:$0xff]
        %v3216 = vld [vmem:[#allocation9 + $0xc08] sm:$0xff]
        %v3217 = vld [vmem:[#allocation9 + $0xc10] sm:$0xff]
        %v3218 = vld [vmem:[#allocation9 + $0xc18] sm:$0xff]
        %v3219 = vld [vmem:[#allocation9 + $0xc20] sm:$0xff]
        %v3220 = vld [vmem:[#allocation9 + $0xc28] sm:$0xff]
        %v3221 = vld [vmem:[#allocation9 + $0xc30] sm:$0xff]
        %v3222 = vld [vmem:[#allocation9 + $0xc38] sm:$0xff]
        %v3223 = vld [vmem:[#allocation9 + $0xc40] sm:$0xff]
        %v3224 = vld [vmem:[#allocation9 + $0xc48] sm:$0xff]
        %v3225 = vld [vmem:[#allocation9 + $0xc50] sm:$0xff]
        %v3226 = vld [vmem:[#allocation9 + $0xc58] sm:$0xff]
        %v3227 = vld [vmem:[#allocation9 + $0xc60] sm:$0xff]
        %v3228 = vld [vmem:[#allocation9 + $0xc68] sm:$0xff]
        %v3229 = vld [vmem:[#allocation9 + $0xc70] sm:$0xff]
        %v3230 = vld [vmem:[#allocation9 + $0xc78] sm:$0xff]
        %v3231 = vld [vmem:[#allocation9 + $0xc80] sm:$0xff]
        %v3232 = vld [vmem:[#allocation9 + $0xc88] sm:$0xff]
        %v3233 = vld [vmem:[#allocation9 + $0xc90] sm:$0xff]
        %v3234 = vld [vmem:[#allocation9 + $0xc98] sm:$0xff]
        %v3235 = vld [vmem:[#allocation9 + $0xca0] sm:$0xff]
        %v3236 = vld [vmem:[#allocation9 + $0xca8] sm:$0xff]
        %v3237 = vld [vmem:[#allocation9 + $0xcb0] sm:$0xff]
        %v3238 = vld [vmem:[#allocation9 + $0xcb8] sm:$0xff]
        %v3239 = vld [vmem:[#allocation9 + $0xcc0] sm:$0xff]
        %v3240 = vld [vmem:[#allocation9 + $0xcc8] sm:$0xff]
        %v3241 = vld [vmem:[#allocation9 + $0xcd0] sm:$0xff]
        %v3242 = vld [vmem:[#allocation9 + $0xcd8] sm:$0xff]
        %v3243 = vld [vmem:[#allocation9 + $0xce0] sm:$0xff]
        %v3244 = vld [vmem:[#allocation9 + $0xce8] sm:$0xff]
        %v3245 = vld [vmem:[#allocation9 + $0xcf0] sm:$0xff]
        %v3246 = vld [vmem:[#allocation9 + $0xcf8] sm:$0xff]
        %v3247 = vld [vmem:[#allocation9 + $0xd00] sm:$0xff]
        %v3248 = vld [vmem:[#allocation9 + $0xd08] sm:$0xff]
        %v3249 = vld [vmem:[#allocation9 + $0xd10] sm:$0xff]
        %v3250 = vld [vmem:[#allocation9 + $0xd18] sm:$0xff]
        %v3251 = vld [vmem:[#allocation9 + $0xd20] sm:$0xff]
        %v3252 = vld [vmem:[#allocation9 + $0xd28] sm:$0xff]
        %v3253 = vld [vmem:[#allocation9 + $0xd30] sm:$0xff]
        %v3254 = vld [vmem:[#allocation9 + $0xd38] sm:$0xff]
        %v3255 = vld [vmem:[#allocation9 + $0xd40] sm:$0xff]
        %v3256 = vld [vmem:[#allocation9 + $0xd48] sm:$0xff]
        %v3257 = vld [vmem:[#allocation9 + $0xd50] sm:$0xff]
        %v3258 = vld [vmem:[#allocation9 + $0xd58] sm:$0xff]
        %v3259 = vld [vmem:[#allocation9 + $0xd60] sm:$0xff]
        %v3260 = vld [vmem:[#allocation9 + $0xd68] sm:$0xff]
        %v3261 = vld [vmem:[#allocation9 + $0xd70] sm:$0xff]
        %v3262 = vld [vmem:[#allocation9 + $0xd78] sm:$0xff]
        %v3263 = vld [vmem:[#allocation9 + $0xd80] sm:$0xff]
        %v3264 = vld [vmem:[#allocation9 + $0xd88] sm:$0xff]
        %v3265 = vld [vmem:[#allocation9 + $0xd90] sm:$0xff]
        %v3266 = vld [vmem:[#allocation9 + $0xd98] sm:$0xff]
        %v3267 = vld [vmem:[#allocation9 + $0xda0] sm:$0xff]
        %v3268 = vld [vmem:[#allocation9 + $0xda8] sm:$0xff]
        %v3269 = vld [vmem:[#allocation9 + $0xdb0] sm:$0xff]
        %v3270 = vld [vmem:[#allocation9 + $0xdb8] sm:$0xff]
        %v3271 = vld [vmem:[#allocation9 + $0xdc0] sm:$0xff]
        %v3272 = vld [vmem:[#allocation9 + $0xdc8] sm:$0xff]
        %v3273 = vld [vmem:[#allocation9 + $0xdd0] sm:$0xff]
        %v3274 = vld [vmem:[#allocation9 + $0xdd8] sm:$0xff]
        %v3275 = vld [vmem:[#allocation9 + $0xde0] sm:$0xff]
        %v3276 = vld [vmem:[#allocation9 + $0xde8] sm:$0xff]
        %v3277 = vld [vmem:[#allocation9 + $0xdf0] sm:$0xff]
        %v3278 = vld [vmem:[#allocation9 + $0xdf8] sm:$0xff]
        %v3279 = vld [vmem:[#allocation9 + $0xe00] sm:$0xff]
        %v3280 = vld [vmem:[#allocation9 + $0xe08] sm:$0xff]
        %v3281 = vld [vmem:[#allocation9 + $0xe10] sm:$0xff]
        %v3282 = vld [vmem:[#allocation9 + $0xe18] sm:$0xff]
        %v3283 = vld [vmem:[#allocation9 + $0xe20] sm:$0xff]
        %v3284 = vld [vmem:[#allocation9 + $0xe28] sm:$0xff]
        %v3285 = vld [vmem:[#allocation9 + $0xe30] sm:$0xff]
        %v3286 = vld [vmem:[#allocation9 + $0xe38] sm:$0xff]
        %v3287 = vld [vmem:[#allocation9 + $0xe40] sm:$0xff]
        %v3288 = vld [vmem:[#allocation9 + $0xe48] sm:$0xff]
        %v3289 = vld [vmem:[#allocation9 + $0xe50] sm:$0xff]
        %v3290 = vld [vmem:[#allocation9 + $0xe58] sm:$0xff]
        %v3291 = vld [vmem:[#allocation9 + $0xe60] sm:$0xff]
        %v3292 = vld [vmem:[#allocation9 + $0xe68] sm:$0xff]
        %v3293 = vld [vmem:[#allocation9 + $0xe70] sm:$0xff]
        %v3294 = vld [vmem:[#allocation9 + $0xe78] sm:$0xff]
        %v3295 = vld [vmem:[#allocation9 + $0xe80] sm:$0xff]
        %v3296 = vld [vmem:[#allocation9 + $0xe88] sm:$0xff]
        %v3297 = vld [vmem:[#allocation9 + $0xe90] sm:$0xff]
        %v3298 = vld [vmem:[#allocation9 + $0xe98] sm:$0xff]
        %v3299 = vld [vmem:[#allocation9 + $0xea0] sm:$0xff]
        %v3300 = vld [vmem:[#allocation9 + $0xea8] sm:$0xff]
        %v3301 = vld [vmem:[#allocation9 + $0xeb0] sm:$0xff]
        %v3302 = vld [vmem:[#allocation9 + $0xeb8] sm:$0xff]
        %v3303 = vld [vmem:[#allocation9 + $0xec0] sm:$0xff]
        %v3304 = vld [vmem:[#allocation9 + $0xec8] sm:$0xff]
        %v3305 = vld [vmem:[#allocation9 + $0xed0] sm:$0xff]
        %v3306 = vld [vmem:[#allocation9 + $0xed8] sm:$0xff]
        %v3307 = vld [vmem:[#allocation9 + $0xee0] sm:$0xff]
        %v3308 = vld [vmem:[#allocation9 + $0xee8] sm:$0xff]
        %v3309 = vld [vmem:[#allocation9 + $0xef0] sm:$0xff]
        %v3310 = vld [vmem:[#allocation9 + $0xef8] sm:$0xff]
        %v3311 = vld [vmem:[#allocation9 + $0xf00] sm:$0xff]
        %v3312 = vld [vmem:[#allocation9 + $0xf08] sm:$0xff]
        %v3313 = vld [vmem:[#allocation9 + $0xf10] sm:$0xff]
        %v3314 = vld [vmem:[#allocation9 + $0xf18] sm:$0xff]
        %v3315 = vld [vmem:[#allocation9 + $0xf20] sm:$0xff]
        %v3316 = vld [vmem:[#allocation9 + $0xf28] sm:$0xff]
        %v3317 = vld [vmem:[#allocation9 + $0xf30] sm:$0xff]
        %v3318 = vld [vmem:[#allocation9 + $0xf38] sm:$0xff]
        %v3319 = vld [vmem:[#allocation9 + $0xf40] sm:$0xff]
        %v3320 = vld [vmem:[#allocation9 + $0xf48] sm:$0xff]
        %v3321 = vld [vmem:[#allocation9 + $0xf50] sm:$0xff]
        %v3322 = vld [vmem:[#allocation9 + $0xf58] sm:$0xff]
        %v3323 = vld [vmem:[#allocation9 + $0xf60] sm:$0xff]
        %v3324 = vld [vmem:[#allocation9 + $0xf68] sm:$0xff]
        %v3325 = vld [vmem:[#allocation9 + $0xf70] sm:$0xff]
        %v3326 = vld [vmem:[#allocation9 + $0xf78] sm:$0xff]
        %v3327 = vld [vmem:[#allocation9 + $0xf80] sm:$0xff]
        %v3328 = vld [vmem:[#allocation9 + $0xf88] sm:$0xff]
        %v3329 = vld [vmem:[#allocation9 + $0xf90] sm:$0xff]
        %v3330 = vld [vmem:[#allocation9 + $0xf98] sm:$0xff]
        %v3331 = vld [vmem:[#allocation9 + $0xfa0] sm:$0xff]
        %v3332 = vld [vmem:[#allocation9 + $0xfa8] sm:$0xff]
        %v3333 = vld [vmem:[#allocation9 + $0xfb0] sm:$0xff]
        %v3334 = vld [vmem:[#allocation9 + $0xfb8] sm:$0xff]
        %v3335 = vld [vmem:[#allocation9 + $0xfc0] sm:$0xff]
        %v3336 = vld [vmem:[#allocation9 + $0xfc8] sm:$0xff]
        %v3337 = vld [vmem:[#allocation9 + $0xfd0] sm:$0xff]
        %v3338 = vld [vmem:[#allocation9 + $0xfd8] sm:$0xff]
        %v3339 = vld [vmem:[#allocation9 + $0xfe0] sm:$0xff]
        %v3340 = vld [vmem:[#allocation9 + $0xfe8] sm:$0xff]
        %v3341 = vld [vmem:[#allocation9 + $0xff0] sm:$0xff]
        %v3342 = vld [vmem:[#allocation9 + $0xff8] sm:$0xff]
        %v3343 = vld [vmem:[#allocation10] sm:$0xff]
        %v3344 = vld [vmem:[#allocation10 + $0x8] sm:$0xff]
        %v3347 = vlaneseq
        %v3348 = vshrl.u32 %v3347, 7
        %v3349 = vsub.s32 0, %v3348
        %v3350 = vrot.slane %v3343, %v3349
        %v3351 = vlaneseq
        %v3352 = vshrl.u32 %v3351, 7
        %v3353 = vsub.s32 1, %v3352
        %v3354 = vrot.slane %v3343, %v3353
        %v3355 = vlaneseq
        %v3356 = vshrl.u32 %v3355, 7
        %v3357 = vsub.s32 2, %v3356
        %v3358 = vrot.slane %v3343, %v3357
        %v3359 = vlaneseq
        %v3360 = vshrl.u32 %v3359, 7
        %v3361 = vsub.s32 3, %v3360
        %v3362 = vrot.slane %v3343, %v3361
        %v3363 = vlaneseq
        %v3364 = vshrl.u32 %v3363, 7
        %v3365 = vsub.s32 4, %v3364
        %v3366 = vrot.slane %v3343, %v3365
        %v3367 = vlaneseq
        %v3368 = vshrl.u32 %v3367, 7
        %v3369 = vsub.s32 5, %v3368
        %v3370 = vrot.slane %v3343, %v3369
        %v3371 = vlaneseq
        %v3372 = vshrl.u32 %v3371, 7
        %v3373 = vsub.s32 6, %v3372
        %v3374 = vrot.slane %v3343, %v3373
        %v3375 = vlaneseq
        %v3376 = vshrl.u32 %v3375, 7
        %v3377 = vsub.s32 7, %v3376
        %v3378 = vrot.slane %v3343, %v3377
        %v3379 = vlaneseq
        %v3380 = vshrl.u32 %v3379, 7
        %v3381 = vsub.s32 0, %v3380
        %v3382 = vrot.slane %v3344, %v3381
        %v3383 = vlaneseq
        %v3384 = vshrl.u32 %v3383, 7
        %v3385 = vsub.s32 1, %v3384
        %v3386 = vrot.slane %v3344, %v3385
        %v3387 = vlaneseq
        %v3388 = vshrl.u32 %v3387, 7
        %v3389 = vsub.s32 2, %v3388
        %v3390 = vrot.slane %v3344, %v3389
        %v3391 = vlaneseq
        %v3392 = vshrl.u32 %v3391, 7
        %v3393 = vsub.s32 3, %v3392
        %v3394 = vrot.slane %v3344, %v3393
        %v3395 = vlaneseq
        %v3396 = vshrl.u32 %v3395, 7
        %v3397 = vsub.s32 4, %v3396
        %v3398 = vrot.slane %v3344, %v3397
        %v3399 = vlaneseq
        %v3400 = vshrl.u32 %v3399, 7
        %v3401 = vsub.s32 5, %v3400
        %v3402 = vrot.slane %v3344, %v3401
        %v3403 = vlaneseq
        %v3404 = vshrl.u32 %v3403, 7
        %v3405 = vsub.s32 6, %v3404
        %v3406 = vrot.slane %v3344, %v3405
        %v3407 = vlaneseq
        %v3408 = vshrl.u32 %v3407, 7
        %v3409 = vsub.s32 7, %v3408
        %v3410 = vrot.slane %v3344, %v3409
        %v3939 = vunpack.c.l.b16 %v2831
        %v3940 = vunpack.c.h.b16 %v2831
        %v3941 = vunpack.c.l.b16 %v2832
        %v3942 = vunpack.c.h.b16 %v2832
        %v3943 = vunpack.c.l.b16 %v2833
        %v3944 = vunpack.c.h.b16 %v2833
        %v3945 = vunpack.c.l.b16 %v2834
        %v3946 = vunpack.c.h.b16 %v2834
        %v3947 = vunpack.c.l.b16 %v2835
        %v3948 = vunpack.c.h.b16 %v2835
        %v3949 = vunpack.c.l.b16 %v2836
        %v3950 = vunpack.c.h.b16 %v2836
        %v3951 = vunpack.c.l.b16 %v2837
        %v3952 = vunpack.c.h.b16 %v2837
        %v3953 = vunpack.c.l.b16 %v2838
        %v3954 = vunpack.c.h.b16 %v2838
        %v3955 = vunpack.c.l.b16 %v2839
        %v3956 = vunpack.c.h.b16 %v2839
        %v3957 = vunpack.c.l.b16 %v2840
        %v3958 = vunpack.c.h.b16 %v2840
        %v3959 = vunpack.c.l.b16 %v2841
        %v3960 = vunpack.c.h.b16 %v2841
        %v3961 = vunpack.c.l.b16 %v2842
        %v3962 = vunpack.c.h.b16 %v2842
        %v3963 = vunpack.c.l.b16 %v2843
        %v3964 = vunpack.c.h.b16 %v2843
        %v3965 = vunpack.c.l.b16 %v2844
        %v3966 = vunpack.c.h.b16 %v2844
        %v3967 = vunpack.c.l.b16 %v2845
        %v3968 = vunpack.c.h.b16 %v2845
        %v3969 = vunpack.c.l.b16 %v2846
        %v3970 = vunpack.c.h.b16 %v2846
        %v3971 = vunpack.c.l.b16 %v2847
        %v3972 = vunpack.c.h.b16 %v2847
        %v3973 = vunpack.c.l.b16 %v2848
        %v3974 = vunpack.c.h.b16 %v2848
        %v3975 = vunpack.c.l.b16 %v2849
        %v3976 = vunpack.c.h.b16 %v2849
        %v3977 = vunpack.c.l.b16 %v2850
        %v3978 = vunpack.c.h.b16 %v2850
        %v3979 = vunpack.c.l.b16 %v2851
        %v3980 = vunpack.c.h.b16 %v2851
        %v3981 = vunpack.c.l.b16 %v2852
        %v3982 = vunpack.c.h.b16 %v2852
        %v3983 = vunpack.c.l.b16 %v2853
        %v3984 = vunpack.c.h.b16 %v2853
        %v3985 = vunpack.c.l.b16 %v2854
        %v3986 = vunpack.c.h.b16 %v2854
        %v3987 = vunpack.c.l.b16 %v2855
        %v3988 = vunpack.c.h.b16 %v2855
        %v3989 = vunpack.c.l.b16 %v2856
        %v3990 = vunpack.c.h.b16 %v2856
        %v3991 = vunpack.c.l.b16 %v2857
        %v3992 = vunpack.c.h.b16 %v2857
        %v3993 = vunpack.c.l.b16 %v2858
        %v3994 = vunpack.c.h.b16 %v2858
        %v3995 = vunpack.c.l.b16 %v2859
        %v3996 = vunpack.c.h.b16 %v2859
        %v3997 = vunpack.c.l.b16 %v2860
        %v3998 = vunpack.c.h.b16 %v2860
        %v3999 = vunpack.c.l.b16 %v2861
        %v4000 = vunpack.c.h.b16 %v2861
        %v4001 = vunpack.c.l.b16 %v2862
        %v4002 = vunpack.c.h.b16 %v2862
        %v4003 = vunpack.c.l.b16 %v2863
        %v4004 = vunpack.c.h.b16 %v2863
        %v4005 = vunpack.c.l.b16 %v2864
        %v4006 = vunpack.c.h.b16 %v2864
        %v4007 = vunpack.c.l.b16 %v2865
        %v4008 = vunpack.c.h.b16 %v2865
        %v4009 = vunpack.c.l.b16 %v2866
        %v4010 = vunpack.c.h.b16 %v2866
        %v4011 = vunpack.c.l.b16 %v2867
        %v4012 = vunpack.c.h.b16 %v2867
        %v4013 = vunpack.c.l.b16 %v2868
        %v4014 = vunpack.c.h.b16 %v2868
        %v4015 = vunpack.c.l.b16 %v2869
        %v4016 = vunpack.c.h.b16 %v2869
        %v4017 = vunpack.c.l.b16 %v2870
        %v4018 = vunpack.c.h.b16 %v2870
        %v4019 = vunpack.c.l.b16 %v2871
        %v4020 = vunpack.c.h.b16 %v2871
        %v4021 = vunpack.c.l.b16 %v2872
        %v4022 = vunpack.c.h.b16 %v2872
        %v4023 = vunpack.c.l.b16 %v2873
        %v4024 = vunpack.c.h.b16 %v2873
        %v4025 = vunpack.c.l.b16 %v2874
        %v4026 = vunpack.c.h.b16 %v2874
        %v4027 = vunpack.c.l.b16 %v2875
        %v4028 = vunpack.c.h.b16 %v2875
        %v4029 = vunpack.c.l.b16 %v2876
        %v4030 = vunpack.c.h.b16 %v2876
        %v4031 = vunpack.c.l.b16 %v2877
        %v4032 = vunpack.c.h.b16 %v2877
        %v4033 = vunpack.c.l.b16 %v2878
        %v4034 = vunpack.c.h.b16 %v2878
        %v4035 = vunpack.c.l.b16 %v2879
        %v4036 = vunpack.c.h.b16 %v2879
        %v4037 = vunpack.c.l.b16 %v2880
        %v4038 = vunpack.c.h.b16 %v2880
        %v4039 = vunpack.c.l.b16 %v2881
        %v4040 = vunpack.c.h.b16 %v2881
        %v4041 = vunpack.c.l.b16 %v2882
        %v4042 = vunpack.c.h.b16 %v2882
        %v4043 = vunpack.c.l.b16 %v2883
        %v4044 = vunpack.c.h.b16 %v2883
        %v4045 = vunpack.c.l.b16 %v2884
        %v4046 = vunpack.c.h.b16 %v2884
        %v4047 = vunpack.c.l.b16 %v2885
        %v4048 = vunpack.c.h.b16 %v2885
        %v4049 = vunpack.c.l.b16 %v2886
        %v4050 = vunpack.c.h.b16 %v2886
        %v4051 = vunpack.c.l.b16 %v2887
        %v4052 = vunpack.c.h.b16 %v2887
        %v4053 = vunpack.c.l.b16 %v2888
        %v4054 = vunpack.c.h.b16 %v2888
        %v4055 = vunpack.c.l.b16 %v2889
        %v4056 = vunpack.c.h.b16 %v2889
        %v4057 = vunpack.c.l.b16 %v2890
        %v4058 = vunpack.c.h.b16 %v2890
        %v4059 = vunpack.c.l.b16 %v2891
        %v4060 = vunpack.c.h.b16 %v2891
        %v4061 = vunpack.c.l.b16 %v2892
        %v4062 = vunpack.c.h.b16 %v2892
        %v4063 = vunpack.c.l.b16 %v2893
        %v4064 = vunpack.c.h.b16 %v2893
        %v4065 = vunpack.c.l.b16 %v2894
        %v4066 = vunpack.c.h.b16 %v2894
        %v4067 = vunpack.c.l.b16 %v2895
        %v4068 = vunpack.c.h.b16 %v2895
        %v4069 = vunpack.c.l.b16 %v2896
        %v4070 = vunpack.c.h.b16 %v2896
        %v4071 = vunpack.c.l.b16 %v2897
        %v4072 = vunpack.c.h.b16 %v2897
        %v4073 = vunpack.c.l.b16 %v2898
        %v4074 = vunpack.c.h.b16 %v2898
        %v4075 = vunpack.c.l.b16 %v2899
        %v4076 = vunpack.c.h.b16 %v2899
        %v4077 = vunpack.c.l.b16 %v2900
        %v4078 = vunpack.c.h.b16 %v2900
        %v4079 = vunpack.c.l.b16 %v2901
        %v4080 = vunpack.c.h.b16 %v2901
        %v4081 = vunpack.c.l.b16 %v2902
        %v4082 = vunpack.c.h.b16 %v2902
        %v4083 = vunpack.c.l.b16 %v2903
        %v4084 = vunpack.c.h.b16 %v2903
        %v4085 = vunpack.c.l.b16 %v2904
        %v4086 = vunpack.c.h.b16 %v2904
        %v4087 = vunpack.c.l.b16 %v2905
        %v4088 = vunpack.c.h.b16 %v2905
        %v4089 = vunpack.c.l.b16 %v2906
        %v4090 = vunpack.c.h.b16 %v2906
        %v4091 = vunpack.c.l.b16 %v2907
        %v4092 = vunpack.c.h.b16 %v2907
        %v4093 = vunpack.c.l.b16 %v2908
        %v4094 = vunpack.c.h.b16 %v2908
        %v4095 = vunpack.c.l.b16 %v2909
        %v4096 = vunpack.c.h.b16 %v2909
        %v4097 = vunpack.c.l.b16 %v2910
        %v4098 = vunpack.c.h.b16 %v2910
        %v4099 = vunpack.c.l.b16 %v2911
        %v4100 = vunpack.c.h.b16 %v2911
        %v4101 = vunpack.c.l.b16 %v2912
        %v4102 = vunpack.c.h.b16 %v2912
        %v4103 = vunpack.c.l.b16 %v2913
        %v4104 = vunpack.c.h.b16 %v2913
        %v4105 = vunpack.c.l.b16 %v2914
        %v4106 = vunpack.c.h.b16 %v2914
        %v4107 = vunpack.c.l.b16 %v2915
        %v4108 = vunpack.c.h.b16 %v2915
        %v4109 = vunpack.c.l.b16 %v2916
        %v4110 = vunpack.c.h.b16 %v2916
        %v4111 = vunpack.c.l.b16 %v2917
        %v4112 = vunpack.c.h.b16 %v2917
        %v4113 = vunpack.c.l.b16 %v2918
        %v4114 = vunpack.c.h.b16 %v2918
        %v4115 = vunpack.c.l.b16 %v2919
        %v4116 = vunpack.c.h.b16 %v2919
        %v4117 = vunpack.c.l.b16 %v2920
        %v4118 = vunpack.c.h.b16 %v2920
        %v4119 = vunpack.c.l.b16 %v2921
        %v4120 = vunpack.c.h.b16 %v2921
        %v4121 = vunpack.c.l.b16 %v2922
        %v4122 = vunpack.c.h.b16 %v2922
        %v4123 = vunpack.c.l.b16 %v2923
        %v4124 = vunpack.c.h.b16 %v2923
        %v4125 = vunpack.c.l.b16 %v2924
        %v4126 = vunpack.c.h.b16 %v2924
        %v4127 = vunpack.c.l.b16 %v2925
        %v4128 = vunpack.c.h.b16 %v2925
        %v4129 = vunpack.c.l.b16 %v2926
        %v4130 = vunpack.c.h.b16 %v2926
        %v4131 = vunpack.c.l.b16 %v2927
        %v4132 = vunpack.c.h.b16 %v2927
        %v4133 = vunpack.c.l.b16 %v2928
        %v4134 = vunpack.c.h.b16 %v2928
        %v4135 = vunpack.c.l.b16 %v2929
        %v4136 = vunpack.c.h.b16 %v2929
        %v4137 = vunpack.c.l.b16 %v2930
        %v4138 = vunpack.c.h.b16 %v2930
        %v4139 = vunpack.c.l.b16 %v2931
        %v4140 = vunpack.c.h.b16 %v2931
        %v4141 = vunpack.c.l.b16 %v2932
        %v4142 = vunpack.c.h.b16 %v2932
        %v4143 = vunpack.c.l.b16 %v2933
        %v4144 = vunpack.c.h.b16 %v2933
        %v4145 = vunpack.c.l.b16 %v2934
        %v4146 = vunpack.c.h.b16 %v2934
        %v4147 = vunpack.c.l.b16 %v2935
        %v4148 = vunpack.c.h.b16 %v2935
        %v4149 = vunpack.c.l.b16 %v2936
        %v4150 = vunpack.c.h.b16 %v2936
        %v4151 = vunpack.c.l.b16 %v2937
        %v4152 = vunpack.c.h.b16 %v2937
        %v4153 = vunpack.c.l.b16 %v2938
        %v4154 = vunpack.c.h.b16 %v2938
        %v4155 = vunpack.c.l.b16 %v2939
        %v4156 = vunpack.c.h.b16 %v2939
        %v4157 = vunpack.c.l.b16 %v2940
        %v4158 = vunpack.c.h.b16 %v2940
        %v4159 = vunpack.c.l.b16 %v2941
        %v4160 = vunpack.c.h.b16 %v2941
        %v4161 = vunpack.c.l.b16 %v2942
        %v4162 = vunpack.c.h.b16 %v2942
        %v4163 = vunpack.c.l.b16 %v2943
        %v4164 = vunpack.c.h.b16 %v2943
        %v4165 = vunpack.c.l.b16 %v2944
        %v4166 = vunpack.c.h.b16 %v2944
        %v4167 = vunpack.c.l.b16 %v2945
        %v4168 = vunpack.c.h.b16 %v2945
        %v4169 = vunpack.c.l.b16 %v2946
        %v4170 = vunpack.c.h.b16 %v2946
        %v4171 = vunpack.c.l.b16 %v2947
        %v4172 = vunpack.c.h.b16 %v2947
        %v4173 = vunpack.c.l.b16 %v2948
        %v4174 = vunpack.c.h.b16 %v2948
        %v4175 = vunpack.c.l.b16 %v2949
        %v4176 = vunpack.c.h.b16 %v2949
        %v4177 = vunpack.c.l.b16 %v2950
        %v4178 = vunpack.c.h.b16 %v2950
        %v4179 = vunpack.c.l.b16 %v2951
        %v4180 = vunpack.c.h.b16 %v2951
        %v4181 = vunpack.c.l.b16 %v2952
        %v4182 = vunpack.c.h.b16 %v2952
        %v4183 = vunpack.c.l.b16 %v2953
        %v4184 = vunpack.c.h.b16 %v2953
        %v4185 = vunpack.c.l.b16 %v2954
        %v4186 = vunpack.c.h.b16 %v2954
        %v4187 = vunpack.c.l.b16 %v2955
        %v4188 = vunpack.c.h.b16 %v2955
        %v4189 = vunpack.c.l.b16 %v2956
        %v4190 = vunpack.c.h.b16 %v2956
        %v4191 = vunpack.c.l.b16 %v2957
        %v4192 = vunpack.c.h.b16 %v2957
        %v4193 = vunpack.c.l.b16 %v2958
        %v4194 = vunpack.c.h.b16 %v2958
        %v4195 = vunpack.c.l.b16 %v2959
        %v4196 = vunpack.c.h.b16 %v2959
        %v4197 = vunpack.c.l.b16 %v2960
        %v4198 = vunpack.c.h.b16 %v2960
        %v4199 = vunpack.c.l.b16 %v2961
        %v4200 = vunpack.c.h.b16 %v2961
        %v4201 = vunpack.c.l.b16 %v2962
        %v4202 = vunpack.c.h.b16 %v2962
        %v4203 = vunpack.c.l.b16 %v2963
        %v4204 = vunpack.c.h.b16 %v2963
        %v4205 = vunpack.c.l.b16 %v2964
        %v4206 = vunpack.c.h.b16 %v2964
        %v4207 = vunpack.c.l.b16 %v2965
        %v4208 = vunpack.c.h.b16 %v2965
        %v4209 = vunpack.c.l.b16 %v2966
        %v4210 = vunpack.c.h.b16 %v2966
        %v4211 = vunpack.c.l.b16 %v2967
        %v4212 = vunpack.c.h.b16 %v2967
        %v4213 = vunpack.c.l.b16 %v2968
        %v4214 = vunpack.c.h.b16 %v2968
        %v4215 = vunpack.c.l.b16 %v2969
        %v4216 = vunpack.c.h.b16 %v2969
        %v4217 = vunpack.c.l.b16 %v2970
        %v4218 = vunpack.c.h.b16 %v2970
        %v4219 = vunpack.c.l.b16 %v2971
        %v4220 = vunpack.c.h.b16 %v2971
        %v4221 = vunpack.c.l.b16 %v2972
        %v4222 = vunpack.c.h.b16 %v2972
        %v4223 = vunpack.c.l.b16 %v2973
        %v4224 = vunpack.c.h.b16 %v2973
        %v4225 = vunpack.c.l.b16 %v2974
        %v4226 = vunpack.c.h.b16 %v2974
        %v4227 = vunpack.c.l.b16 %v2975
        %v4228 = vunpack.c.h.b16 %v2975
        %v4229 = vunpack.c.l.b16 %v2976
        %v4230 = vunpack.c.h.b16 %v2976
        %v4231 = vunpack.c.l.b16 %v2977
        %v4232 = vunpack.c.h.b16 %v2977
        %v4233 = vunpack.c.l.b16 %v2978
        %v4234 = vunpack.c.h.b16 %v2978
        %v4235 = vunpack.c.l.b16 %v2979
        %v4236 = vunpack.c.h.b16 %v2979
        %v4237 = vunpack.c.l.b16 %v2980
        %v4238 = vunpack.c.h.b16 %v2980
        %v4239 = vunpack.c.l.b16 %v2981
        %v4240 = vunpack.c.h.b16 %v2981
        %v4241 = vunpack.c.l.b16 %v2982
        %v4242 = vunpack.c.h.b16 %v2982
        %v4243 = vunpack.c.l.b16 %v2983
        %v4244 = vunpack.c.h.b16 %v2983
        %v4245 = vunpack.c.l.b16 %v2984
        %v4246 = vunpack.c.h.b16 %v2984
        %v4247 = vunpack.c.l.b16 %v2985
        %v4248 = vunpack.c.h.b16 %v2985
        %v4249 = vunpack.c.l.b16 %v2986
        %v4250 = vunpack.c.h.b16 %v2986
        %v4251 = vunpack.c.l.b16 %v2987
        %v4252 = vunpack.c.h.b16 %v2987
        %v4253 = vunpack.c.l.b16 %v2988
        %v4254 = vunpack.c.h.b16 %v2988
        %v4255 = vunpack.c.l.b16 %v2989
        %v4256 = vunpack.c.h.b16 %v2989
        %v4257 = vunpack.c.l.b16 %v2990
        %v4258 = vunpack.c.h.b16 %v2990
        %v4259 = vunpack.c.l.b16 %v2991
        %v4260 = vunpack.c.h.b16 %v2991
        %v4261 = vunpack.c.l.b16 %v2992
        %v4262 = vunpack.c.h.b16 %v2992
        %v4263 = vunpack.c.l.b16 %v2993
        %v4264 = vunpack.c.h.b16 %v2993
        %v4265 = vunpack.c.l.b16 %v2994
        %v4266 = vunpack.c.h.b16 %v2994
        %v4267 = vunpack.c.l.b16 %v2995
        %v4268 = vunpack.c.h.b16 %v2995
        %v4269 = vunpack.c.l.b16 %v2996
        %v4270 = vunpack.c.h.b16 %v2996
        %v4271 = vunpack.c.l.b16 %v2997
        %v4272 = vunpack.c.h.b16 %v2997
        %v4273 = vunpack.c.l.b16 %v2998
        %v4274 = vunpack.c.h.b16 %v2998
        %v4275 = vunpack.c.l.b16 %v2999
        %v4276 = vunpack.c.h.b16 %v2999
        %v4277 = vunpack.c.l.b16 %v3000
        %v4278 = vunpack.c.h.b16 %v3000
        %v4279 = vunpack.c.l.b16 %v3001
        %v4280 = vunpack.c.h.b16 %v3001
        %v4281 = vunpack.c.l.b16 %v3002
        %v4282 = vunpack.c.h.b16 %v3002
        %v4283 = vunpack.c.l.b16 %v3003
        %v4284 = vunpack.c.h.b16 %v3003
        %v4285 = vunpack.c.l.b16 %v3004
        %v4286 = vunpack.c.h.b16 %v3004
        %v4287 = vunpack.c.l.b16 %v3005
        %v4288 = vunpack.c.h.b16 %v3005
        %v4289 = vunpack.c.l.b16 %v3006
        %v4290 = vunpack.c.h.b16 %v3006
        %v4291 = vunpack.c.l.b16 %v3007
        %v4292 = vunpack.c.h.b16 %v3007
        %v4293 = vunpack.c.l.b16 %v3008
        %v4294 = vunpack.c.h.b16 %v3008
        %v4295 = vunpack.c.l.b16 %v3009
        %v4296 = vunpack.c.h.b16 %v3009
        %v4297 = vunpack.c.l.b16 %v3010
        %v4298 = vunpack.c.h.b16 %v3010
        %v4299 = vunpack.c.l.b16 %v3011
        %v4300 = vunpack.c.h.b16 %v3011
        %v4301 = vunpack.c.l.b16 %v3012
        %v4302 = vunpack.c.h.b16 %v3012
        %v4303 = vunpack.c.l.b16 %v3013
        %v4304 = vunpack.c.h.b16 %v3013
        %v4305 = vunpack.c.l.b16 %v3014
        %v4306 = vunpack.c.h.b16 %v3014
        %v4307 = vunpack.c.l.b16 %v3015
        %v4308 = vunpack.c.h.b16 %v3015
        %v4309 = vunpack.c.l.b16 %v3016
        %v4310 = vunpack.c.h.b16 %v3016
        %v4311 = vunpack.c.l.b16 %v3017
        %v4312 = vunpack.c.h.b16 %v3017
        %v4313 = vunpack.c.l.b16 %v3018
        %v4314 = vunpack.c.h.b16 %v3018
        %v4315 = vunpack.c.l.b16 %v3019
        %v4316 = vunpack.c.h.b16 %v3019
        %v4317 = vunpack.c.l.b16 %v3020
        %v4318 = vunpack.c.h.b16 %v3020
        %v4319 = vunpack.c.l.b16 %v3021
        %v4320 = vunpack.c.h.b16 %v3021
        %v4321 = vunpack.c.l.b16 %v3022
        %v4322 = vunpack.c.h.b16 %v3022
        %v4323 = vunpack.c.l.b16 %v3023
        %v4324 = vunpack.c.h.b16 %v3023
        %v4325 = vunpack.c.l.b16 %v3024
        %v4326 = vunpack.c.h.b16 %v3024
        %v4327 = vunpack.c.l.b16 %v3025
        %v4328 = vunpack.c.h.b16 %v3025
        %v4329 = vunpack.c.l.b16 %v3026
        %v4330 = vunpack.c.h.b16 %v3026
        %v4331 = vunpack.c.l.b16 %v3027
        %v4332 = vunpack.c.h.b16 %v3027
        %v4333 = vunpack.c.l.b16 %v3028
        %v4334 = vunpack.c.h.b16 %v3028
        %v4335 = vunpack.c.l.b16 %v3029
        %v4336 = vunpack.c.h.b16 %v3029
        %v4337 = vunpack.c.l.b16 %v3030
        %v4338 = vunpack.c.h.b16 %v3030
        %v4339 = vunpack.c.l.b16 %v3031
        %v4340 = vunpack.c.h.b16 %v3031
        %v4341 = vunpack.c.l.b16 %v3032
        %v4342 = vunpack.c.h.b16 %v3032
        %v4343 = vunpack.c.l.b16 %v3033
        %v4344 = vunpack.c.h.b16 %v3033
        %v4345 = vunpack.c.l.b16 %v3034
        %v4346 = vunpack.c.h.b16 %v3034
        %v4347 = vunpack.c.l.b16 %v3035
        %v4348 = vunpack.c.h.b16 %v3035
        %v4349 = vunpack.c.l.b16 %v3036
        %v4350 = vunpack.c.h.b16 %v3036
        %v4351 = vunpack.c.l.b16 %v3037
        %v4352 = vunpack.c.h.b16 %v3037
        %v4353 = vunpack.c.l.b16 %v3038
        %v4354 = vunpack.c.h.b16 %v3038
        %v4355 = vunpack.c.l.b16 %v3039
        %v4356 = vunpack.c.h.b16 %v3039
        %v4357 = vunpack.c.l.b16 %v3040
        %v4358 = vunpack.c.h.b16 %v3040
        %v4359 = vunpack.c.l.b16 %v3041
        %v4360 = vunpack.c.h.b16 %v3041
        %v4361 = vunpack.c.l.b16 %v3042
        %v4362 = vunpack.c.h.b16 %v3042
        %v4363 = vunpack.c.l.b16 %v3043
        %v4364 = vunpack.c.h.b16 %v3043
        %v4365 = vunpack.c.l.b16 %v3044
        %v4366 = vunpack.c.h.b16 %v3044
        %v4367 = vunpack.c.l.b16 %v3045
        %v4368 = vunpack.c.h.b16 %v3045
        %v4369 = vunpack.c.l.b16 %v3046
        %v4370 = vunpack.c.h.b16 %v3046
        %v4371 = vunpack.c.l.b16 %v3047
        %v4372 = vunpack.c.h.b16 %v3047
        %v4373 = vunpack.c.l.b16 %v3048
        %v4374 = vunpack.c.h.b16 %v3048
        %v4375 = vunpack.c.l.b16 %v3049
        %v4376 = vunpack.c.h.b16 %v3049
        %v4377 = vunpack.c.l.b16 %v3050
        %v4378 = vunpack.c.h.b16 %v3050
        %v4379 = vunpack.c.l.b16 %v3051
        %v4380 = vunpack.c.h.b16 %v3051
        %v4381 = vunpack.c.l.b16 %v3052
        %v4382 = vunpack.c.h.b16 %v3052
        %v4383 = vunpack.c.l.b16 %v3053
        %v4384 = vunpack.c.h.b16 %v3053
        %v4385 = vunpack.c.l.b16 %v3054
        %v4386 = vunpack.c.h.b16 %v3054
        %v4387 = vunpack.c.l.b16 %v3055
        %v4388 = vunpack.c.h.b16 %v3055
        %v4389 = vunpack.c.l.b16 %v3056
        %v4390 = vunpack.c.h.b16 %v3056
        %v4391 = vunpack.c.l.b16 %v3057
        %v4392 = vunpack.c.h.b16 %v3057
        %v4393 = vunpack.c.l.b16 %v3058
        %v4394 = vunpack.c.h.b16 %v3058
        %v4395 = vunpack.c.l.b16 %v3059
        %v4396 = vunpack.c.h.b16 %v3059
        %v4397 = vunpack.c.l.b16 %v3060
        %v4398 = vunpack.c.h.b16 %v3060
        %v4399 = vunpack.c.l.b16 %v3061
        %v4400 = vunpack.c.h.b16 %v3061
        %v4401 = vunpack.c.l.b16 %v3062
        %v4402 = vunpack.c.h.b16 %v3062
        %v4403 = vunpack.c.l.b16 %v3063
        %v4404 = vunpack.c.h.b16 %v3063
        %v4405 = vunpack.c.l.b16 %v3064
        %v4406 = vunpack.c.h.b16 %v3064
        %v4407 = vunpack.c.l.b16 %v3065
        %v4408 = vunpack.c.h.b16 %v3065
        %v4409 = vunpack.c.l.b16 %v3066
        %v4410 = vunpack.c.h.b16 %v3066
        %v4411 = vunpack.c.l.b16 %v3067
        %v4412 = vunpack.c.h.b16 %v3067
        %v4413 = vunpack.c.l.b16 %v3068
        %v4414 = vunpack.c.h.b16 %v3068
        %v4415 = vunpack.c.l.b16 %v3069
        %v4416 = vunpack.c.h.b16 %v3069
        %v4417 = vunpack.c.l.b16 %v3070
        %v4418 = vunpack.c.h.b16 %v3070
        %v4419 = vunpack.c.l.b16 %v3071
        %v4420 = vunpack.c.h.b16 %v3071
        %v4421 = vunpack.c.l.b16 %v3072
        %v4422 = vunpack.c.h.b16 %v3072
        %v4423 = vunpack.c.l.b16 %v3073
        %v4424 = vunpack.c.h.b16 %v3073
        %v4425 = vunpack.c.l.b16 %v3074
        %v4426 = vunpack.c.h.b16 %v3074
        %v4427 = vunpack.c.l.b16 %v3075
        %v4428 = vunpack.c.h.b16 %v3075
        %v4429 = vunpack.c.l.b16 %v3076
        %v4430 = vunpack.c.h.b16 %v3076
        %v4431 = vunpack.c.l.b16 %v3077
        %v4432 = vunpack.c.h.b16 %v3077
        %v4433 = vunpack.c.l.b16 %v3078
        %v4434 = vunpack.c.h.b16 %v3078
        %v4435 = vunpack.c.l.b16 %v3079
        %v4436 = vunpack.c.h.b16 %v3079
        %v4437 = vunpack.c.l.b16 %v3080
        %v4438 = vunpack.c.h.b16 %v3080
        %v4439 = vunpack.c.l.b16 %v3081
        %v4440 = vunpack.c.h.b16 %v3081
        %v4441 = vunpack.c.l.b16 %v3082
        %v4442 = vunpack.c.h.b16 %v3082
        %v4443 = vunpack.c.l.b16 %v3083
        %v4444 = vunpack.c.h.b16 %v3083
        %v4445 = vunpack.c.l.b16 %v3084
        %v4446 = vunpack.c.h.b16 %v3084
        %v4447 = vunpack.c.l.b16 %v3085
        %v4448 = vunpack.c.h.b16 %v3085
        %v4449 = vunpack.c.l.b16 %v3086
        %v4450 = vunpack.c.h.b16 %v3086
        %v4451 = vunpack.c.l.b16 %v3087
        %v4452 = vunpack.c.h.b16 %v3087
        %v4453 = vunpack.c.l.b16 %v3088
        %v4454 = vunpack.c.h.b16 %v3088
        %v4455 = vunpack.c.l.b16 %v3089
        %v4456 = vunpack.c.h.b16 %v3089
        %v4457 = vunpack.c.l.b16 %v3090
        %v4458 = vunpack.c.h.b16 %v3090
        %v4459 = vunpack.c.l.b16 %v3091
        %v4460 = vunpack.c.h.b16 %v3091
        %v4461 = vunpack.c.l.b16 %v3092
        %v4462 = vunpack.c.h.b16 %v3092
        %v4463 = vunpack.c.l.b16 %v3093
        %v4464 = vunpack.c.h.b16 %v3093
        %v4465 = vunpack.c.l.b16 %v3094
        %v4466 = vunpack.c.h.b16 %v3094
        %v4467 = vunpack.c.l.b16 %v3095
        %v4468 = vunpack.c.h.b16 %v3095
        %v4469 = vunpack.c.l.b16 %v3096
        %v4470 = vunpack.c.h.b16 %v3096
        %v4471 = vunpack.c.l.b16 %v3097
        %v4472 = vunpack.c.h.b16 %v3097
        %v4473 = vunpack.c.l.b16 %v3098
        %v4474 = vunpack.c.h.b16 %v3098
        %v4475 = vunpack.c.l.b16 %v3099
        %v4476 = vunpack.c.h.b16 %v3099
        %v4477 = vunpack.c.l.b16 %v3100
        %v4478 = vunpack.c.h.b16 %v3100
        %v4479 = vunpack.c.l.b16 %v3101
        %v4480 = vunpack.c.h.b16 %v3101
        %v4481 = vunpack.c.l.b16 %v3102
        %v4482 = vunpack.c.h.b16 %v3102
        %v4483 = vunpack.c.l.b16 %v3103
        %v4484 = vunpack.c.h.b16 %v3103
        %v4485 = vunpack.c.l.b16 %v3104
        %v4486 = vunpack.c.h.b16 %v3104
        %v4487 = vunpack.c.l.b16 %v3105
        %v4488 = vunpack.c.h.b16 %v3105
        %v4489 = vunpack.c.l.b16 %v3106
        %v4490 = vunpack.c.h.b16 %v3106
        %v4491 = vunpack.c.l.b16 %v3107
        %v4492 = vunpack.c.h.b16 %v3107
        %v4493 = vunpack.c.l.b16 %v3108
        %v4494 = vunpack.c.h.b16 %v3108
        %v4495 = vunpack.c.l.b16 %v3109
        %v4496 = vunpack.c.h.b16 %v3109
        %v4497 = vunpack.c.l.b16 %v3110
        %v4498 = vunpack.c.h.b16 %v3110
        %v4499 = vunpack.c.l.b16 %v3111
        %v4500 = vunpack.c.h.b16 %v3111
        %v4501 = vunpack.c.l.b16 %v3112
        %v4502 = vunpack.c.h.b16 %v3112
        %v4503 = vunpack.c.l.b16 %v3113
        %v4504 = vunpack.c.h.b16 %v3113
        %v4505 = vunpack.c.l.b16 %v3114
        %v4506 = vunpack.c.h.b16 %v3114
        %v4507 = vunpack.c.l.b16 %v3115
        %v4508 = vunpack.c.h.b16 %v3115
        %v4509 = vunpack.c.l.b16 %v3116
        %v4510 = vunpack.c.h.b16 %v3116
        %v4511 = vunpack.c.l.b16 %v3117
        %v4512 = vunpack.c.h.b16 %v3117
        %v4513 = vunpack.c.l.b16 %v3118
        %v4514 = vunpack.c.h.b16 %v3118
        %v4515 = vunpack.c.l.b16 %v3119
        %v4516 = vunpack.c.h.b16 %v3119
        %v4517 = vunpack.c.l.b16 %v3120
        %v4518 = vunpack.c.h.b16 %v3120
        %v4519 = vunpack.c.l.b16 %v3121
        %v4520 = vunpack.c.h.b16 %v3121
        %v4521 = vunpack.c.l.b16 %v3122
        %v4522 = vunpack.c.h.b16 %v3122
        %v4523 = vunpack.c.l.b16 %v3123
        %v4524 = vunpack.c.h.b16 %v3123
        %v4525 = vunpack.c.l.b16 %v3124
        %v4526 = vunpack.c.h.b16 %v3124
        %v4527 = vunpack.c.l.b16 %v3125
        %v4528 = vunpack.c.h.b16 %v3125
        %v4529 = vunpack.c.l.b16 %v3126
        %v4530 = vunpack.c.h.b16 %v3126
        %v4531 = vunpack.c.l.b16 %v3127
        %v4532 = vunpack.c.h.b16 %v3127
        %v4533 = vunpack.c.l.b16 %v3128
        %v4534 = vunpack.c.h.b16 %v3128
        %v4535 = vunpack.c.l.b16 %v3129
        %v4536 = vunpack.c.h.b16 %v3129
        %v4537 = vunpack.c.l.b16 %v3130
        %v4538 = vunpack.c.h.b16 %v3130
        %v4539 = vunpack.c.l.b16 %v3131
        %v4540 = vunpack.c.h.b16 %v3131
        %v4541 = vunpack.c.l.b16 %v3132
        %v4542 = vunpack.c.h.b16 %v3132
        %v4543 = vunpack.c.l.b16 %v3133
        %v4544 = vunpack.c.h.b16 %v3133
        %v4545 = vunpack.c.l.b16 %v3134
        %v4546 = vunpack.c.h.b16 %v3134
        %v4547 = vunpack.c.l.b16 %v3135
        %v4548 = vunpack.c.h.b16 %v3135
        %v4549 = vunpack.c.l.b16 %v3136
        %v4550 = vunpack.c.h.b16 %v3136
        %v4551 = vunpack.c.l.b16 %v3137
        %v4552 = vunpack.c.h.b16 %v3137
        %v4553 = vunpack.c.l.b16 %v3138
        %v4554 = vunpack.c.h.b16 %v3138
        %v4555 = vunpack.c.l.b16 %v3139
        %v4556 = vunpack.c.h.b16 %v3139
        %v4557 = vunpack.c.l.b16 %v3140
        %v4558 = vunpack.c.h.b16 %v3140
        %v4559 = vunpack.c.l.b16 %v3141
        %v4560 = vunpack.c.h.b16 %v3141
        %v4561 = vunpack.c.l.b16 %v3142
        %v4562 = vunpack.c.h.b16 %v3142
        %v4563 = vunpack.c.l.b16 %v3143
        %v4564 = vunpack.c.h.b16 %v3143
        %v4565 = vunpack.c.l.b16 %v3144
        %v4566 = vunpack.c.h.b16 %v3144
        %v4567 = vunpack.c.l.b16 %v3145
        %v4568 = vunpack.c.h.b16 %v3145
        %v4569 = vunpack.c.l.b16 %v3146
        %v4570 = vunpack.c.h.b16 %v3146
        %v4571 = vunpack.c.l.b16 %v3147
        %v4572 = vunpack.c.h.b16 %v3147
        %v4573 = vunpack.c.l.b16 %v3148
        %v4574 = vunpack.c.h.b16 %v3148
        %v4575 = vunpack.c.l.b16 %v3149
        %v4576 = vunpack.c.h.b16 %v3149
        %v4577 = vunpack.c.l.b16 %v3150
        %v4578 = vunpack.c.h.b16 %v3150
        %v4579 = vunpack.c.l.b16 %v3151
        %v4580 = vunpack.c.h.b16 %v3151
        %v4581 = vunpack.c.l.b16 %v3152
        %v4582 = vunpack.c.h.b16 %v3152
        %v4583 = vunpack.c.l.b16 %v3153
        %v4584 = vunpack.c.h.b16 %v3153
        %v4585 = vunpack.c.l.b16 %v3154
        %v4586 = vunpack.c.h.b16 %v3154
        %v4587 = vunpack.c.l.b16 %v3155
        %v4588 = vunpack.c.h.b16 %v3155
        %v4589 = vunpack.c.l.b16 %v3156
        %v4590 = vunpack.c.h.b16 %v3156
        %v4591 = vunpack.c.l.b16 %v3157
        %v4592 = vunpack.c.h.b16 %v3157
        %v4593 = vunpack.c.l.b16 %v3158
        %v4594 = vunpack.c.h.b16 %v3158
        %v4595 = vunpack.c.l.b16 %v3159
        %v4596 = vunpack.c.h.b16 %v3159
        %v4597 = vunpack.c.l.b16 %v3160
        %v4598 = vunpack.c.h.b16 %v3160
        %v4599 = vunpack.c.l.b16 %v3161
        %v4600 = vunpack.c.h.b16 %v3161
        %v4601 = vunpack.c.l.b16 %v3162
        %v4602 = vunpack.c.h.b16 %v3162
        %v4603 = vunpack.c.l.b16 %v3163
        %v4604 = vunpack.c.h.b16 %v3163
        %v4605 = vunpack.c.l.b16 %v3164
        %v4606 = vunpack.c.h.b16 %v3164
        %v4607 = vunpack.c.l.b16 %v3165
        %v4608 = vunpack.c.h.b16 %v3165
        %v4609 = vunpack.c.l.b16 %v3166
        %v4610 = vunpack.c.h.b16 %v3166
        %v4611 = vunpack.c.l.b16 %v3167
        %v4612 = vunpack.c.h.b16 %v3167
        %v4613 = vunpack.c.l.b16 %v3168
        %v4614 = vunpack.c.h.b16 %v3168
        %v4615 = vunpack.c.l.b16 %v3169
        %v4616 = vunpack.c.h.b16 %v3169
        %v4617 = vunpack.c.l.b16 %v3170
        %v4618 = vunpack.c.h.b16 %v3170
        %v4619 = vunpack.c.l.b16 %v3171
        %v4620 = vunpack.c.h.b16 %v3171
        %v4621 = vunpack.c.l.b16 %v3172
        %v4622 = vunpack.c.h.b16 %v3172
        %v4623 = vunpack.c.l.b16 %v3173
        %v4624 = vunpack.c.h.b16 %v3173
        %v4625 = vunpack.c.l.b16 %v3174
        %v4626 = vunpack.c.h.b16 %v3174
        %v4627 = vunpack.c.l.b16 %v3175
        %v4628 = vunpack.c.h.b16 %v3175
        %v4629 = vunpack.c.l.b16 %v3176
        %v4630 = vunpack.c.h.b16 %v3176
        %v4631 = vunpack.c.l.b16 %v3177
        %v4632 = vunpack.c.h.b16 %v3177
        %v4633 = vunpack.c.l.b16 %v3178
        %v4634 = vunpack.c.h.b16 %v3178
        %v4635 = vunpack.c.l.b16 %v3179
        %v4636 = vunpack.c.h.b16 %v3179
        %v4637 = vunpack.c.l.b16 %v3180
        %v4638 = vunpack.c.h.b16 %v3180
        %v4639 = vunpack.c.l.b16 %v3181
        %v4640 = vunpack.c.h.b16 %v3181
        %v4641 = vunpack.c.l.b16 %v3182
        %v4642 = vunpack.c.h.b16 %v3182
        %v4643 = vunpack.c.l.b16 %v3183
        %v4644 = vunpack.c.h.b16 %v3183
        %v4645 = vunpack.c.l.b16 %v3184
        %v4646 = vunpack.c.h.b16 %v3184
        %v4647 = vunpack.c.l.b16 %v3185
        %v4648 = vunpack.c.h.b16 %v3185
        %v4649 = vunpack.c.l.b16 %v3186
        %v4650 = vunpack.c.h.b16 %v3186
        %v4651 = vunpack.c.l.b16 %v3187
        %v4652 = vunpack.c.h.b16 %v3187
        %v4653 = vunpack.c.l.b16 %v3188
        %v4654 = vunpack.c.h.b16 %v3188
        %v4655 = vunpack.c.l.b16 %v3189
        %v4656 = vunpack.c.h.b16 %v3189
        %v4657 = vunpack.c.l.b16 %v3190
        %v4658 = vunpack.c.h.b16 %v3190
        %v4659 = vunpack.c.l.b16 %v3191
        %v4660 = vunpack.c.h.b16 %v3191
        %v4661 = vunpack.c.l.b16 %v3192
        %v4662 = vunpack.c.h.b16 %v3192
        %v4663 = vunpack.c.l.b16 %v3193
        %v4664 = vunpack.c.h.b16 %v3193
        %v4665 = vunpack.c.l.b16 %v3194
        %v4666 = vunpack.c.h.b16 %v3194
        %v4667 = vunpack.c.l.b16 %v3195
        %v4668 = vunpack.c.h.b16 %v3195
        %v4669 = vunpack.c.l.b16 %v3196
        %v4670 = vunpack.c.h.b16 %v3196
        %v4671 = vunpack.c.l.b16 %v3197
        %v4672 = vunpack.c.h.b16 %v3197
        %v4673 = vunpack.c.l.b16 %v3198
        %v4674 = vunpack.c.h.b16 %v3198
        %v4675 = vunpack.c.l.b16 %v3199
        %v4676 = vunpack.c.h.b16 %v3199
        %v4677 = vunpack.c.l.b16 %v3200
        %v4678 = vunpack.c.h.b16 %v3200
        %v4679 = vunpack.c.l.b16 %v3201
        %v4680 = vunpack.c.h.b16 %v3201
        %v4681 = vunpack.c.l.b16 %v3202
        %v4682 = vunpack.c.h.b16 %v3202
        %v4683 = vunpack.c.l.b16 %v3203
        %v4684 = vunpack.c.h.b16 %v3203
        %v4685 = vunpack.c.l.b16 %v3204
        %v4686 = vunpack.c.h.b16 %v3204
        %v4687 = vunpack.c.l.b16 %v3205
        %v4688 = vunpack.c.h.b16 %v3205
        %v4689 = vunpack.c.l.b16 %v3206
        %v4690 = vunpack.c.h.b16 %v3206
        %v4691 = vunpack.c.l.b16 %v3207
        %v4692 = vunpack.c.h.b16 %v3207
        %v4693 = vunpack.c.l.b16 %v3208
        %v4694 = vunpack.c.h.b16 %v3208
        %v4695 = vunpack.c.l.b16 %v3209
        %v4696 = vunpack.c.h.b16 %v3209
        %v4697 = vunpack.c.l.b16 %v3210
        %v4698 = vunpack.c.h.b16 %v3210
        %v4699 = vunpack.c.l.b16 %v3211
        %v4700 = vunpack.c.h.b16 %v3211
        %v4701 = vunpack.c.l.b16 %v3212
        %v4702 = vunpack.c.h.b16 %v3212
        %v4703 = vunpack.c.l.b16 %v3213
        %v4704 = vunpack.c.h.b16 %v3213
        %v4705 = vunpack.c.l.b16 %v3214
        %v4706 = vunpack.c.h.b16 %v3214
        %v4707 = vunpack.c.l.b16 %v3215
        %v4708 = vunpack.c.h.b16 %v3215
        %v4709 = vunpack.c.l.b16 %v3216
        %v4710 = vunpack.c.h.b16 %v3216
        %v4711 = vunpack.c.l.b16 %v3217
        %v4712 = vunpack.c.h.b16 %v3217
        %v4713 = vunpack.c.l.b16 %v3218
        %v4714 = vunpack.c.h.b16 %v3218
        %v4715 = vunpack.c.l.b16 %v3219
        %v4716 = vunpack.c.h.b16 %v3219
        %v4717 = vunpack.c.l.b16 %v3220
        %v4718 = vunpack.c.h.b16 %v3220
        %v4719 = vunpack.c.l.b16 %v3221
        %v4720 = vunpack.c.h.b16 %v3221
        %v4721 = vunpack.c.l.b16 %v3222
        %v4722 = vunpack.c.h.b16 %v3222
        %v4723 = vunpack.c.l.b16 %v3223
        %v4724 = vunpack.c.h.b16 %v3223
        %v4725 = vunpack.c.l.b16 %v3224
        %v4726 = vunpack.c.h.b16 %v3224
        %v4727 = vunpack.c.l.b16 %v3225
        %v4728 = vunpack.c.h.b16 %v3225
        %v4729 = vunpack.c.l.b16 %v3226
        %v4730 = vunpack.c.h.b16 %v3226
        %v4731 = vunpack.c.l.b16 %v3227
        %v4732 = vunpack.c.h.b16 %v3227
        %v4733 = vunpack.c.l.b16 %v3228
        %v4734 = vunpack.c.h.b16 %v3228
        %v4735 = vunpack.c.l.b16 %v3229
        %v4736 = vunpack.c.h.b16 %v3229
        %v4737 = vunpack.c.l.b16 %v3230
        %v4738 = vunpack.c.h.b16 %v3230
        %v4739 = vunpack.c.l.b16 %v3231
        %v4740 = vunpack.c.h.b16 %v3231
        %v4741 = vunpack.c.l.b16 %v3232
        %v4742 = vunpack.c.h.b16 %v3232
        %v4743 = vunpack.c.l.b16 %v3233
        %v4744 = vunpack.c.h.b16 %v3233
        %v4745 = vunpack.c.l.b16 %v3234
        %v4746 = vunpack.c.h.b16 %v3234
        %v4747 = vunpack.c.l.b16 %v3235
        %v4748 = vunpack.c.h.b16 %v3235
        %v4749 = vunpack.c.l.b16 %v3236
        %v4750 = vunpack.c.h.b16 %v3236
        %v4751 = vunpack.c.l.b16 %v3237
        %v4752 = vunpack.c.h.b16 %v3237
        %v4753 = vunpack.c.l.b16 %v3238
        %v4754 = vunpack.c.h.b16 %v3238
        %v4755 = vunpack.c.l.b16 %v3239
        %v4756 = vunpack.c.h.b16 %v3239
        %v4757 = vunpack.c.l.b16 %v3240
        %v4758 = vunpack.c.h.b16 %v3240
        %v4759 = vunpack.c.l.b16 %v3241
        %v4760 = vunpack.c.h.b16 %v3241
        %v4761 = vunpack.c.l.b16 %v3242
        %v4762 = vunpack.c.h.b16 %v3242
        %v4763 = vunpack.c.l.b16 %v3243
        %v4764 = vunpack.c.h.b16 %v3243
        %v4765 = vunpack.c.l.b16 %v3244
        %v4766 = vunpack.c.h.b16 %v3244
        %v4767 = vunpack.c.l.b16 %v3245
        %v4768 = vunpack.c.h.b16 %v3245
        %v4769 = vunpack.c.l.b16 %v3246
        %v4770 = vunpack.c.h.b16 %v3246
        %v4771 = vunpack.c.l.b16 %v3247
        %v4772 = vunpack.c.h.b16 %v3247
        %v4773 = vunpack.c.l.b16 %v3248
        %v4774 = vunpack.c.h.b16 %v3248
        %v4775 = vunpack.c.l.b16 %v3249
        %v4776 = vunpack.c.h.b16 %v3249
        %v4777 = vunpack.c.l.b16 %v3250
        %v4778 = vunpack.c.h.b16 %v3250
        %v4779 = vunpack.c.l.b16 %v3251
        %v4780 = vunpack.c.h.b16 %v3251
        %v4781 = vunpack.c.l.b16 %v3252
        %v4782 = vunpack.c.h.b16 %v3252
        %v4783 = vunpack.c.l.b16 %v3253
        %v4784 = vunpack.c.h.b16 %v3253
        %v4785 = vunpack.c.l.b16 %v3254
        %v4786 = vunpack.c.h.b16 %v3254
        %v4787 = vunpack.c.l.b16 %v3255
        %v4788 = vunpack.c.h.b16 %v3255
        %v4789 = vunpack.c.l.b16 %v3256
        %v4790 = vunpack.c.h.b16 %v3256
        %v4791 = vunpack.c.l.b16 %v3257
        %v4792 = vunpack.c.h.b16 %v3257
        %v4793 = vunpack.c.l.b16 %v3258
        %v4794 = vunpack.c.h.b16 %v3258
        %v4795 = vunpack.c.l.b16 %v3259
        %v4796 = vunpack.c.h.b16 %v3259
        %v4797 = vunpack.c.l.b16 %v3260
        %v4798 = vunpack.c.h.b16 %v3260
        %v4799 = vunpack.c.l.b16 %v3261
        %v4800 = vunpack.c.h.b16 %v3261
        %v4801 = vunpack.c.l.b16 %v3262
        %v4802 = vunpack.c.h.b16 %v3262
        %v4803 = vunpack.c.l.b16 %v3263
        %v4804 = vunpack.c.h.b16 %v3263
        %v4805 = vunpack.c.l.b16 %v3264
        %v4806 = vunpack.c.h.b16 %v3264
        %v4807 = vunpack.c.l.b16 %v3265
        %v4808 = vunpack.c.h.b16 %v3265
        %v4809 = vunpack.c.l.b16 %v3266
        %v4810 = vunpack.c.h.b16 %v3266
        %v4811 = vunpack.c.l.b16 %v3267
        %v4812 = vunpack.c.h.b16 %v3267
        %v4813 = vunpack.c.l.b16 %v3268
        %v4814 = vunpack.c.h.b16 %v3268
        %v4815 = vunpack.c.l.b16 %v3269
        %v4816 = vunpack.c.h.b16 %v3269
        %v4817 = vunpack.c.l.b16 %v3270
        %v4818 = vunpack.c.h.b16 %v3270
        %v4819 = vunpack.c.l.b16 %v3271
        %v4820 = vunpack.c.h.b16 %v3271
        %v4821 = vunpack.c.l.b16 %v3272
        %v4822 = vunpack.c.h.b16 %v3272
        %v4823 = vunpack.c.l.b16 %v3273
        %v4824 = vunpack.c.h.b16 %v3273
        %v4825 = vunpack.c.l.b16 %v3274
        %v4826 = vunpack.c.h.b16 %v3274
        %v4827 = vunpack.c.l.b16 %v3275
        %v4828 = vunpack.c.h.b16 %v3275
        %v4829 = vunpack.c.l.b16 %v3276
        %v4830 = vunpack.c.h.b16 %v3276
        %v4831 = vunpack.c.l.b16 %v3277
        %v4832 = vunpack.c.h.b16 %v3277
        %v4833 = vunpack.c.l.b16 %v3278
        %v4834 = vunpack.c.h.b16 %v3278
        %v4835 = vunpack.c.l.b16 %v3279
        %v4836 = vunpack.c.h.b16 %v3279
        %v4837 = vunpack.c.l.b16 %v3280
        %v4838 = vunpack.c.h.b16 %v3280
        %v4839 = vunpack.c.l.b16 %v3281
        %v4840 = vunpack.c.h.b16 %v3281
        %v4841 = vunpack.c.l.b16 %v3282
        %v4842 = vunpack.c.h.b16 %v3282
        %v4843 = vunpack.c.l.b16 %v3283
        %v4844 = vunpack.c.h.b16 %v3283
        %v4845 = vunpack.c.l.b16 %v3284
        %v4846 = vunpack.c.h.b16 %v3284
        %v4847 = vunpack.c.l.b16 %v3285
        %v4848 = vunpack.c.h.b16 %v3285
        %v4849 = vunpack.c.l.b16 %v3286
        %v4850 = vunpack.c.h.b16 %v3286
        %v4851 = vunpack.c.l.b16 %v3287
        %v4852 = vunpack.c.h.b16 %v3287
        %v4853 = vunpack.c.l.b16 %v3288
        %v4854 = vunpack.c.h.b16 %v3288
        %v4855 = vunpack.c.l.b16 %v3289
        %v4856 = vunpack.c.h.b16 %v3289
        %v4857 = vunpack.c.l.b16 %v3290
        %v4858 = vunpack.c.h.b16 %v3290
        %v4859 = vunpack.c.l.b16 %v3291
        %v4860 = vunpack.c.h.b16 %v3291
        %v4861 = vunpack.c.l.b16 %v3292
        %v4862 = vunpack.c.h.b16 %v3292
        %v4863 = vunpack.c.l.b16 %v3293
        %v4864 = vunpack.c.h.b16 %v3293
        %v4865 = vunpack.c.l.b16 %v3294
        %v4866 = vunpack.c.h.b16 %v3294
        %v4867 = vunpack.c.l.b16 %v3295
        %v4868 = vunpack.c.h.b16 %v3295
        %v4869 = vunpack.c.l.b16 %v3296
        %v4870 = vunpack.c.h.b16 %v3296
        %v4871 = vunpack.c.l.b16 %v3297
        %v4872 = vunpack.c.h.b16 %v3297
        %v4873 = vunpack.c.l.b16 %v3298
        %v4874 = vunpack.c.h.b16 %v3298
        %v4875 = vunpack.c.l.b16 %v3299
        %v4876 = vunpack.c.h.b16 %v3299
        %v4877 = vunpack.c.l.b16 %v3300
        %v4878 = vunpack.c.h.b16 %v3300
        %v4879 = vunpack.c.l.b16 %v3301
        %v4880 = vunpack.c.h.b16 %v3301
        %v4881 = vunpack.c.l.b16 %v3302
        %v4882 = vunpack.c.h.b16 %v3302
        %v4883 = vunpack.c.l.b16 %v3303
        %v4884 = vunpack.c.h.b16 %v3303
        %v4885 = vunpack.c.l.b16 %v3304
        %v4886 = vunpack.c.h.b16 %v3304
        %v4887 = vunpack.c.l.b16 %v3305
        %v4888 = vunpack.c.h.b16 %v3305
        %v4889 = vunpack.c.l.b16 %v3306
        %v4890 = vunpack.c.h.b16 %v3306
        %v4891 = vunpack.c.l.b16 %v3307
        %v4892 = vunpack.c.h.b16 %v3307
        %v4893 = vunpack.c.l.b16 %v3308
        %v4894 = vunpack.c.h.b16 %v3308
        %v4895 = vunpack.c.l.b16 %v3309
        %v4896 = vunpack.c.h.b16 %v3309
        %v4897 = vunpack.c.l.b16 %v3310
        %v4898 = vunpack.c.h.b16 %v3310
        %v4899 = vunpack.c.l.b16 %v3311
        %v4900 = vunpack.c.h.b16 %v3311
        %v4901 = vunpack.c.l.b16 %v3312
        %v4902 = vunpack.c.h.b16 %v3312
        %v4903 = vunpack.c.l.b16 %v3313
        %v4904 = vunpack.c.h.b16 %v3313
        %v4905 = vunpack.c.l.b16 %v3314
        %v4906 = vunpack.c.h.b16 %v3314
        %v4907 = vunpack.c.l.b16 %v3315
        %v4908 = vunpack.c.h.b16 %v3315
        %v4909 = vunpack.c.l.b16 %v3316
        %v4910 = vunpack.c.h.b16 %v3316
        %v4911 = vunpack.c.l.b16 %v3317
        %v4912 = vunpack.c.h.b16 %v3317
        %v4913 = vunpack.c.l.b16 %v3318
        %v4914 = vunpack.c.h.b16 %v3318
        %v4915 = vunpack.c.l.b16 %v3319
        %v4916 = vunpack.c.h.b16 %v3319
        %v4917 = vunpack.c.l.b16 %v3320
        %v4918 = vunpack.c.h.b16 %v3320
        %v4919 = vunpack.c.l.b16 %v3321
        %v4920 = vunpack.c.h.b16 %v3321
        %v4921 = vunpack.c.l.b16 %v3322
        %v4922 = vunpack.c.h.b16 %v3322
        %v4923 = vunpack.c.l.b16 %v3323
        %v4924 = vunpack.c.h.b16 %v3323
        %v4925 = vunpack.c.l.b16 %v3324
        %v4926 = vunpack.c.h.b16 %v3324
        %v4927 = vunpack.c.l.b16 %v3325
        %v4928 = vunpack.c.h.b16 %v3325
        %v4929 = vunpack.c.l.b16 %v3326
        %v4930 = vunpack.c.h.b16 %v3326
        %v4931 = vunpack.c.l.b16 %v3327
        %v4932 = vunpack.c.h.b16 %v3327
        %v4933 = vunpack.c.l.b16 %v3328
        %v4934 = vunpack.c.h.b16 %v3328
        %v4935 = vunpack.c.l.b16 %v3329
        %v4936 = vunpack.c.h.b16 %v3329
        %v4937 = vunpack.c.l.b16 %v3330
        %v4938 = vunpack.c.h.b16 %v3330
        %v4939 = vunpack.c.l.b16 %v3331
        %v4940 = vunpack.c.h.b16 %v3331
        %v4941 = vunpack.c.l.b16 %v3332
        %v4942 = vunpack.c.h.b16 %v3332
        %v4943 = vunpack.c.l.b16 %v3333
        %v4944 = vunpack.c.h.b16 %v3333
        %v4945 = vunpack.c.l.b16 %v3334
        %v4946 = vunpack.c.h.b16 %v3334
        %v4947 = vunpack.c.l.b16 %v3335
        %v4948 = vunpack.c.h.b16 %v3335
        %v4949 = vunpack.c.l.b16 %v3336
        %v4950 = vunpack.c.h.b16 %v3336
        %v4951 = vunpack.c.l.b16 %v3337
        %v4952 = vunpack.c.h.b16 %v3337
        %v4953 = vunpack.c.l.b16 %v3338
        %v4954 = vunpack.c.h.b16 %v3338
        %v4955 = vunpack.c.l.b16 %v3339
        %v4956 = vunpack.c.h.b16 %v3339
        %v4957 = vunpack.c.l.b16 %v3340
        %v4958 = vunpack.c.h.b16 %v3340
        %v4959 = vunpack.c.l.b16 %v3341
        %v4960 = vunpack.c.h.b16 %v3341
        %v4961 = vunpack.c.l.b16 %v3342
        %v4962 = vunpack.c.h.b16 %v3342
        %v4963 = vpack.c.b16 %v3955, %v3939
        %v4964 = vpack.c.b16 %v3956, %v3940
        %v4965 = vpack.c.b16 %v3957, %v3941
        %v4966 = vpack.c.b16 %v3958, %v3942
        %v4967 = vpack.c.b16 %v3959, %v3943
        %v4968 = vpack.c.b16 %v3960, %v3944
        %v4969 = vpack.c.b16 %v3961, %v3945
        %v4970 = vpack.c.b16 %v3962, %v3946
        %v4971 = vpack.c.b16 %v3963, %v3947
        %v4972 = vpack.c.b16 %v3964, %v3948
        %v4973 = vpack.c.b16 %v3965, %v3949
        %v4974 = vpack.c.b16 %v3966, %v3950
        %v4975 = vpack.c.b16 %v3967, %v3951
        %v4976 = vpack.c.b16 %v3968, %v3952
        %v4977 = vpack.c.b16 %v3969, %v3953
        %v4978 = vpack.c.b16 %v3970, %v3954
        %v4979 = vpack.c.b16 %v3987, %v3971
        %v4980 = vpack.c.b16 %v3988, %v3972
        %v4981 = vpack.c.b16 %v3989, %v3973
        %v4982 = vpack.c.b16 %v3990, %v3974
        %v4983 = vpack.c.b16 %v3991, %v3975
        %v4984 = vpack.c.b16 %v3992, %v3976
        %v4985 = vpack.c.b16 %v3993, %v3977
        %v4986 = vpack.c.b16 %v3994, %v3978
        %v4987 = vpack.c.b16 %v3995, %v3979
        %v4988 = vpack.c.b16 %v3996, %v3980
        %v4989 = vpack.c.b16 %v3997, %v3981
        %v4990 = vpack.c.b16 %v3998, %v3982
        %v4991 = vpack.c.b16 %v3999, %v3983
        %v4992 = vpack.c.b16 %v4000, %v3984
        %v4993 = vpack.c.b16 %v4001, %v3985
        %v4994 = vpack.c.b16 %v4002, %v3986
        %v4995 = vpack.c.b16 %v4019, %v4003
        %v4996 = vpack.c.b16 %v4020, %v4004
        %v4997 = vpack.c.b16 %v4021, %v4005
        %v4998 = vpack.c.b16 %v4022, %v4006
        %v4999 = vpack.c.b16 %v4023, %v4007
        %v5000 = vpack.c.b16 %v4024, %v4008
        %v5001 = vpack.c.b16 %v4025, %v4009
        %v5002 = vpack.c.b16 %v4026, %v4010
        %v5003 = vpack.c.b16 %v4027, %v4011
        %v5004 = vpack.c.b16 %v4028, %v4012
        %v5005 = vpack.c.b16 %v4029, %v4013
        %v5006 = vpack.c.b16 %v4030, %v4014
        %v5007 = vpack.c.b16 %v4031, %v4015
        %v5008 = vpack.c.b16 %v4032, %v4016
        %v5009 = vpack.c.b16 %v4033, %v4017
        %v5010 = vpack.c.b16 %v4034, %v4018
        %v5011 = vpack.c.b16 %v4051, %v4035
        %v5012 = vpack.c.b16 %v4052, %v4036
        %v5013 = vpack.c.b16 %v4053, %v4037
        %v5014 = vpack.c.b16 %v4054, %v4038
        %v5015 = vpack.c.b16 %v4055, %v4039
        %v5016 = vpack.c.b16 %v4056, %v4040
        %v5017 = vpack.c.b16 %v4057, %v4041
        %v5018 = vpack.c.b16 %v4058, %v4042
        %v5019 = vpack.c.b16 %v4059, %v4043
        %v5020 = vpack.c.b16 %v4060, %v4044
        %v5021 = vpack.c.b16 %v4061, %v4045
        %v5022 = vpack.c.b16 %v4062, %v4046
        %v5023 = vpack.c.b16 %v4063, %v4047
        %v5024 = vpack.c.b16 %v4064, %v4048
        %v5025 = vpack.c.b16 %v4065, %v4049
        %v5026 = vpack.c.b16 %v4066, %v4050
        %v5027 = vpack.c.b16 %v4083, %v4067
        %v5028 = vpack.c.b16 %v4084, %v4068
        %v5029 = vpack.c.b16 %v4085, %v4069
        %v5030 = vpack.c.b16 %v4086, %v4070
        %v5031 = vpack.c.b16 %v4087, %v4071
        %v5032 = vpack.c.b16 %v4088, %v4072
        %v5033 = vpack.c.b16 %v4089, %v4073
        %v5034 = vpack.c.b16 %v4090, %v4074
        %v5035 = vpack.c.b16 %v4091, %v4075
        %v5036 = vpack.c.b16 %v4092, %v4076
        %v5037 = vpack.c.b16 %v4093, %v4077
        %v5038 = vpack.c.b16 %v4094, %v4078
        %v5039 = vpack.c.b16 %v4095, %v4079
        %v5040 = vpack.c.b16 %v4096, %v4080
        %v5041 = vpack.c.b16 %v4097, %v4081
        %v5042 = vpack.c.b16 %v4098, %v4082
        %v5043 = vpack.c.b16 %v4115, %v4099
        %v5044 = vpack.c.b16 %v4116, %v4100
        %v5045 = vpack.c.b16 %v4117, %v4101
        %v5046 = vpack.c.b16 %v4118, %v4102
        %v5047 = vpack.c.b16 %v4119, %v4103
        %v5048 = vpack.c.b16 %v4120, %v4104
        %v5049 = vpack.c.b16 %v4121, %v4105
        %v5050 = vpack.c.b16 %v4122, %v4106
        %v5051 = vpack.c.b16 %v4123, %v4107
        %v5052 = vpack.c.b16 %v4124, %v4108
        %v5053 = vpack.c.b16 %v4125, %v4109
        %v5054 = vpack.c.b16 %v4126, %v4110
        %v5055 = vpack.c.b16 %v4127, %v4111
        %v5056 = vpack.c.b16 %v4128, %v4112
        %v5057 = vpack.c.b16 %v4129, %v4113
        %v5058 = vpack.c.b16 %v4130, %v4114
        %v5059 = vpack.c.b16 %v4147, %v4131
        %v5060 = vpack.c.b16 %v4148, %v4132
        %v5061 = vpack.c.b16 %v4149, %v4133
        %v5062 = vpack.c.b16 %v4150, %v4134
        %v5063 = vpack.c.b16 %v4151, %v4135
        %v5064 = vpack.c.b16 %v4152, %v4136
        %v5065 = vpack.c.b16 %v4153, %v4137
        %v5066 = vpack.c.b16 %v4154, %v4138
        %v5067 = vpack.c.b16 %v4155, %v4139
        %v5068 = vpack.c.b16 %v4156, %v4140
        %v5069 = vpack.c.b16 %v4157, %v4141
        %v5070 = vpack.c.b16 %v4158, %v4142
        %v5071 = vpack.c.b16 %v4159, %v4143
        %v5072 = vpack.c.b16 %v4160, %v4144
        %v5073 = vpack.c.b16 %v4161, %v4145
        %v5074 = vpack.c.b16 %v4162, %v4146
        %v5075 = vpack.c.b16 %v4179, %v4163
        %v5076 = vpack.c.b16 %v4180, %v4164
        %v5077 = vpack.c.b16 %v4181, %v4165
        %v5078 = vpack.c.b16 %v4182, %v4166
        %v5079 = vpack.c.b16 %v4183, %v4167
        %v5080 = vpack.c.b16 %v4184, %v4168
        %v5081 = vpack.c.b16 %v4185, %v4169
        %v5082 = vpack.c.b16 %v4186, %v4170
        %v5083 = vpack.c.b16 %v4187, %v4171
        %v5084 = vpack.c.b16 %v4188, %v4172
        %v5085 = vpack.c.b16 %v4189, %v4173
        %v5086 = vpack.c.b16 %v4190, %v4174
        %v5087 = vpack.c.b16 %v4191, %v4175
        %v5088 = vpack.c.b16 %v4192, %v4176
        %v5089 = vpack.c.b16 %v4193, %v4177
        %v5090 = vpack.c.b16 %v4194, %v4178
        %v5091 = vpack.c.b16 %v4211, %v4195
        %v5092 = vpack.c.b16 %v4212, %v4196
        %v5093 = vpack.c.b16 %v4213, %v4197
        %v5094 = vpack.c.b16 %v4214, %v4198
        %v5095 = vpack.c.b16 %v4215, %v4199
        %v5096 = vpack.c.b16 %v4216, %v4200
        %v5097 = vpack.c.b16 %v4217, %v4201
        %v5098 = vpack.c.b16 %v4218, %v4202
        %v5099 = vpack.c.b16 %v4219, %v4203
        %v5100 = vpack.c.b16 %v4220, %v4204
        %v5101 = vpack.c.b16 %v4221, %v4205
        %v5102 = vpack.c.b16 %v4222, %v4206
        %v5103 = vpack.c.b16 %v4223, %v4207
        %v5104 = vpack.c.b16 %v4224, %v4208
        %v5105 = vpack.c.b16 %v4225, %v4209
        %v5106 = vpack.c.b16 %v4226, %v4210
        %v5107 = vpack.c.b16 %v4243, %v4227
        %v5108 = vpack.c.b16 %v4244, %v4228
        %v5109 = vpack.c.b16 %v4245, %v4229
        %v5110 = vpack.c.b16 %v4246, %v4230
        %v5111 = vpack.c.b16 %v4247, %v4231
        %v5112 = vpack.c.b16 %v4248, %v4232
        %v5113 = vpack.c.b16 %v4249, %v4233
        %v5114 = vpack.c.b16 %v4250, %v4234
        %v5115 = vpack.c.b16 %v4251, %v4235
        %v5116 = vpack.c.b16 %v4252, %v4236
        %v5117 = vpack.c.b16 %v4253, %v4237
        %v5118 = vpack.c.b16 %v4254, %v4238
        %v5119 = vpack.c.b16 %v4255, %v4239
        %v5120 = vpack.c.b16 %v4256, %v4240
        %v5121 = vpack.c.b16 %v4257, %v4241
        %v5122 = vpack.c.b16 %v4258, %v4242
        %v5123 = vpack.c.b16 %v4275, %v4259
        %v5124 = vpack.c.b16 %v4276, %v4260
        %v5125 = vpack.c.b16 %v4277, %v4261
        %v5126 = vpack.c.b16 %v4278, %v4262
        %v5127 = vpack.c.b16 %v4279, %v4263
        %v5128 = vpack.c.b16 %v4280, %v4264
        %v5129 = vpack.c.b16 %v4281, %v4265
        %v5130 = vpack.c.b16 %v4282, %v4266
        %v5131 = vpack.c.b16 %v4283, %v4267
        %v5132 = vpack.c.b16 %v4284, %v4268
        %v5133 = vpack.c.b16 %v4285, %v4269
        %v5134 = vpack.c.b16 %v4286, %v4270
        %v5135 = vpack.c.b16 %v4287, %v4271
        %v5136 = vpack.c.b16 %v4288, %v4272
        %v5137 = vpack.c.b16 %v4289, %v4273
        %v5138 = vpack.c.b16 %v4290, %v4274
        %v5139 = vpack.c.b16 %v4307, %v4291
        %v5140 = vpack.c.b16 %v4308, %v4292
        %v5141 = vpack.c.b16 %v4309, %v4293
        %v5142 = vpack.c.b16 %v4310, %v4294
        %v5143 = vpack.c.b16 %v4311, %v4295
        %v5144 = vpack.c.b16 %v4312, %v4296
        %v5145 = vpack.c.b16 %v4313, %v4297
        %v5146 = vpack.c.b16 %v4314, %v4298
        %v5147 = vpack.c.b16 %v4315, %v4299
        %v5148 = vpack.c.b16 %v4316, %v4300
        %v5149 = vpack.c.b16 %v4317, %v4301
        %v5150 = vpack.c.b16 %v4318, %v4302
        %v5151 = vpack.c.b16 %v4319, %v4303
        %v5152 = vpack.c.b16 %v4320, %v4304
        %v5153 = vpack.c.b16 %v4321, %v4305
        %v5154 = vpack.c.b16 %v4322, %v4306
        %v5155 = vpack.c.b16 %v4339, %v4323
        %v5156 = vpack.c.b16 %v4340, %v4324
        %v5157 = vpack.c.b16 %v4341, %v4325
        %v5158 = vpack.c.b16 %v4342, %v4326
        %v5159 = vpack.c.b16 %v4343, %v4327
        %v5160 = vpack.c.b16 %v4344, %v4328
        %v5161 = vpack.c.b16 %v4345, %v4329
        %v5162 = vpack.c.b16 %v4346, %v4330
        %v5163 = vpack.c.b16 %v4347, %v4331
        %v5164 = vpack.c.b16 %v4348, %v4332
        %v5165 = vpack.c.b16 %v4349, %v4333
        %v5166 = vpack.c.b16 %v4350, %v4334
        %v5167 = vpack.c.b16 %v4351, %v4335
        %v5168 = vpack.c.b16 %v4352, %v4336
        %v5169 = vpack.c.b16 %v4353, %v4337
        %v5170 = vpack.c.b16 %v4354, %v4338
        %v5171 = vpack.c.b16 %v4371, %v4355
        %v5172 = vpack.c.b16 %v4372, %v4356
        %v5173 = vpack.c.b16 %v4373, %v4357
        %v5174 = vpack.c.b16 %v4374, %v4358
        %v5175 = vpack.c.b16 %v4375, %v4359
        %v5176 = vpack.c.b16 %v4376, %v4360
        %v5177 = vpack.c.b16 %v4377, %v4361
        %v5178 = vpack.c.b16 %v4378, %v4362
        %v5179 = vpack.c.b16 %v4379, %v4363
        %v5180 = vpack.c.b16 %v4380, %v4364
        %v5181 = vpack.c.b16 %v4381, %v4365
        %v5182 = vpack.c.b16 %v4382, %v4366
        %v5183 = vpack.c.b16 %v4383, %v4367
        %v5184 = vpack.c.b16 %v4384, %v4368
        %v5185 = vpack.c.b16 %v4385, %v4369
        %v5186 = vpack.c.b16 %v4386, %v4370
        %v5187 = vpack.c.b16 %v4403, %v4387
        %v5188 = vpack.c.b16 %v4404, %v4388
        %v5189 = vpack.c.b16 %v4405, %v4389
        %v5190 = vpack.c.b16 %v4406, %v4390
        %v5191 = vpack.c.b16 %v4407, %v4391
        %v5192 = vpack.c.b16 %v4408, %v4392
        %v5193 = vpack.c.b16 %v4409, %v4393
        %v5194 = vpack.c.b16 %v4410, %v4394
        %v5195 = vpack.c.b16 %v4411, %v4395
        %v5196 = vpack.c.b16 %v4412, %v4396
        %v5197 = vpack.c.b16 %v4413, %v4397
        %v5198 = vpack.c.b16 %v4414, %v4398
        %v5199 = vpack.c.b16 %v4415, %v4399
        %v5200 = vpack.c.b16 %v4416, %v4400
        %v5201 = vpack.c.b16 %v4417, %v4401
        %v5202 = vpack.c.b16 %v4418, %v4402
        %v5203 = vpack.c.b16 %v4435, %v4419
        %v5204 = vpack.c.b16 %v4436, %v4420
        %v5205 = vpack.c.b16 %v4437, %v4421
        %v5206 = vpack.c.b16 %v4438, %v4422
        %v5207 = vpack.c.b16 %v4439, %v4423
        %v5208 = vpack.c.b16 %v4440, %v4424
        %v5209 = vpack.c.b16 %v4441, %v4425
        %v5210 = vpack.c.b16 %v4442, %v4426
        %v5211 = vpack.c.b16 %v4443, %v4427
        %v5212 = vpack.c.b16 %v4444, %v4428
        %v5213 = vpack.c.b16 %v4445, %v4429
        %v5214 = vpack.c.b16 %v4446, %v4430
        %v5215 = vpack.c.b16 %v4447, %v4431
        %v5216 = vpack.c.b16 %v4448, %v4432
        %v5217 = vpack.c.b16 %v4449, %v4433
        %v5218 = vpack.c.b16 %v4450, %v4434
        %v5219 = vpack.c.b16 %v4467, %v4451
        %v5220 = vpack.c.b16 %v4468, %v4452
        %v5221 = vpack.c.b16 %v4469, %v4453
        %v5222 = vpack.c.b16 %v4470, %v4454
        %v5223 = vpack.c.b16 %v4471, %v4455
        %v5224 = vpack.c.b16 %v4472, %v4456
        %v5225 = vpack.c.b16 %v4473, %v4457
        %v5226 = vpack.c.b16 %v4474, %v4458
        %v5227 = vpack.c.b16 %v4475, %v4459
        %v5228 = vpack.c.b16 %v4476, %v4460
        %v5229 = vpack.c.b16 %v4477, %v4461
        %v5230 = vpack.c.b16 %v4478, %v4462
        %v5231 = vpack.c.b16 %v4479, %v4463
        %v5232 = vpack.c.b16 %v4480, %v4464
        %v5233 = vpack.c.b16 %v4481, %v4465
        %v5234 = vpack.c.b16 %v4482, %v4466
        %v5235 = vpack.c.b16 %v4499, %v4483
        %v5236 = vpack.c.b16 %v4500, %v4484
        %v5237 = vpack.c.b16 %v4501, %v4485
        %v5238 = vpack.c.b16 %v4502, %v4486
        %v5239 = vpack.c.b16 %v4503, %v4487
        %v5240 = vpack.c.b16 %v4504, %v4488
        %v5241 = vpack.c.b16 %v4505, %v4489
        %v5242 = vpack.c.b16 %v4506, %v4490
        %v5243 = vpack.c.b16 %v4507, %v4491
        %v5244 = vpack.c.b16 %v4508, %v4492
        %v5245 = vpack.c.b16 %v4509, %v4493
        %v5246 = vpack.c.b16 %v4510, %v4494
        %v5247 = vpack.c.b16 %v4511, %v4495
        %v5248 = vpack.c.b16 %v4512, %v4496
        %v5249 = vpack.c.b16 %v4513, %v4497
        %v5250 = vpack.c.b16 %v4514, %v4498
        %v5251 = vpack.c.b16 %v4531, %v4515
        %v5252 = vpack.c.b16 %v4532, %v4516
        %v5253 = vpack.c.b16 %v4533, %v4517
        %v5254 = vpack.c.b16 %v4534, %v4518
        %v5255 = vpack.c.b16 %v4535, %v4519
        %v5256 = vpack.c.b16 %v4536, %v4520
        %v5257 = vpack.c.b16 %v4537, %v4521
        %v5258 = vpack.c.b16 %v4538, %v4522
        %v5259 = vpack.c.b16 %v4539, %v4523
        %v5260 = vpack.c.b16 %v4540, %v4524
        %v5261 = vpack.c.b16 %v4541, %v4525
        %v5262 = vpack.c.b16 %v4542, %v4526
        %v5263 = vpack.c.b16 %v4543, %v4527
        %v5264 = vpack.c.b16 %v4544, %v4528
        %v5265 = vpack.c.b16 %v4545, %v4529
        %v5266 = vpack.c.b16 %v4546, %v4530
        %v5267 = vpack.c.b16 %v4563, %v4547
        %v5268 = vpack.c.b16 %v4564, %v4548
        %v5269 = vpack.c.b16 %v4565, %v4549
        %v5270 = vpack.c.b16 %v4566, %v4550
        %v5271 = vpack.c.b16 %v4567, %v4551
        %v5272 = vpack.c.b16 %v4568, %v4552
        %v5273 = vpack.c.b16 %v4569, %v4553
        %v5274 = vpack.c.b16 %v4570, %v4554
        %v5275 = vpack.c.b16 %v4571, %v4555
        %v5276 = vpack.c.b16 %v4572, %v4556
        %v5277 = vpack.c.b16 %v4573, %v4557
        %v5278 = vpack.c.b16 %v4574, %v4558
        %v5279 = vpack.c.b16 %v4575, %v4559
        %v5280 = vpack.c.b16 %v4576, %v4560
        %v5281 = vpack.c.b16 %v4577, %v4561
        %v5282 = vpack.c.b16 %v4578, %v4562
        %v5283 = vpack.c.b16 %v4595, %v4579
        %v5284 = vpack.c.b16 %v4596, %v4580
        %v5285 = vpack.c.b16 %v4597, %v4581
        %v5286 = vpack.c.b16 %v4598, %v4582
        %v5287 = vpack.c.b16 %v4599, %v4583
        %v5288 = vpack.c.b16 %v4600, %v4584
        %v5289 = vpack.c.b16 %v4601, %v4585
        %v5290 = vpack.c.b16 %v4602, %v4586
        %v5291 = vpack.c.b16 %v4603, %v4587
        %v5292 = vpack.c.b16 %v4604, %v4588
        %v5293 = vpack.c.b16 %v4605, %v4589
        %v5294 = vpack.c.b16 %v4606, %v4590
        %v5295 = vpack.c.b16 %v4607, %v4591
        %v5296 = vpack.c.b16 %v4608, %v4592
        %v5297 = vpack.c.b16 %v4609, %v4593
        %v5298 = vpack.c.b16 %v4610, %v4594
        %v5299 = vpack.c.b16 %v4627, %v4611
        %v5300 = vpack.c.b16 %v4628, %v4612
        %v5301 = vpack.c.b16 %v4629, %v4613
        %v5302 = vpack.c.b16 %v4630, %v4614
        %v5303 = vpack.c.b16 %v4631, %v4615
        %v5304 = vpack.c.b16 %v4632, %v4616
        %v5305 = vpack.c.b16 %v4633, %v4617
        %v5306 = vpack.c.b16 %v4634, %v4618
        %v5307 = vpack.c.b16 %v4635, %v4619
        %v5308 = vpack.c.b16 %v4636, %v4620
        %v5309 = vpack.c.b16 %v4637, %v4621
        %v5310 = vpack.c.b16 %v4638, %v4622
        %v5311 = vpack.c.b16 %v4639, %v4623
        %v5312 = vpack.c.b16 %v4640, %v4624
        %v5313 = vpack.c.b16 %v4641, %v4625
        %v5314 = vpack.c.b16 %v4642, %v4626
        %v5315 = vpack.c.b16 %v4659, %v4643
        %v5316 = vpack.c.b16 %v4660, %v4644
        %v5317 = vpack.c.b16 %v4661, %v4645
        %v5318 = vpack.c.b16 %v4662, %v4646
        %v5319 = vpack.c.b16 %v4663, %v4647
        %v5320 = vpack.c.b16 %v4664, %v4648
        %v5321 = vpack.c.b16 %v4665, %v4649
        %v5322 = vpack.c.b16 %v4666, %v4650
        %v5323 = vpack.c.b16 %v4667, %v4651
        %v5324 = vpack.c.b16 %v4668, %v4652
        %v5325 = vpack.c.b16 %v4669, %v4653
        %v5326 = vpack.c.b16 %v4670, %v4654
        %v5327 = vpack.c.b16 %v4671, %v4655
        %v5328 = vpack.c.b16 %v4672, %v4656
        %v5329 = vpack.c.b16 %v4673, %v4657
        %v5330 = vpack.c.b16 %v4674, %v4658
        %v5331 = vpack.c.b16 %v4691, %v4675
        %v5332 = vpack.c.b16 %v4692, %v4676
        %v5333 = vpack.c.b16 %v4693, %v4677
        %v5334 = vpack.c.b16 %v4694, %v4678
        %v5335 = vpack.c.b16 %v4695, %v4679
        %v5336 = vpack.c.b16 %v4696, %v4680
        %v5337 = vpack.c.b16 %v4697, %v4681
        %v5338 = vpack.c.b16 %v4698, %v4682
        %v5339 = vpack.c.b16 %v4699, %v4683
        %v5340 = vpack.c.b16 %v4700, %v4684
        %v5341 = vpack.c.b16 %v4701, %v4685
        %v5342 = vpack.c.b16 %v4702, %v4686
        %v5343 = vpack.c.b16 %v4703, %v4687
        %v5344 = vpack.c.b16 %v4704, %v4688
        %v5345 = vpack.c.b16 %v4705, %v4689
        %v5346 = vpack.c.b16 %v4706, %v4690
        %v5347 = vpack.c.b16 %v4723, %v4707
        %v5348 = vpack.c.b16 %v4724, %v4708
        %v5349 = vpack.c.b16 %v4725, %v4709
        %v5350 = vpack.c.b16 %v4726, %v4710
        %v5351 = vpack.c.b16 %v4727, %v4711
        %v5352 = vpack.c.b16 %v4728, %v4712
        %v5353 = vpack.c.b16 %v4729, %v4713
        %v5354 = vpack.c.b16 %v4730, %v4714
        %v5355 = vpack.c.b16 %v4731, %v4715
        %v5356 = vpack.c.b16 %v4732, %v4716
        %v5357 = vpack.c.b16 %v4733, %v4717
        %v5358 = vpack.c.b16 %v4734, %v4718
        %v5359 = vpack.c.b16 %v4735, %v4719
        %v5360 = vpack.c.b16 %v4736, %v4720
        %v5361 = vpack.c.b16 %v4737, %v4721
        %v5362 = vpack.c.b16 %v4738, %v4722
        %v5363 = vpack.c.b16 %v4755, %v4739
        %v5364 = vpack.c.b16 %v4756, %v4740
        %v5365 = vpack.c.b16 %v4757, %v4741
        %v5366 = vpack.c.b16 %v4758, %v4742
        %v5367 = vpack.c.b16 %v4759, %v4743
        %v5368 = vpack.c.b16 %v4760, %v4744
        %v5369 = vpack.c.b16 %v4761, %v4745
        %v5370 = vpack.c.b16 %v4762, %v4746
        %v5371 = vpack.c.b16 %v4763, %v4747
        %v5372 = vpack.c.b16 %v4764, %v4748
        %v5373 = vpack.c.b16 %v4765, %v4749
        %v5374 = vpack.c.b16 %v4766, %v4750
        %v5375 = vpack.c.b16 %v4767, %v4751
        %v5376 = vpack.c.b16 %v4768, %v4752
        %v5377 = vpack.c.b16 %v4769, %v4753
        %v5378 = vpack.c.b16 %v4770, %v4754
        %v5379 = vpack.c.b16 %v4787, %v4771
        %v5380 = vpack.c.b16 %v4788, %v4772
        %v5381 = vpack.c.b16 %v4789, %v4773
        %v5382 = vpack.c.b16 %v4790, %v4774
        %v5383 = vpack.c.b16 %v4791, %v4775
        %v5384 = vpack.c.b16 %v4792, %v4776
        %v5385 = vpack.c.b16 %v4793, %v4777
        %v5386 = vpack.c.b16 %v4794, %v4778
        %v5387 = vpack.c.b16 %v4795, %v4779
        %v5388 = vpack.c.b16 %v4796, %v4780
        %v5389 = vpack.c.b16 %v4797, %v4781
        %v5390 = vpack.c.b16 %v4798, %v4782
        %v5391 = vpack.c.b16 %v4799, %v4783
        %v5392 = vpack.c.b16 %v4800, %v4784
        %v5393 = vpack.c.b16 %v4801, %v4785
        %v5394 = vpack.c.b16 %v4802, %v4786
        %v5395 = vpack.c.b16 %v4819, %v4803
        %v5396 = vpack.c.b16 %v4820, %v4804
        %v5397 = vpack.c.b16 %v4821, %v4805
        %v5398 = vpack.c.b16 %v4822, %v4806
        %v5399 = vpack.c.b16 %v4823, %v4807
        %v5400 = vpack.c.b16 %v4824, %v4808
        %v5401 = vpack.c.b16 %v4825, %v4809
        %v5402 = vpack.c.b16 %v4826, %v4810
        %v5403 = vpack.c.b16 %v4827, %v4811
        %v5404 = vpack.c.b16 %v4828, %v4812
        %v5405 = vpack.c.b16 %v4829, %v4813
        %v5406 = vpack.c.b16 %v4830, %v4814
        %v5407 = vpack.c.b16 %v4831, %v4815
        %v5408 = vpack.c.b16 %v4832, %v4816
        %v5409 = vpack.c.b16 %v4833, %v4817
        %v5410 = vpack.c.b16 %v4834, %v4818
        %v5411 = vpack.c.b16 %v4851, %v4835
        %v5412 = vpack.c.b16 %v4852, %v4836
        %v5413 = vpack.c.b16 %v4853, %v4837
        %v5414 = vpack.c.b16 %v4854, %v4838
        %v5415 = vpack.c.b16 %v4855, %v4839
        %v5416 = vpack.c.b16 %v4856, %v4840
        %v5417 = vpack.c.b16 %v4857, %v4841
        %v5418 = vpack.c.b16 %v4858, %v4842
        %v5419 = vpack.c.b16 %v4859, %v4843
        %v5420 = vpack.c.b16 %v4860, %v4844
        %v5421 = vpack.c.b16 %v4861, %v4845
        %v5422 = vpack.c.b16 %v4862, %v4846
        %v5423 = vpack.c.b16 %v4863, %v4847
        %v5424 = vpack.c.b16 %v4864, %v4848
        %v5425 = vpack.c.b16 %v4865, %v4849
        %v5426 = vpack.c.b16 %v4866, %v4850
        %v5427 = vpack.c.b16 %v4883, %v4867
        %v5428 = vpack.c.b16 %v4884, %v4868
        %v5429 = vpack.c.b16 %v4885, %v4869
        %v5430 = vpack.c.b16 %v4886, %v4870
        %v5431 = vpack.c.b16 %v4887, %v4871
        %v5432 = vpack.c.b16 %v4888, %v4872
        %v5433 = vpack.c.b16 %v4889, %v4873
        %v5434 = vpack.c.b16 %v4890, %v4874
        %v5435 = vpack.c.b16 %v4891, %v4875
        %v5436 = vpack.c.b16 %v4892, %v4876
        %v5437 = vpack.c.b16 %v4893, %v4877
        %v5438 = vpack.c.b16 %v4894, %v4878
        %v5439 = vpack.c.b16 %v4895, %v4879
        %v5440 = vpack.c.b16 %v4896, %v4880
        %v5441 = vpack.c.b16 %v4897, %v4881
        %v5442 = vpack.c.b16 %v4898, %v4882
        %v5443 = vpack.c.b16 %v4915, %v4899
        %v5444 = vpack.c.b16 %v4916, %v4900
        %v5445 = vpack.c.b16 %v4917, %v4901
        %v5446 = vpack.c.b16 %v4918, %v4902
        %v5447 = vpack.c.b16 %v4919, %v4903
        %v5448 = vpack.c.b16 %v4920, %v4904
        %v5449 = vpack.c.b16 %v4921, %v4905
        %v5450 = vpack.c.b16 %v4922, %v4906
        %v5451 = vpack.c.b16 %v4923, %v4907
        %v5452 = vpack.c.b16 %v4924, %v4908
        %v5453 = vpack.c.b16 %v4925, %v4909
        %v5454 = vpack.c.b16 %v4926, %v4910
        %v5455 = vpack.c.b16 %v4927, %v4911
        %v5456 = vpack.c.b16 %v4928, %v4912
        %v5457 = vpack.c.b16 %v4929, %v4913
        %v5458 = vpack.c.b16 %v4930, %v4914
        %v5459 = vpack.c.b16 %v4947, %v4931
        %v5460 = vpack.c.b16 %v4948, %v4932
        %v5461 = vpack.c.b16 %v4949, %v4933
        %v5462 = vpack.c.b16 %v4950, %v4934
        %v5463 = vpack.c.b16 %v4951, %v4935
        %v5464 = vpack.c.b16 %v4952, %v4936
        %v5465 = vpack.c.b16 %v4953, %v4937
        %v5466 = vpack.c.b16 %v4954, %v4938
        %v5467 = vpack.c.b16 %v4955, %v4939
        %v5468 = vpack.c.b16 %v4956, %v4940
        %v5469 = vpack.c.b16 %v4957, %v4941
        %v5470 = vpack.c.b16 %v4958, %v4942
        %v5471 = vpack.c.b16 %v4959, %v4943
        %v5472 = vpack.c.b16 %v4960, %v4944
        %v5473 = vpack.c.b16 %v4961, %v4945
        %v5474 = vpack.c.b16 %v4962, %v4946
        %5987 = vmatprep.subr.bf16.mxu0 %v4964
        %5988 = vmatpush1.bf16.msra.mxu0 %v4963
        %5989 = vmatprep.subr.bf16.mxu0 %v4980
        %5990 = vmatpush1.bf16.msra.mxu0 %v4979
        %5991 = vmatprep.subr.bf16.mxu0 %v4996
        %5992 = vmatpush1.bf16.msra.mxu0 %v4995
        %5993 = vmatprep.subr.bf16.mxu0 %v5012
        %5994 = vmatpush1.bf16.msra.mxu0 %v5011
        %5995 = vmatprep.subr.bf16.mxu0 %v5028
        %5996 = vmatpush1.bf16.msra.mxu0 %v5027
        %5997 = vmatprep.subr.bf16.mxu0 %v5044
        %5998 = vmatpush1.bf16.msra.mxu0 %v5043
        %5999 = vmatprep.subr.bf16.mxu0 %v5060
        %6000 = vmatpush1.bf16.msra.mxu0 %v5059
        %6001 = vmatprep.subr.bf16.mxu0 %v5076
        %6002 = vmatpush1.bf16.msra.mxu0 %v5075
        %6003 = vmatprep.subr.bf16.mxu0 %v5092
        %6004 = vmatpush1.bf16.msra.mxu0 %v5091
        %6005 = vmatprep.subr.bf16.mxu0 %v5108
        %6006 = vmatpush1.bf16.msra.mxu0 %v5107
        %6007 = vmatprep.subr.bf16.mxu0 %v5124
        %6008 = vmatpush1.bf16.msra.mxu0 %v5123
        %6009 = vmatprep.subr.bf16.mxu0 %v5140
        %6010 = vmatpush1.bf16.msra.mxu0 %v5139
        %6011 = vmatprep.subr.bf16.mxu0 %v5156
        %6012 = vmatpush1.bf16.msra.mxu0 %v5155
        %6013 = vmatprep.subr.bf16.mxu0 %v5172
        %6014 = vmatpush1.bf16.msra.mxu0 %v5171
        %6015 = vmatprep.subr.bf16.mxu0 %v5188
        %6016 = vmatpush1.bf16.msra.mxu0 %v5187
        %6017 = vmatprep.subr.bf16.mxu0 %v5204
        %6018 = vmatpush1.bf16.msra.mxu0 %v5203
        %6019 = vmatprep.mubr.bf16.mxu0 %v2828
        %6020 = vmatmul.mubr.bf16.gmra.mrb[0].mxu0 %v2827
        %v6021 = vpop.f32.mrb[0].mxu0
        %v6022 = vadd.f32 %v3350, %v6021
        %v6023 = vpop.f32.mrb[0].mxu0
        %v6024 = vadd.f32 %v3354, %v6023
        %v6025 = vpop.f32.mrb[0].mxu0
        %v6026 = vpop.f32.mrb[0].mxu0
        %6027 = vdwg.mxu0
        %6028 = vmatprep.subr.bf16.mxu0 %v5220
        %6029 = vmatpush1.bf16.msra.mxu0 %v5219
        %6030 = vmatprep.subr.bf16.mxu0 %v5236
        %6031 = vmatpush1.bf16.msra.mxu0 %v5235
        %6032 = vmatprep.subr.bf16.mxu0 %v5252
        %6033 = vmatpush1.bf16.msra.mxu0 %v5251
        %6034 = vmatprep.subr.bf16.mxu0 %v5268
        %6035 = vmatpush1.bf16.msra.mxu0 %v5267
        %6036 = vmatprep.subr.bf16.mxu0 %v5284
        %6037 = vmatpush1.bf16.msra.mxu0 %v5283
        %6038 = vmatprep.subr.bf16.mxu0 %v5300
        %6039 = vmatpush1.bf16.msra.mxu0 %v5299
        %6040 = vmatprep.subr.bf16.mxu0 %v5316
        %6041 = vmatpush1.bf16.msra.mxu0 %v5315
        %6042 = vmatprep.subr.bf16.mxu0 %v5332
        %6043 = vmatpush1.bf16.msra.mxu0 %v5331
        %6044 = vmatprep.subr.bf16.mxu0 %v5348
        %6045 = vmatpush1.bf16.msra.mxu0 %v5347
        %6046 = vmatprep.subr.bf16.mxu0 %v5364
        %6047 = vmatpush1.bf16.msra.mxu0 %v5363
        %6048 = vmatprep.subr.bf16.mxu0 %v5380
        %6049 = vmatpush1.bf16.msra.mxu0 %v5379
        %6050 = vmatprep.subr.bf16.mxu0 %v5396
        %6051 = vmatpush1.bf16.msra.mxu0 %v5395
        %6052 = vmatprep.subr.bf16.mxu0 %v5412
        %6053 = vmatpush1.bf16.msra.mxu0 %v5411
        %6054 = vmatprep.subr.bf16.mxu0 %v5428
        %6055 = vmatpush1.bf16.msra.mxu0 %v5427
        %6056 = vmatprep.subr.bf16.mxu0 %v5444
        %6057 = vmatpush1.bf16.msra.mxu0 %v5443
        %6058 = vmatprep.subr.bf16.mxu0 %v5460
        %6059 = vmatpush1.bf16.msra.mxu0 %v5459
        %6060 = vmatprep.mubr.bf16.mxu0 %v2830
        %6061 = vmatmul.mubr.bf16.gmra.mrb[0].mxu0 %v2829
        %v6062 = vpop.f32.mrb[0].mxu0
        %v6063 = vadd.f32 %v6022, %v6062
        %v6064 = vpop.f32.mrb[0].mxu0
        %v6065 = vadd.f32 %v6024, %v6064
        %v6066 = vpop.f32.mrb[0].mxu0
        %v6067 = vpop.f32.mrb[0].mxu0
        %6068 = vdwg.mxu0
        %6069 = vmatprep.subr.bf16.mxu0 %v4966
        %6070 = vmatpush1.bf16.msra.mxu0 %v4965
        %6071 = vmatprep.subr.bf16.mxu0 %v4982
        %6072 = vmatpush1.bf16.msra.mxu0 %v4981
        %6073 = vmatprep.subr.bf16.mxu0 %v4998
        %6074 = vmatpush1.bf16.msra.mxu0 %v4997
        %6075 = vmatprep.subr.bf16.mxu0 %v5014
        %6076 = vmatpush1.bf16.msra.mxu0 %v5013
        %6077 = vmatprep.subr.bf16.mxu0 %v5030
        %6078 = vmatpush1.bf16.msra.mxu0 %v5029
        %6079 = vmatprep.subr.bf16.mxu0 %v5046
        %6080 = vmatpush1.bf16.msra.mxu0 %v5045
        %6081 = vmatprep.subr.bf16.mxu0 %v5062
        %6082 = vmatpush1.bf16.msra.mxu0 %v5061
        %6083 = vmatprep.subr.bf16.mxu0 %v5078
        %6084 = vmatpush1.bf16.msra.mxu0 %v5077
        %6085 = vmatprep.subr.bf16.mxu0 %v5094
        %6086 = vmatpush1.bf16.msra.mxu0 %v5093
        %6087 = vmatprep.subr.bf16.mxu0 %v5110
        %6088 = vmatpush1.bf16.msra.mxu0 %v5109
        %6089 = vmatprep.subr.bf16.mxu0 %v5126
        %6090 = vmatpush1.bf16.msra.mxu0 %v5125
        %6091 = vmatprep.subr.bf16.mxu0 %v5142
        %6092 = vmatpush1.bf16.msra.mxu0 %v5141
        %6093 = vmatprep.subr.bf16.mxu0 %v5158
        %6094 = vmatpush1.bf16.msra.mxu0 %v5157
        %6095 = vmatprep.subr.bf16.mxu0 %v5174
        %6096 = vmatpush1.bf16.msra.mxu0 %v5173
        %6097 = vmatprep.subr.bf16.mxu0 %v5190
        %6098 = vmatpush1.bf16.msra.mxu0 %v5189
        %6099 = vmatprep.subr.bf16.mxu0 %v5206
        %6100 = vmatpush1.bf16.msra.mxu0 %v5205
        %6101 = vmatprep.mubr.bf16.mxu0 %v2828
        %6102 = vmatmul.mubr.bf16.gmra.mrb[0].mxu0 %v2827
        %v6103 = vpop.f32.mrb[0].mxu0
        %v6104 = vadd.f32 %v3358, %v6103
        %v6105 = vpop.f32.mrb[0].mxu0
        %v6106 = vadd.f32 %v3362, %v6105
        %v6107 = vpop.f32.mrb[0].mxu0
        %v6108 = vpop.f32.mrb[0].mxu0
        %6109 = vdwg.mxu0
        %6110 = vmatprep.subr.bf16.mxu0 %v5222
        %6111 = vmatpush1.bf16.msra.mxu0 %v5221
        %6112 = vmatprep.subr.bf16.mxu0 %v5238
        %6113 = vmatpush1.bf16.msra.mxu0 %v5237
        %6114 = vmatprep.subr.bf16.mxu0 %v5254
        %6115 = vmatpush1.bf16.msra.mxu0 %v5253
        %6116 = vmatprep.subr.bf16.mxu0 %v5270
        %6117 = vmatpush1.bf16.msra.mxu0 %v5269
        %6118 = vmatprep.subr.bf16.mxu0 %v5286
        %6119 = vmatpush1.bf16.msra.mxu0 %v5285
        %6120 = vmatprep.subr.bf16.mxu0 %v5302
        %6121 = vmatpush1.bf16.msra.mxu0 %v5301
        %6122 = vmatprep.subr.bf16.mxu0 %v5318
        %6123 = vmatpush1.bf16.msra.mxu0 %v5317
        %6124 = vmatprep.subr.bf16.mxu0 %v5334
        %6125 = vmatpush1.bf16.msra.mxu0 %v5333
        %6126 = vmatprep.subr.bf16.mxu0 %v5350
        %6127 = vmatpush1.bf16.msra.mxu0 %v5349
        %6128 = vmatprep.subr.bf16.mxu0 %v5366
        %6129 = vmatpush1.bf16.msra.mxu0 %v5365
        %6130 = vmatprep.subr.bf16.mxu0 %v5382
        %6131 = vmatpush1.bf16.msra.mxu0 %v5381
        %6132 = vmatprep.subr.bf16.mxu0 %v5398
        %6133 = vmatpush1.bf16.msra.mxu0 %v5397
        %6134 = vmatprep.subr.bf16.mxu0 %v5414
        %6135 = vmatpush1.bf16.msra.mxu0 %v5413
        %6136 = vmatprep.subr.bf16.mxu0 %v5430
        %6137 = vmatpush1.bf16.msra.mxu0 %v5429
        %6138 = vmatprep.subr.bf16.mxu0 %v5446
        %6139 = vmatpush1.bf16.msra.mxu0 %v5445
        %6140 = vmatprep.subr.bf16.mxu0 %v5462
        %6141 = vmatpush1.bf16.msra.mxu0 %v5461
        %6142 = vmatprep.mubr.bf16.mxu0 %v2830
        %6143 = vmatmul.mubr.bf16.gmra.mrb[0].mxu0 %v2829
        %v6144 = vpop.f32.mrb[0].mxu0
        %v6145 = vadd.f32 %v6104, %v6144
        %v6146 = vpop.f32.mrb[0].mxu0
        %v6147 = vadd.f32 %v6106, %v6146
        %v6148 = vpop.f32.mrb[0].mxu0
        %v6149 = vpop.f32.mrb[0].mxu0
        %6150 = vdwg.mxu0
        %6151 = vmatprep.subr.bf16.mxu0 %v4968
        %6152 = vmatpush1.bf16.msra.mxu0 %v4967
        %6153 = vmatprep.subr.bf16.mxu0 %v4984
        %6154 = vmatpush1.bf16.msra.mxu0 %v4983
        %6155 = vmatprep.subr.bf16.mxu0 %v5000
        %6156 = vmatpush1.bf16.msra.mxu0 %v4999
        %6157 = vmatprep.subr.bf16.mxu0 %v5016
        %6158 = vmatpush1.bf16.msra.mxu0 %v5015
        %6159 = vmatprep.subr.bf16.mxu0 %v5032
        %6160 = vmatpush1.bf16.msra.mxu0 %v5031
        %6161 = vmatprep.subr.bf16.mxu0 %v5048
        %6162 = vmatpush1.bf16.msra.mxu0 %v5047
        %6163 = vmatprep.subr.bf16.mxu0 %v5064
        %6164 = vmatpush1.bf16.msra.mxu0 %v5063
        %6165 = vmatprep.subr.bf16.mxu0 %v5080
        %6166 = vmatpush1.bf16.msra.mxu0 %v5079
        %6167 = vmatprep.subr.bf16.mxu0 %v5096
        %6168 = vmatpush1.bf16.msra.mxu0 %v5095
        %6169 = vmatprep.subr.bf16.mxu0 %v5112
        %6170 = vmatpush1.bf16.msra.mxu0 %v5111
        %6171 = vmatprep.subr.bf16.mxu0 %v5128
        %6172 = vmatpush1.bf16.msra.mxu0 %v5127
        %6173 = vmatprep.subr.bf16.mxu0 %v5144
        %6174 = vmatpush1.bf16.msra.mxu0 %v5143
        %6175 = vmatprep.subr.bf16.mxu0 %v5160
        %6176 = vmatpush1.bf16.msra.mxu0 %v5159
        %6177 = vmatprep.subr.bf16.mxu0 %v5176
        %6178 = vmatpush1.bf16.msra.mxu0 %v5175
        %6179 = vmatprep.subr.bf16.mxu0 %v5192
        %6180 = vmatpush1.bf16.msra.mxu0 %v5191
        %6181 = vmatprep.subr.bf16.mxu0 %v5208
        %6182 = vmatpush1.bf16.msra.mxu0 %v5207
        %6183 = vmatprep.mubr.bf16.mxu0 %v2828
        %6184 = vmatmul.mubr.bf16.gmra.mrb[0].mxu0 %v2827
        %v6185 = vpop.f32.mrb[0].mxu0
        %v6186 = vadd.f32 %v3366, %v6185
        %v6187 = vpop.f32.mrb[0].mxu0
        %v6188 = vadd.f32 %v3370, %v6187
        %v6189 = vpop.f32.mrb[0].mxu0
        %v6190 = vpop.f32.mrb[0].mxu0
        %6191 = vdwg.mxu0
        %6192 = vmatprep.subr.bf16.mxu0 %v5224
        %6193 = vmatpush1.bf16.msra.mxu0 %v5223
        %6194 = vmatprep.subr.bf16.mxu0 %v5240
        %6195 = vmatpush1.bf16.msra.mxu0 %v5239
        %6196 = vmatprep.subr.bf16.mxu0 %v5256
        %6197 = vmatpush1.bf16.msra.mxu0 %v5255
        %6198 = vmatprep.subr.bf16.mxu0 %v5272
        %6199 = vmatpush1.bf16.msra.mxu0 %v5271
        %6200 = vmatprep.subr.bf16.mxu0 %v5288
        %6201 = vmatpush1.bf16.msra.mxu0 %v5287
        %6202 = vmatprep.subr.bf16.mxu0 %v5304
        %6203 = vmatpush1.bf16.msra.mxu0 %v5303
        %6204 = vmatprep.subr.bf16.mxu0 %v5320
        %6205 = vmatpush1.bf16.msra.mxu0 %v5319
        %6206 = vmatprep.subr.bf16.mxu0 %v5336
        %6207 = vmatpush1.bf16.msra.mxu0 %v5335
        %6208 = vmatprep.subr.bf16.mxu0 %v5352
        %6209 = vmatpush1.bf16.msra.mxu0 %v5351
        %6210 = vmatprep.subr.bf16.mxu0 %v5368
        %6211 = vmatpush1.bf16.msra.mxu0 %v5367
        %6212 = vmatprep.subr.bf16.mxu0 %v5384
        %6213 = vmatpush1.bf16.msra.mxu0 %v5383
        %6214 = vmatprep.subr.bf16.mxu0 %v5400
        %6215 = vmatpush1.bf16.msra.mxu0 %v5399
        %6216 = vmatprep.subr.bf16.mxu0 %v5416
        %6217 = vmatpush1.bf16.msra.mxu0 %v5415
        %6218 = vmatprep.subr.bf16.mxu0 %v5432
        %6219 = vmatpush1.bf16.msra.mxu0 %v5431
        %6220 = vmatprep.subr.bf16.mxu0 %v5448
        %6221 = vmatpush1.bf16.msra.mxu0 %v5447
        %6222 = vmatprep.subr.bf16.mxu0 %v5464
        %6223 = vmatpush1.bf16.msra.mxu0 %v5463
        %6224 = vmatprep.mubr.bf16.mxu0 %v2830
        %6225 = vmatmul.mubr.bf16.gmra.mrb[0].mxu0 %v2829
        %v6226 = vpop.f32.mrb[0].mxu0
        %v6227 = vadd.f32 %v6186, %v6226
        %v6228 = vpop.f32.mrb[0].mxu0
        %v6229 = vadd.f32 %v6188, %v6228
        %v6230 = vpop.f32.mrb[0].mxu0
        %v6231 = vpop.f32.mrb[0].mxu0
        %6232 = vdwg.mxu0
        %6233 = vmatprep.subr.bf16.mxu0 %v4970
        %6234 = vmatpush1.bf16.msra.mxu0 %v4969
        %6235 = vmatprep.subr.bf16.mxu0 %v4986
        %6236 = vmatpush1.bf16.msra.mxu0 %v4985
        %6237 = vmatprep.subr.bf16.mxu0 %v5002
        %6238 = vmatpush1.bf16.msra.mxu0 %v5001
        %6239 = vmatprep.subr.bf16.mxu0 %v5018
        %6240 = vmatpush1.bf16.msra.mxu0 %v5017
        %6241 = vmatprep.subr.bf16.mxu0 %v5034
        %6242 = vmatpush1.bf16.msra.mxu0 %v5033
        %6243 = vmatprep.subr.bf16.mxu0 %v5050
        %6244 = vmatpush1.bf16.msra.mxu0 %v5049
        %6245 = vmatprep.subr.bf16.mxu0 %v5066
        %6246 = vmatpush1.bf16.msra.mxu0 %v5065
        %6247 = vmatprep.subr.bf16.mxu0 %v5082
        %6248 = vmatpush1.bf16.msra.mxu0 %v5081
        %6249 = vmatprep.subr.bf16.mxu0 %v5098
        %6250 = vmatpush1.bf16.msra.mxu0 %v5097
        %6251 = vmatprep.subr.bf16.mxu0 %v5114
        %6252 = vmatpush1.bf16.msra.mxu0 %v5113
        %6253 = vmatprep.subr.bf16.mxu0 %v5130
        %6254 = vmatpush1.bf16.msra.mxu0 %v5129
        %6255 = vmatprep.subr.bf16.mxu0 %v5146
        %6256 = vmatpush1.bf16.msra.mxu0 %v5145
        %6257 = vmatprep.subr.bf16.mxu0 %v5162
        %6258 = vmatpush1.bf16.msra.mxu0 %v5161
        %6259 = vmatprep.subr.bf16.mxu0 %v5178
        %6260 = vmatpush1.bf16.msra.mxu0 %v5177
        %6261 = vmatprep.subr.bf16.mxu0 %v5194
        %6262 = vmatpush1.bf16.msra.mxu0 %v5193
        %6263 = vmatprep.subr.bf16.mxu0 %v5210
        %6264 = vmatpush1.bf16.msra.mxu0 %v5209
        %6265 = vmatprep.mubr.bf16.mxu0 %v2828
        %6266 = vmatmul.mubr.bf16.gmra.mrb[0].mxu0 %v2827
        %v6267 = vpop.f32.mrb[0].mxu0
        %v6268 = vadd.f32 %v3374, %v6267
        %v6269 = vpop.f32.mrb[0].mxu0
        %v6270 = vadd.f32 %v3378, %v6269
        %v6271 = vpop.f32.mrb[0].mxu0
        %v6272 = vpop.f32.mrb[0].mxu0
        %6273 = vdwg.mxu0
        %6274 = vmatprep.subr.bf16.mxu0 %v5226
        %6275 = vmatpush1.bf16.msra.mxu0 %v5225
        %6276 = vmatprep.subr.bf16.mxu0 %v5242
        %6277 = vmatpush1.bf16.msra.mxu0 %v5241
        %6278 = vmatprep.subr.bf16.mxu0 %v5258
        %6279 = vmatpush1.bf16.msra.mxu0 %v5257
        %6280 = vmatprep.subr.bf16.mxu0 %v5274
        %6281 = vmatpush1.bf16.msra.mxu0 %v5273
        %6282 = vmatprep.subr.bf16.mxu0 %v5290
        %6283 = vmatpush1.bf16.msra.mxu0 %v5289
        %6284 = vmatprep.subr.bf16.mxu0 %v5306
        %6285 = vmatpush1.bf16.msra.mxu0 %v5305
        %6286 = vmatprep.subr.bf16.mxu0 %v5322
        %6287 = vmatpush1.bf16.msra.mxu0 %v5321
        %6288 = vmatprep.subr.bf16.mxu0 %v5338
        %6289 = vmatpush1.bf16.msra.mxu0 %v5337
        %6290 = vmatprep.subr.bf16.mxu0 %v5354
        %6291 = vmatpush1.bf16.msra.mxu0 %v5353
        %6292 = vmatprep.subr.bf16.mxu0 %v5370
        %6293 = vmatpush1.bf16.msra.mxu0 %v5369
        %6294 = vmatprep.subr.bf16.mxu0 %v5386
        %6295 = vmatpush1.bf16.msra.mxu0 %v5385
        %6296 = vmatprep.subr.bf16.mxu0 %v5402
        %6297 = vmatpush1.bf16.msra.mxu0 %v5401
        %6298 = vmatprep.subr.bf16.mxu0 %v5418
        %6299 = vmatpush1.bf16.msra.mxu0 %v5417
        %6300 = vmatprep.subr.bf16.mxu0 %v5434
        %6301 = vmatpush1.bf16.msra.mxu0 %v5433
        %6302 = vmatprep.subr.bf16.mxu0 %v5450
        %6303 = vmatpush1.bf16.msra.mxu0 %v5449
        %6304 = vmatprep.subr.bf16.mxu0 %v5466
        %6305 = vmatpush1.bf16.msra.mxu0 %v5465
        %6306 = vmatprep.mubr.bf16.mxu0 %v2830
        %6307 = vmatmul.mubr.bf16.gmra.mrb[0].mxu0 %v2829
        %v6308 = vpop.f32.mrb[0].mxu0
        %v6309 = vadd.f32 %v6268, %v6308
        %v6310 = vpop.f32.mrb[0].mxu0
        %v6311 = vadd.f32 %v6270, %v6310
        %v6312 = vpop.f32.mrb[0].mxu0
        %v6313 = vpop.f32.mrb[0].mxu0
        %6314 = vdwg.mxu0
        %6315 = vmatprep.subr.bf16.mxu0 %v4972
        %6316 = vmatpush1.bf16.msra.mxu0 %v4971
        %6317 = vmatprep.subr.bf16.mxu0 %v4988
        %6318 = vmatpush1.bf16.msra.mxu0 %v4987
        %6319 = vmatprep.subr.bf16.mxu0 %v5004
        %6320 = vmatpush1.bf16.msra.mxu0 %v5003
        %6321 = vmatprep.subr.bf16.mxu0 %v5020
        %6322 = vmatpush1.bf16.msra.mxu0 %v5019
        %6323 = vmatprep.subr.bf16.mxu0 %v5036
        %6324 = vmatpush1.bf16.msra.mxu0 %v5035
        %6325 = vmatprep.subr.bf16.mxu0 %v5052
        %6326 = vmatpush1.bf16.msra.mxu0 %v5051
        %6327 = vmatprep.subr.bf16.mxu0 %v5068
        %6328 = vmatpush1.bf16.msra.mxu0 %v5067
        %6329 = vmatprep.subr.bf16.mxu0 %v5084
        %6330 = vmatpush1.bf16.msra.mxu0 %v5083
        %6331 = vmatprep.subr.bf16.mxu0 %v5100
        %6332 = vmatpush1.bf16.msra.mxu0 %v5099
        %6333 = vmatprep.subr.bf16.mxu0 %v5116
        %6334 = vmatpush1.bf16.msra.mxu0 %v5115
        %6335 = vmatprep.subr.bf16.mxu0 %v5132
        %6336 = vmatpush1.bf16.msra.mxu0 %v5131
        %6337 = vmatprep.subr.bf16.mxu0 %v5148
        %6338 = vmatpush1.bf16.msra.mxu0 %v5147
        %6339 = vmatprep.subr.bf16.mxu0 %v5164
        %6340 = vmatpush1.bf16.msra.mxu0 %v5163
        %6341 = vmatprep.subr.bf16.mxu0 %v5180
        %6342 = vmatpush1.bf16.msra.mxu0 %v5179
        %6343 = vmatprep.subr.bf16.mxu0 %v5196
        %6344 = vmatpush1.bf16.msra.mxu0 %v5195
        %6345 = vmatprep.subr.bf16.mxu0 %v5212
        %6346 = vmatpush1.bf16.msra.mxu0 %v5211
        %6347 = vmatprep.mubr.bf16.mxu0 %v2828
        %6348 = vmatmul.mubr.bf16.gmra.mrb[0].mxu0 %v2827
        %v6349 = vpop.f32.mrb[0].mxu0
        %v6350 = vadd.f32 %v3382, %v6349
        %v6351 = vpop.f32.mrb[0].mxu0
        %v6352 = vadd.f32 %v3386, %v6351
        %v6353 = vpop.f32.mrb[0].mxu0
        %v6354 = vpop.f32.mrb[0].mxu0
        %6355 = vdwg.mxu0
        %6356 = vmatprep.subr.bf16.mxu0 %v5228
        %6357 = vmatpush1.bf16.msra.mxu0 %v5227
        %6358 = vmatprep.subr.bf16.mxu0 %v5244
        %6359 = vmatpush1.bf16.msra.mxu0 %v5243
        %6360 = vmatprep.subr.bf16.mxu0 %v5260
        %6361 = vmatpush1.bf16.msra.mxu0 %v5259
        %6362 = vmatprep.subr.bf16.mxu0 %v5276
        %6363 = vmatpush1.bf16.msra.mxu0 %v5275
        %6364 = vmatprep.subr.bf16.mxu0 %v5292
        %6365 = vmatpush1.bf16.msra.mxu0 %v5291
        %6366 = vmatprep.subr.bf16.mxu0 %v5308
        %6367 = vmatpush1.bf16.msra.mxu0 %v5307
        %6368 = vmatprep.subr.bf16.mxu0 %v5324
        %6369 = vmatpush1.bf16.msra.mxu0 %v5323
        %6370 = vmatprep.subr.bf16.mxu0 %v5340
        %6371 = vmatpush1.bf16.msra.mxu0 %v5339
        %6372 = vmatprep.subr.bf16.mxu0 %v5356
        %6373 = vmatpush1.bf16.msra.mxu0 %v5355
        %6374 = vmatprep.subr.bf16.mxu0 %v5372
        %6375 = vmatpush1.bf16.msra.mxu0 %v5371
        %6376 = vmatprep.subr.bf16.mxu0 %v5388
        %6377 = vmatpush1.bf16.msra.mxu0 %v5387
        %6378 = vmatprep.subr.bf16.mxu0 %v5404
        %6379 = vmatpush1.bf16.msra.mxu0 %v5403
        %6380 = vmatprep.subr.bf16.mxu0 %v5420
        %6381 = vmatpush1.bf16.msra.mxu0 %v5419
        %6382 = vmatprep.subr.bf16.mxu0 %v5436
        %6383 = vmatpush1.bf16.msra.mxu0 %v5435
        %6384 = vmatprep.subr.bf16.mxu0 %v5452
        %6385 = vmatpush1.bf16.msra.mxu0 %v5451
        %6386 = vmatprep.subr.bf16.mxu0 %v5468
        %6387 = vmatpush1.bf16.msra.mxu0 %v5467
        %6388 = vmatprep.mubr.bf16.mxu0 %v2830
        %6389 = vmatmul.mubr.bf16.gmra.mrb[0].mxu0 %v2829
        %v6390 = vpop.f32.mrb[0].mxu0
        %v6391 = vadd.f32 %v6350, %v6390
        %v6392 = vpop.f32.mrb[0].mxu0
        %v6393 = vadd.f32 %v6352, %v6392
        %v6394 = vpop.f32.mrb[0].mxu0
        %v6395 = vpop.f32.mrb[0].mxu0
        %6396 = vdwg.mxu0
        %6397 = vmatprep.subr.bf16.mxu0 %v4974
        %6398 = vmatpush1.bf16.msra.mxu0 %v4973
        %6399 = vmatprep.subr.bf16.mxu0 %v4990
        %6400 = vmatpush1.bf16.msra.mxu0 %v4989
        %6401 = vmatprep.subr.bf16.mxu0 %v5006
        %6402 = vmatpush1.bf16.msra.mxu0 %v5005
        %6403 = vmatprep.subr.bf16.mxu0 %v5022
        %6404 = vmatpush1.bf16.msra.mxu0 %v5021
        %6405 = vmatprep.subr.bf16.mxu0 %v5038
        %6406 = vmatpush1.bf16.msra.mxu0 %v5037
        %6407 = vmatprep.subr.bf16.mxu0 %v5054
        %6408 = vmatpush1.bf16.msra.mxu0 %v5053
        %6409 = vmatprep.subr.bf16.mxu0 %v5070
        %6410 = vmatpush1.bf16.msra.mxu0 %v5069
        %6411 = vmatprep.subr.bf16.mxu0 %v5086
        %6412 = vmatpush1.bf16.msra.mxu0 %v5085
        %6413 = vmatprep.subr.bf16.mxu0 %v5102
        %6414 = vmatpush1.bf16.msra.mxu0 %v5101
        %6415 = vmatprep.subr.bf16.mxu0 %v5118
        %6416 = vmatpush1.bf16.msra.mxu0 %v5117
        %6417 = vmatprep.subr.bf16.mxu0 %v5134
        %6418 = vmatpush1.bf16.msra.mxu0 %v5133
        %6419 = vmatprep.subr.bf16.mxu0 %v5150
        %6420 = vmatpush1.bf16.msra.mxu0 %v5149
        %6421 = vmatprep.subr.bf16.mxu0 %v5166
        %6422 = vmatpush1.bf16.msra.mxu0 %v5165
        %6423 = vmatprep.subr.bf16.mxu0 %v5182
        %6424 = vmatpush1.bf16.msra.mxu0 %v5181
        %6425 = vmatprep.subr.bf16.mxu0 %v5198
        %6426 = vmatpush1.bf16.msra.mxu0 %v5197
        %6427 = vmatprep.subr.bf16.mxu0 %v5214
        %6428 = vmatpush1.bf16.msra.mxu0 %v5213
        %6429 = vmatprep.mubr.bf16.mxu0 %v2828
        %6430 = vmatmul.mubr.bf16.gmra.mrb[0].mxu0 %v2827
        %v6431 = vpop.f32.mrb[0].mxu0
        %v6432 = vadd.f32 %v3390, %v6431
        %v6433 = vpop.f32.mrb[0].mxu0
        %v6434 = vadd.f32 %v3394, %v6433
        %v6435 = vpop.f32.mrb[0].mxu0
        %v6436 = vpop.f32.mrb[0].mxu0
        %6437 = vdwg.mxu0
        %6438 = vmatprep.subr.bf16.mxu0 %v5230
        %6439 = vmatpush1.bf16.msra.mxu0 %v5229
        %6440 = vmatprep.subr.bf16.mxu0 %v5246
        %6441 = vmatpush1.bf16.msra.mxu0 %v5245
        %6442 = vmatprep.subr.bf16.mxu0 %v5262
        %6443 = vmatpush1.bf16.msra.mxu0 %v5261
        %6444 = vmatprep.subr.bf16.mxu0 %v5278
        %6445 = vmatpush1.bf16.msra.mxu0 %v5277
        %6446 = vmatprep.subr.bf16.mxu0 %v5294
        %6447 = vmatpush1.bf16.msra.mxu0 %v5293
        %6448 = vmatprep.subr.bf16.mxu0 %v5310
        %6449 = vmatpush1.bf16.msra.mxu0 %v5309
        %6450 = vmatprep.subr.bf16.mxu0 %v5326
        %6451 = vmatpush1.bf16.msra.mxu0 %v5325
        %6452 = vmatprep.subr.bf16.mxu0 %v5342
        %6453 = vmatpush1.bf16.msra.mxu0 %v5341
        %6454 = vmatprep.subr.bf16.mxu0 %v5358
        %6455 = vmatpush1.bf16.msra.mxu0 %v5357
        %6456 = vmatprep.subr.bf16.mxu0 %v5374
        %6457 = vmatpush1.bf16.msra.mxu0 %v5373
        %6458 = vmatprep.subr.bf16.mxu0 %v5390
        %6459 = vmatpush1.bf16.msra.mxu0 %v5389
        %6460 = vmatprep.subr.bf16.mxu0 %v5406
        %6461 = vmatpush1.bf16.msra.mxu0 %v5405
        %6462 = vmatprep.subr.bf16.mxu0 %v5422
        %6463 = vmatpush1.bf16.msra.mxu0 %v5421
        %6464 = vmatprep.subr.bf16.mxu0 %v5438
        %6465 = vmatpush1.bf16.msra.mxu0 %v5437
        %6466 = vmatprep.subr.bf16.mxu0 %v5454
        %6467 = vmatpush1.bf16.msra.mxu0 %v5453
        %6468 = vmatprep.subr.bf16.mxu0 %v5470
        %6469 = vmatpush1.bf16.msra.mxu0 %v5469
        %6470 = vmatprep.mubr.bf16.mxu0 %v2830
        %6471 = vmatmul.mubr.bf16.gmra.mrb[0].mxu0 %v2829
        %v6472 = vpop.f32.mrb[0].mxu0
        %v6473 = vadd.f32 %v6432, %v6472
        %v6474 = vpop.f32.mrb[0].mxu0
        %v6475 = vadd.f32 %v6434, %v6474
        %v6476 = vpop.f32.mrb[0].mxu0
        %v6477 = vpop.f32.mrb[0].mxu0
        %6478 = vdwg.mxu0
        %6479 = vmatprep.subr.bf16.mxu0 %v4976
        %6480 = vmatpush1.bf16.msra.mxu0 %v4975
        %6481 = vmatprep.subr.bf16.mxu0 %v4992
        %6482 = vmatpush1.bf16.msra.mxu0 %v4991
        %6483 = vmatprep.subr.bf16.mxu0 %v5008
        %6484 = vmatpush1.bf16.msra.mxu0 %v5007
        %6485 = vmatprep.subr.bf16.mxu0 %v5024
        %6486 = vmatpush1.bf16.msra.mxu0 %v5023
        %6487 = vmatprep.subr.bf16.mxu0 %v5040
        %6488 = vmatpush1.bf16.msra.mxu0 %v5039
        %6489 = vmatprep.subr.bf16.mxu0 %v5056
        %6490 = vmatpush1.bf16.msra.mxu0 %v5055
        %6491 = vmatprep.subr.bf16.mxu0 %v5072
        %6492 = vmatpush1.bf16.msra.mxu0 %v5071
        %6493 = vmatprep.subr.bf16.mxu0 %v5088
        %6494 = vmatpush1.bf16.msra.mxu0 %v5087
        %6495 = vmatprep.subr.bf16.mxu0 %v5104
        %6496 = vmatpush1.bf16.msra.mxu0 %v5103
        %6497 = vmatprep.subr.bf16.mxu0 %v5120
        %6498 = vmatpush1.bf16.msra.mxu0 %v5119
        %6499 = vmatprep.subr.bf16.mxu0 %v5136
        %6500 = vmatpush1.bf16.msra.mxu0 %v5135
        %6501 = vmatprep.subr.bf16.mxu0 %v5152
        %6502 = vmatpush1.bf16.msra.mxu0 %v5151
        %6503 = vmatprep.subr.bf16.mxu0 %v5168
        %6504 = vmatpush1.bf16.msra.mxu0 %v5167
        %6505 = vmatprep.subr.bf16.mxu0 %v5184
        %6506 = vmatpush1.bf16.msra.mxu0 %v5183
        %6507 = vmatprep.subr.bf16.mxu0 %v5200
        %6508 = vmatpush1.bf16.msra.mxu0 %v5199
        %6509 = vmatprep.subr.bf16.mxu0 %v5216
        %6510 = vmatpush1.bf16.msra.mxu0 %v5215
        %6511 = vmatprep.mubr.bf16.mxu0 %v2828
        %6512 = vmatmul.mubr.bf16.gmra.mrb[0].mxu0 %v2827
        %v6513 = vpop.f32.mrb[0].mxu0
        %v6514 = vadd.f32 %v3398, %v6513
        %v6515 = vpop.f32.mrb[0].mxu0
        %v6516 = vadd.f32 %v3402, %v6515
        %v6517 = vpop.f32.mrb[0].mxu0
        %v6518 = vpop.f32.mrb[0].mxu0
        %6519 = vdwg.mxu0
        %6520 = vmatprep.subr.bf16.mxu0 %v5232
        %6521 = vmatpush1.bf16.msra.mxu0 %v5231
        %6522 = vmatprep.subr.bf16.mxu0 %v5248
        %6523 = vmatpush1.bf16.msra.mxu0 %v5247
        %6524 = vmatprep.subr.bf16.mxu0 %v5264
        %6525 = vmatpush1.bf16.msra.mxu0 %v5263
        %6526 = vmatprep.subr.bf16.mxu0 %v5280
        %6527 = vmatpush1.bf16.msra.mxu0 %v5279
        %6528 = vmatprep.subr.bf16.mxu0 %v5296
        %6529 = vmatpush1.bf16.msra.mxu0 %v5295
        %6530 = vmatprep.subr.bf16.mxu0 %v5312
        %6531 = vmatpush1.bf16.msra.mxu0 %v5311
        %6532 = vmatprep.subr.bf16.mxu0 %v5328
        %6533 = vmatpush1.bf16.msra.mxu0 %v5327
        %6534 = vmatprep.subr.bf16.mxu0 %v5344
        %6535 = vmatpush1.bf16.msra.mxu0 %v5343
        %6536 = vmatprep.subr.bf16.mxu0 %v5360
        %6537 = vmatpush1.bf16.msra.mxu0 %v5359
        %6538 = vmatprep.subr.bf16.mxu0 %v5376
        %6539 = vmatpush1.bf16.msra.mxu0 %v5375
        %6540 = vmatprep.subr.bf16.mxu0 %v5392
        %6541 = vmatpush1.bf16.msra.mxu0 %v5391
        %6542 = vmatprep.subr.bf16.mxu0 %v5408
        %6543 = vmatpush1.bf16.msra.mxu0 %v5407
        %6544 = vmatprep.subr.bf16.mxu0 %v5424
        %6545 = vmatpush1.bf16.msra.mxu0 %v5423
        %6546 = vmatprep.subr.bf16.mxu0 %v5440
        %6547 = vmatpush1.bf16.msra.mxu0 %v5439
        %6548 = vmatprep.subr.bf16.mxu0 %v5456
        %6549 = vmatpush1.bf16.msra.mxu0 %v5455
        %6550 = vmatprep.subr.bf16.mxu0 %v5472
        %6551 = vmatpush1.bf16.msra.mxu0 %v5471
        %6552 = vmatprep.mubr.bf16.mxu0 %v2830
        %6553 = vmatmul.mubr.bf16.gmra.mrb[0].mxu0 %v2829
        %v6554 = vpop.f32.mrb[0].mxu0
        %v6555 = vadd.f32 %v6514, %v6554
        %v6556 = vpop.f32.mrb[0].mxu0
        %v6557 = vadd.f32 %v6516, %v6556
        %v6558 = vpop.f32.mrb[0].mxu0
        %v6559 = vpop.f32.mrb[0].mxu0
        %6560 = vdwg.mxu0
        %6561 = vmatprep.subr.bf16.mxu0 %v4978
        %6562 = vmatpush1.bf16.msra.mxu0 %v4977
        %6563 = vmatprep.subr.bf16.mxu0 %v4994
        %6564 = vmatpush1.bf16.msra.mxu0 %v4993
        %6565 = vmatprep.subr.bf16.mxu0 %v5010
        %6566 = vmatpush1.bf16.msra.mxu0 %v5009
        %6567 = vmatprep.subr.bf16.mxu0 %v5026
        %6568 = vmatpush1.bf16.msra.mxu0 %v5025
        %6569 = vmatprep.subr.bf16.mxu0 %v5042
        %6570 = vmatpush1.bf16.msra.mxu0 %v5041
        %6571 = vmatprep.subr.bf16.mxu0 %v5058
        %6572 = vmatpush1.bf16.msra.mxu0 %v5057
        %6573 = vmatprep.subr.bf16.mxu0 %v5074
        %6574 = vmatpush1.bf16.msra.mxu0 %v5073
        %6575 = vmatprep.subr.bf16.mxu0 %v5090
        %6576 = vmatpush1.bf16.msra.mxu0 %v5089
        %6577 = vmatprep.subr.bf16.mxu0 %v5106
        %6578 = vmatpush1.bf16.msra.mxu0 %v5105
        %6579 = vmatprep.subr.bf16.mxu0 %v5122
        %6580 = vmatpush1.bf16.msra.mxu0 %v5121
        %6581 = vmatprep.subr.bf16.mxu0 %v5138
        %6582 = vmatpush1.bf16.msra.mxu0 %v5137
        %6583 = vmatprep.subr.bf16.mxu0 %v5154
        %6584 = vmatpush1.bf16.msra.mxu0 %v5153
        %6585 = vmatprep.subr.bf16.mxu0 %v5170
        %6586 = vmatpush1.bf16.msra.mxu0 %v5169
        %6587 = vmatprep.subr.bf16.mxu0 %v5186
        %6588 = vmatpush1.bf16.msra.mxu0 %v5185
        %6589 = vmatprep.subr.bf16.mxu0 %v5202
        %6590 = vmatpush1.bf16.msra.mxu0 %v5201
        %6591 = vmatprep.subr.bf16.mxu0 %v5218
        %6592 = vmatpush1.bf16.msra.mxu0 %v5217
        %6593 = vmatprep.mubr.bf16.mxu0 %v2828
        %6594 = vmatmul.mubr.bf16.gmra.mrb[0].mxu0 %v2827
        %v6595 = vpop.f32.mrb[0].mxu0
        %v6596 = vadd.f32 %v3406, %v6595
        %v6597 = vpop.f32.mrb[0].mxu0
        %v6598 = vadd.f32 %v3410, %v6597
        %v6599 = vpop.f32.mrb[0].mxu0
        %v6600 = vpop.f32.mrb[0].mxu0
        %6601 = vdwg.mxu0
        %6602 = vmatprep.subr.bf16.mxu0 %v5234
        %6603 = vmatpush1.bf16.msra.mxu0 %v5233
        %6604 = vmatprep.subr.bf16.mxu0 %v5250
        %6605 = vmatpush1.bf16.msra.mxu0 %v5249
        %6606 = vmatprep.subr.bf16.mxu0 %v5266
        %6607 = vmatpush1.bf16.msra.mxu0 %v5265
        %6608 = vmatprep.subr.bf16.mxu0 %v5282
        %6609 = vmatpush1.bf16.msra.mxu0 %v5281
        %6610 = vmatprep.subr.bf16.mxu0 %v5298
        %6611 = vmatpush1.bf16.msra.mxu0 %v5297
        %6612 = vmatprep.subr.bf16.mxu0 %v5314
        %6613 = vmatpush1.bf16.msra.mxu0 %v5313
        %6614 = vmatprep.subr.bf16.mxu0 %v5330
        %6615 = vmatpush1.bf16.msra.mxu0 %v5329
        %6616 = vmatprep.subr.bf16.mxu0 %v5346
        %6617 = vmatpush1.bf16.msra.mxu0 %v5345
        %6618 = vmatprep.subr.bf16.mxu0 %v5362
        %6619 = vmatpush1.bf16.msra.mxu0 %v5361
        %6620 = vmatprep.subr.bf16.mxu0 %v5378
        %6621 = vmatpush1.bf16.msra.mxu0 %v5377
        %6622 = vmatprep.subr.bf16.mxu0 %v5394
        %6623 = vmatpush1.bf16.msra.mxu0 %v5393
        %6624 = vmatprep.subr.bf16.mxu0 %v5410
        %6625 = vmatpush1.bf16.msra.mxu0 %v5409
        %6626 = vmatprep.subr.bf16.mxu0 %v5426
        %6627 = vmatpush1.bf16.msra.mxu0 %v5425
        %6628 = vmatprep.subr.bf16.mxu0 %v5442
        %6629 = vmatpush1.bf16.msra.mxu0 %v5441
        %6630 = vmatprep.subr.bf16.mxu0 %v5458
        %6631 = vmatpush1.bf16.msra.mxu0 %v5457
        %6632 = vmatprep.subr.bf16.mxu0 %v5474
        %6633 = vmatpush1.bf16.msra.mxu0 %v5473
        %6634 = vmatprep.mubr.bf16.mxu0 %v2830
        %6635 = vmatmul.mubr.bf16.gmra.mrb[0].mxu0 %v2829
        %v6636 = vpop.f32.mrb[0].mxu0
        %v6637 = vadd.f32 %v6596, %v6636
        %v6638 = vpop.f32.mrb[0].mxu0
        %v6639 = vadd.f32 %v6598, %v6638
        %v6640 = vpop.f32.mrb[0].mxu0
        %v6641 = vpop.f32.mrb[0].mxu0
        %6642 = vdwg.mxu0
        %v6643 = vpack.c.bf16 %v6063, %v6063
        %v6644 = vpack.c.bf16 %v6065, %v6065
        %v6645 = vpack.c.bf16 %v6145, %v6145
        %v6646 = vpack.c.bf16 %v6147, %v6147
        %v6647 = vpack.c.bf16 %v6227, %v6227
        %v6648 = vpack.c.bf16 %v6229, %v6229
        %v6649 = vpack.c.bf16 %v6309, %v6309
        %v6650 = vpack.c.bf16 %v6311, %v6311
        %v6651 = vpack.c.bf16 %v6391, %v6391
        %v6652 = vpack.c.bf16 %v6393, %v6393
        %v6653 = vpack.c.bf16 %v6473, %v6473
        %v6654 = vpack.c.bf16 %v6475, %v6475
        %v6655 = vpack.c.bf16 %v6555, %v6555
        %v6656 = vpack.c.bf16 %v6557, %v6557
        %v6657 = vpack.c.bf16 %v6637, %v6637
        %v6658 = vpack.c.bf16 %v6639, %v6639
        %v6675 = vunpack.c.l.b16 %v6643
        %v6676 = vunpack.c.l.b16 %v6644
        %v6677 = vunpack.c.l.b16 %v6645
        %v6678 = vunpack.c.l.b16 %v6646
        %v6679 = vunpack.c.l.b16 %v6647
        %v6680 = vunpack.c.l.b16 %v6648
        %v6681 = vunpack.c.l.b16 %v6649
        %v6682 = vunpack.c.l.b16 %v6650
        %v6683 = vunpack.c.l.b16 %v6651
        %v6684 = vunpack.c.l.b16 %v6652
        %v6685 = vunpack.c.l.b16 %v6653
        %v6686 = vunpack.c.l.b16 %v6654
        %v6687 = vunpack.c.l.b16 %v6655
        %v6688 = vunpack.c.l.b16 %v6656
        %v6689 = vunpack.c.l.b16 %v6657
        %v6690 = vunpack.c.l.b16 %v6658
        %v6691 = vpack.c.b16 %v6676, %v6675
        %v6692 = vpack.c.b16 %v6678, %v6677
        %v6693 = vpack.c.b16 %v6680, %v6679
        %v6694 = vpack.c.b16 %v6682, %v6681
        %v6695 = vpack.c.b16 %v6684, %v6683
        %v6696 = vpack.c.b16 %v6686, %v6685
        %v6697 = vpack.c.b16 %v6688, %v6687
        %v6698 = vpack.c.b16 %v6690, %v6689
        %6707 = vst [vmem:[%s409] sm:$0xff] %v6691
        %6708 = vst [vmem:[%s409 + $0x8] sm:$0xff] %v6692
        %6709 = vst [vmem:[%s409 + $0x10] sm:$0xff] %v6693
        %6710 = vst [vmem:[%s409 + $0x18] sm:$0xff] %v6694
        %6711 = vst [vmem:[%s409 + $0x20] sm:$0xff] %v6695
        %6712 = vst [vmem:[%s409 + $0x28] sm:$0xff] %v6696
        %6713 = vst [vmem:[%s409 + $0x30] sm:$0xff] %v6697
        %6714 = vst [vmem:[%s409 + $0x38] sm:$0xff] %v6698
        %p6715 = scmp.lt.s32.totalorder %s24, 1
        %s6716 = scalar_select %p6715, %s24, 1
        %s6717 = smul.addr %s6716, 16
        %s6718 = smul.addr %s6717, 4
        %s6719 = scalar_lea.vmem %s9, %s6718
        // Predicated region
        $region81: #{sine_positional_encoding.1} parent=55 // pred_check
          %p6720 = pneg %p236
        $region82: #{sine_positional_encoding.1} parent=55 // pred_check_branch
          %6722 = sbr.rel (%p6720) target = $region84
        $region83: #{sine_positional_encoding.1} parent=55 // pred_region
          _
        $region84: #{sine_positional_encoding.1} parent=55 // pred_fallthru
          _
      $region56: #{sine_positional_encoding.1} parent=5 // pred_fallthru
        _
      %p6723 = scmp.le.s32.totalorder 2, %s19
      // Predicated region
      $region85: #{sine_positional_encoding.1} parent=5 // pred_check
        %p6724 = pneg %p6723
      $region86: #{sine_positional_encoding.1} parent=5 // pred_check_branch
        %6726 = sbr.rel (%p6724) target = $region88
      $region87: #{sine_positional_encoding.1} parent=5 // pred_region
        %s6727 = ssub.s32 %s19, 2
        // Predicated region
        $region89: #{sine_positional_encoding.1} parent=87 // pred_check
          %p6728 = pneg %p242
        $region90: #{sine_positional_encoding.1} parent=87 // pred_check_branch
          %6730 = sbr.rel (%p6728) target = $region92
        $region91: #{sine_positional_encoding.1} parent=87 // pred_region
          %p6731 = scmp.lt.s32.totalorder %s25, 1
          %s6732 = scalar_select %p6731, %s25, 1
          %s6733 = smul.addr %s6732, 16
          %s6734 = smul.addr %s6733, 4
          %s6735 = scalar_lea.vmem %s9, %s6734
        $region92: #{sine_positional_encoding.1} parent=87 // pred_fallthru
          _
      $region88: #{sine_positional_encoding.1} parent=5 // pred_fallthru
        _
    $region6: #{sine_positional_encoding.1} parent=1 // loop_footer
      %s23 = sadd.s32 1, %s19
    $region7: #{sine_positional_encoding.1} parent=1 // loop_footer_branch
      %18 = sbr.rel target = $region3
    $region8: #{sine_positional_encoding.1} parent=1 // loop_exit
      _
    %6736 = vsyncpa [#allocation3], 1
    %s6737 = scalar_lea.sflag [#allocation3], 1
    %6738 = vsyncpa %s6737, 1
    %6739 = vsyncpa [#allocation5], 1
    %6740 = vsyncpa [#allocation8], 1
    %6741 = vsyncpa [#allocation11], 1

</llo_original>
